<compile_context>
chip_gen: v7x
topology: tpu7x:2x2x1
jax: 0.10.0
libtpu: 0.0.40
codegen_flags: <defaults>
</compile_context>

<pallas_src>
import functools

import jax
import jax.numpy as jnp
from jax import lax
from jax.experimental import pallas as pl
from jax.experimental.pallas import tpu as pltpu


# ----------------------------------------------------------------------------
# Fused Pallas kernel: stacked LSTM layers + (-1 pad) + Linear + grouped softmax
# ----------------------------------------------------------------------------
def make_fused_lstm_kernel(num_layers, T, B, E, H, O):
    """Build the fused kernel for a static (num_layers, T, B, E, H, O) config.

    Ref order (no grid, whole arrays resident):
      seq_ref            SMEM [B]          int32 sequence lengths
      x_ref              VMEM [T*B, E]     time-major flattened input (row t*B+b)
      per layer l:       VMEM [in_l, 4H], [H, 4H], [1, 4H]   (W_ih^T, W_hh^T, b_ih+b_hh)
      h0_ref, c0_ref     VMEM [L, B, H]    initial states
      wout_ref           VMEM [H, O]       output Linear weight, transposed
      bout_ref           VMEM [1, O]
      out_ref            VMEM [T*B, O]     final probabilities (time-major rows)
      gx_scr             VMEM [T*B, 4H]    hoisted input-projection for current layer
      hseq_scr           VMEM [T*B, H]     hidden sequence of current layer
    """

    def kernel(*refs):
        seq_ref = refs[0]
        x_ref = refs[1]
        idx = 2
        layer_refs = []
        for _ in range(num_layers):
            layer_refs.append((refs[idx], refs[idx + 1], refs[idx + 2]))
            idx += 3
        h0_ref, c0_ref, wout_ref, bout_ref = refs[idx:idx + 4]
        out_ref = refs[idx + 4]
        gx_scr = refs[idx + 5]
        hseq_scr = refs[idx + 6]

        # --- per-sample lengths: SMEM scalars -> [B, 1] int32 column ----------
        b_iota = lax.broadcasted_iota(jnp.int32, (B, 1), 0)
        seq_col = jnp.zeros((B, 1), jnp.int32)
        for b in range(B):
            seq_col = jnp.where(b_iota == b, seq_ref[b], seq_col)

        # --- layer 0 input projection, hoisted: one [T*B,E]@[E,4H] matmul -----
        wx0, _, b0 = layer_refs[0]
        gx_scr[...] = (jnp.dot(x_ref[...], wx0[...],
                               preferred_element_type=jnp.float32) + b0[...])

        # --- stacked LSTM layers ----------------------------------------------
        for l in range(num_layers):
            _, wh_ref, _ = layer_refs[l]
            wh = wh_ref[...]                    # [H, 4H], read once per layer
            h = h0_ref[l]                       # [B, H]
            c = c0_ref[l]                       # [B, H]
            last_layer = (l == num_layers - 1)

            # Static trip count: fully unrolled at trace time
            # (== lax.fori_loop(..., unroll=True) for a short fixed T).
            for t in range(T):
                gates = gx_scr[pl.ds(t * B, B), :] + jnp.dot(
                    h, wh, preferred_element_type=jnp.float32)      # [B, 4H]
                # PyTorch gate order: i, f, g, o
                i_g = jax.nn.sigmoid(gates[:, 0:H])
                f_g = jax.nn.sigmoid(gates[:, H:2 * H])
                g_g = jnp.tanh(gates[:, 2 * H:3 * H])
                o_g = jax.nn.sigmoid(gates[:, 3 * H:4 * H])
                c_new = f_g * c + i_g * g_g
                h_new = o_g * jnp.tanh(c_new)

                # packed-sequence semantics: state frozen once t >= seq_len[b]
                keep = seq_col > t                                  # [B, 1] bool
                h = jnp.where(keep, h_new, h)
                c = jnp.where(keep, c_new, c)

                if last_layer:
                    # pad_packed_sequence(padding_value=-1) folded in here
                    hseq_scr[pl.ds(t * B, B), :] = jnp.where(keep, h, -1.0)
                else:
                    hseq_scr[pl.ds(t * B, B), :] = h

            if not last_layer:
                # hoisted input projection for the next layer:
                # one [T*B,H]@[H,4H] matmul over the full hidden sequence.
                wx_n, _, b_n = layer_refs[l + 1]
                gx_scr[...] = (jnp.dot(hseq_scr[...], wx_n[...],
                                       preferred_element_type=jnp.float32)
                               + b_n[...])

        # --- output Linear + grouped softmax (groups = column parity) ---------
        h_pad = hseq_scr[...]                                       # [T*B, H]
        y = jnp.dot(h_pad, wout_ref[...],
                    preferred_element_type=jnp.float32) + bout_ref[...]  # [T*B, O]

        col = lax.broadcasted_iota(jnp.int32, (T * B, O), 1)
        even = (col & 1) == 0                                       # parity mask
        neg = jnp.float32(-1e30)
        m_e = jnp.max(jnp.where(even, y, neg), axis=-1, keepdims=True)
        m_o = jnp.max(jnp.where(even, neg, y), axis=-1, keepdims=True)
        e = jnp.exp(y - jnp.where(even, m_e, m_o))
        s_e = jnp.sum(jnp.where(even, e, 0.0), axis=-1, keepdims=True)
        s_o = jnp.sum(jnp.where(even, 0.0, e), axis=-1, keepdims=True)
        out_ref[...] = e / jnp.where(even, s_e, s_o)

    return kernel


# ----------------------------------------------------------------------------
# Wrapper
# ----------------------------------------------------------------------------
def _vmem_spec():
    return pl.BlockSpec(memory_space=pltpu.MemorySpace.VMEM)


@functools.partial(jax.jit, static_argnames=("max_len",))
def lstm_forward_pallas(x, seq_len, max_len, params, h0, c0):
    """x: [B, T, E] (batch-first, like the PyTorch module). Returns [B, T, O]."""
    B, T, E = x.shape
    assert T == max_len
    H = h0.shape[-1]
    L = len(params["lstm"])
    w_out, b_out = params["out"]                       # [O, H], [O]
    O = w_out.shape[0]

    # time-major flattened rows (row = t*B + b); single tiny XLA relayout
    x_tm = jnp.transpose(x, (1, 0, 2)).reshape(T * B, E)
    seq_i32 = seq_len.astype(jnp.int32)

    inputs = [seq_i32, x_tm]
    in_specs = [pl.BlockSpec(memory_space=pltpu.MemorySpace.SMEM), _vmem_spec()]
    for (w_ih, w_hh, b_ih, b_hh) in params["lstm"]:
        inputs += [jnp.transpose(w_ih, (1, 0)),        # [in, 4H]
                   jnp.transpose(w_hh, (1, 0)),        # [H, 4H]
                   (b_ih + b_hh)[None, :]]             # [1, 4H]
        in_specs += [_vmem_spec(), _vmem_spec(), _vmem_spec()]
    inputs += [h0, c0, jnp.transpose(w_out, (1, 0)), b_out[None, :]]
    in_specs += [_vmem_spec()] * 4

    kernel = make_fused_lstm_kernel(L, T, B, E, H, O)
    out_flat = pl.pallas_call(
        kernel,
        in_specs=in_specs,
        out_specs=_vmem_spec(),
        out_shape=jax.ShapeDtypeStruct((T * B, O), jnp.float32),
        scratch_shapes=[pltpu.VMEM((T * B, 4 * H), jnp.float32),
                        pltpu.VMEM((T * B, H), jnp.float32)],
    )(*inputs)

    # back to batch-first [B, T, O]
    return jnp.transpose(out_flat.reshape(T, B, O), (1, 0, 2))


# ----------------------------------------------------------------------------
# Pure-JAX reference (same math, for a sanity check)
# ----------------------------------------------------------------------------
def ref_forward(x, seq_len, params, h0, c0):
    B, T, E = x.shape

    def one_layer(x_bt, w_ih, w_hh, b_ih, b_hh, h_init, c_init):
        def step(carry, inp):
            h, c = carry
            xt, t = inp
            gates = xt @ w_ih.T + h @ w_hh.T + b_ih + b_hh
            i, f, g, o = jnp.split(gates, 4, axis=-1)
            i, f, o = jax.nn.sigmoid(i), jax.nn.sigmoid(f), jax.nn.sigmoid(o)
            g = jnp.tanh(g)
            c_new = f * c + i * g
            h_new = o * jnp.tanh(c_new)
            mask = (seq_len > t)[:, None]
            h = jnp.where(mask, h_new, h)
            c = jnp.where(mask, c_new, c)
            return (h, c), h
        x_tm = jnp.transpose(x_bt, (1, 0, 2))
        _, hs = jax.lax.scan(step, (h_init, c_init), (x_tm, jnp.arange(T)))
        return jnp.transpose(hs, (1, 0, 2))

    h = x
    for li, (w_ih, w_hh, b_ih, b_hh) in enumerate(params["lstm"]):
        h = one_layer(h, w_ih, w_hh, b_ih, b_hh, h0[li], c0[li])

    t_ids = jnp.arange(T)[None, :, None]
    h = jnp.where(t_ids < seq_len[:, None, None], h, -1.0)

    w_out, b_out = params["out"]
    y = h @ w_out.T + b_out
    O = w_out.shape[0]
    y4 = y.reshape(B, T, O // 2, 2)
    sm = jax.nn.softmax(y4, axis=2)
    return sm.reshape(B, T, O)


# ----------------------------------------------------------------------------
# Main
# ----------------------------------------------------------------------------
if __name__ == "__main__":
    B, T, E, H, O, NUM_LAYERS = 2, 8, 32, 32, 10, 2
    key = jax.random.PRNGKey(0)
    keys = jax.random.split(key, 16)

    # deterministic synthetic parameters (shapes follow nn.LSTM / nn.Linear)
    scale = 1.0 / jnp.sqrt(H)
    lstm_params = []
    kidx = 0
    for layer in range(NUM_LAYERS):
        in_dim = E if layer == 0 else H
        w_ih = jax.random.uniform(keys[kidx + 0], (4 * H, in_dim), minval=-scale, maxval=scale)
        w_hh = jax.random.uniform(keys[kidx + 1], (4 * H, H), minval=-scale, maxval=scale)
        b_ih = jax.random.uniform(keys[kidx + 2], (4 * H,), minval=-scale, maxval=scale)
        b_hh = jax.random.uniform(keys[kidx + 3], (4 * H,), minval=-scale, maxval=scale)
        lstm_params.append((w_ih, w_hh, b_ih, b_hh))
        kidx += 4
    w_out = jax.random.uniform(keys[kidx], (O, H), minval=-scale, maxval=scale)
    b_out = jnp.zeros((O,), jnp.float32)        # nn.init.constant_(bias, 0)
    params = {"lstm": lstm_params, "out": (w_out, b_out)}

    # init_hidden(): deterministic stand-in for torch.randn
    h0 = jax.random.normal(keys[kidx + 1], (NUM_LAYERS, B, H), jnp.float32)
    c0 = jax.random.normal(keys[kidx + 2], (NUM_LAYERS, B, H), jnp.float32)

    # inputs
    x = jax.random.normal(keys[kidx + 3], (B, T, E), jnp.float32)
    seq_len = jnp.array([8, 5], dtype=jnp.int32)
    max_len = T

    out = lstm_forward_pallas(x, seq_len, max_len, params, h0, c0)
    out = jax.block_until_ready(out)

    ref = ref_forward(x, seq_len, params, h0, c0)
    assert out.shape == (B, T, O)
    assert jnp.allclose(out, ref, atol=2e-3, rtol=2e-3), "mismatch vs reference"

    print("KERNEL_OK")
</pallas_src>

<mosaic_0001>
module attributes {stable_mosaic.version = 11 : i64} {
  func.func @kernel(%arg0: memref<2xi32, #tpu.memory_space<smem>>, %arg1: memref<16x32xf32, #tpu.memory_space<vmem>>, %arg2: memref<32x128xf32, #tpu.memory_space<vmem>>, %arg3: memref<32x128xf32, #tpu.memory_space<vmem>>, %arg4: memref<1x128xf32, #tpu.memory_space<vmem>>, %arg5: memref<32x128xf32, #tpu.memory_space<vmem>>, %arg6: memref<32x128xf32, #tpu.memory_space<vmem>>, %arg7: memref<1x128xf32, #tpu.memory_space<vmem>>, %arg8: memref<2x2x32xf32, #tpu.memory_space<vmem>>, %arg9: memref<2x2x32xf32, #tpu.memory_space<vmem>>, %arg10: memref<32x10xf32, #tpu.memory_space<vmem>>, %arg11: memref<1x10xf32, #tpu.memory_space<vmem>>, %arg12: memref<16x10xf32, #tpu.memory_space<vmem>>, %arg13: memref<16x128xf32, #tpu.memory_space<vmem>>, %arg14: memref<16x32xf32, #tpu.memory_space<vmem>>) attributes {dimension_semantics = [], scalar_prefetch = 0 : i64, scratch_operands = 2 : i64, tpu.core_type = #tpu.core_type<tc>} {
    %0 = tpu.iota {dimensions = array<i32: 0>} : vector<2x1xi32>
    %c0_i32 = arith.constant 0 : i32
    %1 = vector.broadcast %c0_i32 : i32 to vector<2x1xi32>
    %c0_i32_0 = arith.constant 0 : i32
    %2 = vector.broadcast %c0_i32_0 : i32 to vector<2x1xi32>
    %3 = arith.cmpi eq, %0, %2 : vector<2x1xi32>
    %c0 = arith.constant 0 : index
    %4 = memref.load %arg0[%c0] : memref<2xi32, #tpu.memory_space<smem>>
    %5 = vector.broadcast %4 : i32 to vector<2x1xi32>
    %6 = arith.select %3, %5, %1 : vector<2x1xi1>, vector<2x1xi32>
    %c1_i32 = arith.constant 1 : i32
    %7 = vector.broadcast %c1_i32 : i32 to vector<2x1xi32>
    %8 = arith.cmpi eq, %0, %7 : vector<2x1xi32>
    %c1 = arith.constant 1 : index
    %9 = memref.load %arg0[%c1] : memref<2xi32, #tpu.memory_space<smem>>
    %10 = vector.broadcast %9 : i32 to vector<2x1xi32>
    %11 = arith.select %8, %10, %6 : vector<2x1xi1>, vector<2x1xi32>
    %c0_1 = arith.constant 0 : index
    %c0_2 = arith.constant 0 : index
    %12 = vector.load %arg1[%c0_1, %c0_2] : memref<16x32xf32, #tpu.memory_space<vmem>>, vector<16x32xf32>
    %c0_3 = arith.constant 0 : index
    %c0_4 = arith.constant 0 : index
    %13 = vector.load %arg2[%c0_3, %c0_4] : memref<32x128xf32, #tpu.memory_space<vmem>>, vector<32x128xf32>
    %cst = arith.constant dense<0.000000e+00> : vector<16x128xf32>
    %14 = tpu.matmul %12, %13, %cst {dimension_numbers = #tpu.dot_dimension_numbers<[1], [0], [0], [1], [0, 0, 1, 1], [], []>} : vector<16x32xf32>, vector<32x128xf32>, vector<16x128xf32> -> vector<16x128xf32>
    %c0_5 = arith.constant 0 : index
    %c0_6 = arith.constant 0 : index
    %15 = vector.load %arg4[%c0_5, %c0_6] : memref<1x128xf32, #tpu.memory_space<vmem>>, vector<1x128xf32>
    %16 = vector.broadcast %15 : vector<1x128xf32> to vector<16x128xf32>
    %17 = arith.addf %14, %16 : vector<16x128xf32>
    %c0_7 = arith.constant 0 : index
    %c0_8 = arith.constant 0 : index
    %18 = vector.load %arg13[%c0_7, %c0_8] : memref<16x128xf32, #tpu.memory_space<vmem>>, vector<16x128xf32>
    tpu.vector_store %arg13[%c0_7, %c0_8], %17 {strides = array<i32>} : memref<16x128xf32, #tpu.memory_space<vmem>>, vector<16x128xf32>,
    %c0_9 = arith.constant 0 : index
    %c0_10 = arith.constant 0 : index
    %19 = vector.load %arg3[%c0_9, %c0_10] : memref<32x128xf32, #tpu.memory_space<vmem>>, vector<32x128xf32>
    %c0_11 = arith.constant 0 : index
    %c0_12 = arith.constant 0 : index
    %c0_13 = arith.constant 0 : index
    %20 = vector.load %arg8[%c0_11, %c0_12, %c0_13] : memref<2x2x32xf32, #tpu.memory_space<vmem>>, vector<1x2x32xf32>
    %21 = vector.shape_cast %20 : vector<1x2x32xf32> to vector<2x32xf32>
    %c0_14 = arith.constant 0 : index
    %c0_15 = arith.constant 0 : index
    %c0_16 = arith.constant 0 : index
    %22 = vector.load %arg9[%c0_14, %c0_15, %c0_16] : memref<2x2x32xf32, #tpu.memory_space<vmem>>, vector<1x2x32xf32>
    %23 = vector.shape_cast %22 : vector<1x2x32xf32> to vector<2x32xf32>
    %c0_17 = arith.constant 0 : index
    %c0_18 = arith.constant 0 : index
    %24 = vector.load %arg13[%c0_17, %c0_18] : memref<16x128xf32, #tpu.memory_space<vmem>>, vector<2x128xf32>
    %cst_19 = arith.constant dense<0.000000e+00> : vector<2x128xf32>
    %25 = tpu.matmul %21, %19, %cst_19 {dimension_numbers = #tpu.dot_dimension_numbers<[1], [0], [0], [1], [0, 0, 1, 1], [], []>} : vector<2x32xf32>, vector<32x128xf32>, vector<2x128xf32> -> vector<2x128xf32>
    %26 = arith.addf %24, %25 : vector<2x128xf32>
    %27 = vector.extract_strided_slice %26 {offsets = [0, 0], sizes = [2, 32], strides = [1, 1]} : vector<2x128xf32> to vector<2x32xf32>
    %28 = arith.negf %27 : vector<2x32xf32>
    %29 = math.exp %28 : vector<2x32xf32>
    %cst_20 = arith.constant 1.000000e+00 : f32
    %30 = vector.broadcast %cst_20 : f32 to vector<2x32xf32>
    %31 = arith.addf %30, %29 : vector<2x32xf32>
    %32 = arith.divf %30, %31 : vector<2x32xf32>
    %33 = vector.extract_strided_slice %26 {offsets = [0, 32], sizes = [2, 32], strides = [1, 1]} : vector<2x128xf32> to vector<2x32xf32>
    %34 = arith.negf %33 : vector<2x32xf32>
    %35 = math.exp %34 : vector<2x32xf32>
    %cst_21 = arith.constant 1.000000e+00 : f32
    %36 = vector.broadcast %cst_21 : f32 to vector<2x32xf32>
    %37 = arith.addf %36, %35 : vector<2x32xf32>
    %38 = arith.divf %36, %37 : vector<2x32xf32>
    %39 = vector.extract_strided_slice %26 {offsets = [0, 64], sizes = [2, 32], strides = [1, 1]} : vector<2x128xf32> to vector<2x32xf32>
    %40 = math.tanh %39 : vector<2x32xf32>
    %41 = vector.extract_strided_slice %26 {offsets = [0, 96], sizes = [2, 32], strides = [1, 1]} : vector<2x128xf32> to vector<2x32xf32>
    %42 = arith.negf %41 : vector<2x32xf32>
    %43 = math.exp %42 : vector<2x32xf32>
    %cst_22 = arith.constant 1.000000e+00 : f32
    %44 = vector.broadcast %cst_22 : f32 to vector<2x32xf32>
    %45 = arith.addf %44, %43 : vector<2x32xf32>
    %46 = arith.divf %44, %45 : vector<2x32xf32>
    %47 = arith.mulf %38, %23 : vector<2x32xf32>
    %48 = arith.mulf %32, %40 : vector<2x32xf32>
    %49 = arith.addf %47, %48 : vector<2x32xf32>
    %50 = math.tanh %49 : vector<2x32xf32>
    %51 = arith.mulf %46, %50 : vector<2x32xf32>
    %c0_i32_23 = arith.constant 0 : i32
    %52 = vector.broadcast %c0_i32_23 : i32 to vector<2x1xi32>
    %53 = arith.cmpi sgt, %11, %52 : vector<2x1xi32>
    %54 = vector.shape_cast %53 : vector<2x1xi1> to vector<2x1xi1>
    %55 = vector.broadcast %54 : vector<2x1xi1> to vector<2x32xi1>
    %56 = arith.select %55, %51, %21 : vector<2x32xi1>, vector<2x32xf32>
    %57 = vector.shape_cast %53 : vector<2x1xi1> to vector<2x1xi1>
    %58 = vector.broadcast %57 : vector<2x1xi1> to vector<2x32xi1>
    %59 = arith.select %58, %49, %23 : vector<2x32xi1>, vector<2x32xf32>
    %c0_24 = arith.constant 0 : index
    %c0_25 = arith.constant 0 : index
    %60 = vector.load %arg14[%c0_24, %c0_25] : memref<16x32xf32, #tpu.memory_space<vmem>>, vector<2x32xf32>
    tpu.vector_store %arg14[%c0_24, %c0_25], %56 {strides = array<i32>} : memref<16x32xf32, #tpu.memory_space<vmem>>, vector<2x32xf32>,
    %c2 = arith.constant 2 : index
    %c0_26 = arith.constant 0 : index
    %61 = vector.load %arg13[%c2, %c0_26] : memref<16x128xf32, #tpu.memory_space<vmem>>, vector<2x128xf32>
    %cst_27 = arith.constant dense<0.000000e+00> : vector<2x128xf32>
    %62 = tpu.matmul %56, %19, %cst_27 {dimension_numbers = #tpu.dot_dimension_numbers<[1], [0], [0], [1], [0, 0, 1, 1], [], []>} : vector<2x32xf32>, vector<32x128xf32>, vector<2x128xf32> -> vector<2x128xf32>
    %63 = arith.addf %61, %62 : vector<2x128xf32>
    %64 = vector.extract_strided_slice %63 {offsets = [0, 0], sizes = [2, 32], strides = [1, 1]} : vector<2x128xf32> to vector<2x32xf32>
    %65 = arith.negf %64 : vector<2x32xf32>
    %66 = math.exp %65 : vector<2x32xf32>
    %cst_28 = arith.constant 1.000000e+00 : f32
    %67 = vector.broadcast %cst_28 : f32 to vector<2x32xf32>
    %68 = arith.addf %67, %66 : vector<2x32xf32>
    %69 = arith.divf %67, %68 : vector<2x32xf32>
    %70 = vector.extract_strided_slice %63 {offsets = [0, 32], sizes = [2, 32], strides = [1, 1]} : vector<2x128xf32> to vector<2x32xf32>
    %71 = arith.negf %70 : vector<2x32xf32>
    %72 = math.exp %71 : vector<2x32xf32>
    %cst_29 = arith.constant 1.000000e+00 : f32
    %73 = vector.broadcast %cst_29 : f32 to vector<2x32xf32>
    %74 = arith.addf %73, %72 : vector<2x32xf32>
    %75 = arith.divf %73, %74 : vector<2x32xf32>
    %76 = vector.extract_strided_slice %63 {offsets = [0, 64], sizes = [2, 32], strides = [1, 1]} : vector<2x128xf32> to vector<2x32xf32>
    %77 = math.tanh %76 : vector<2x32xf32>
    %78 = vector.extract_strided_slice %63 {offsets = [0, 96], sizes = [2, 32], strides = [1, 1]} : vector<2x128xf32> to vector<2x32xf32>
    %79 = arith.negf %78 : vector<2x32xf32>
    %80 = math.exp %79 : vector<2x32xf32>
    %cst_30 = arith.constant 1.000000e+00 : f32
    %81 = vector.broadcast %cst_30 : f32 to vector<2x32xf32>
    %82 = arith.addf %81, %80 : vector<2x32xf32>
    %83 = arith.divf %81, %82 : vector<2x32xf32>
    %84 = arith.mulf %75, %59 : vector<2x32xf32>
    %85 = arith.mulf %69, %77 : vector<2x32xf32>
    %86 = arith.addf %84, %85 : vector<2x32xf32>
    %87 = math.tanh %86 : vector<2x32xf32>
    %88 = arith.mulf %83, %87 : vector<2x32xf32>
    %c1_i32_31 = arith.constant 1 : i32
    %89 = vector.broadcast %c1_i32_31 : i32 to vector<2x1xi32>
    %90 = arith.cmpi sgt, %11, %89 : vector<2x1xi32>
    %91 = vector.shape_cast %90 : vector<2x1xi1> to vector<2x1xi1>
    %92 = vector.broadcast %91 : vector<2x1xi1> to vector<2x32xi1>
    %93 = arith.select %92, %88, %56 : vector<2x32xi1>, vector<2x32xf32>
    %94 = vector.shape_cast %90 : vector<2x1xi1> to vector<2x1xi1>
    %95 = vector.broadcast %94 : vector<2x1xi1> to vector<2x32xi1>
    %96 = arith.select %95, %86, %59 : vector<2x32xi1>, vector<2x32xf32>
    %c2_32 = arith.constant 2 : index
    %c0_33 = arith.constant 0 : index
    %97 = vector.load %arg14[%c2_32, %c0_33] : memref<16x32xf32, #tpu.memory_space<vmem>>, vector<2x32xf32>
    tpu.vector_store %arg14[%c2_32, %c0_33], %93 {strides = array<i32>} : memref<16x32xf32, #tpu.memory_space<vmem>>, vector<2x32xf32>,
    %c4 = arith.constant 4 : index
    %c0_34 = arith.constant 0 : index
    %98 = vector.load %arg13[%c4, %c0_34] : memref<16x128xf32, #tpu.memory_space<vmem>>, vector<2x128xf32>
    %cst_35 = arith.constant dense<0.000000e+00> : vector<2x128xf32>
    %99 = tpu.matmul %93, %19, %cst_35 {dimension_numbers = #tpu.dot_dimension_numbers<[1], [0], [0], [1], [0, 0, 1, 1], [], []>} : vector<2x32xf32>, vector<32x128xf32>, vector<2x128xf32> -> vector<2x128xf32>
    %100 = arith.addf %98, %99 : vector<2x128xf32>
    %101 = vector.extract_strided_slice %100 {offsets = [0, 0], sizes = [2, 32], strides = [1, 1]} : vector<2x128xf32> to vector<2x32xf32>
    %102 = arith.negf %101 : vector<2x32xf32>
    %103 = math.exp %102 : vector<2x32xf32>
    %cst_36 = arith.constant 1.000000e+00 : f32
    %104 = vector.broadcast %cst_36 : f32 to vector<2x32xf32>
    %105 = arith.addf %104, %103 : vector<2x32xf32>
    %106 = arith.divf %104, %105 : vector<2x32xf32>
    %107 = vector.extract_strided_slice %100 {offsets = [0, 32], sizes = [2, 32], strides = [1, 1]} : vector<2x128xf32> to vector<2x32xf32>
    %108 = arith.negf %107 : vector<2x32xf32>
    %109 = math.exp %108 : vector<2x32xf32>
    %cst_37 = arith.constant 1.000000e+00 : f32
    %110 = vector.broadcast %cst_37 : f32 to vector<2x32xf32>
    %111 = arith.addf %110, %109 : vector<2x32xf32>
    %112 = arith.divf %110, %111 : vector<2x32xf32>
    %113 = vector.extract_strided_slice %100 {offsets = [0, 64], sizes = [2, 32], strides = [1, 1]} : vector<2x128xf32> to vector<2x32xf32>
    %114 = math.tanh %113 : vector<2x32xf32>
    %115 = vector.extract_strided_slice %100 {offsets = [0, 96], sizes = [2, 32], strides = [1, 1]} : vector<2x128xf32> to vector<2x32xf32>
    %116 = arith.negf %115 : vector<2x32xf32>
    %117 = math.exp %116 : vector<2x32xf32>
    %cst_38 = arith.constant 1.000000e+00 : f32
    %118 = vector.broadcast %cst_38 : f32 to vector<2x32xf32>
    %119 = arith.addf %118, %117 : vector<2x32xf32>
    %120 = arith.divf %118, %119 : vector<2x32xf32>
    %121 = arith.mulf %112, %96 : vector<2x32xf32>
    %122 = arith.mulf %106, %114 : vector<2x32xf32>
    %123 = arith.addf %121, %122 : vector<2x32xf32>
    %124 = math.tanh %123 : vector<2x32xf32>
    %125 = arith.mulf %120, %124 : vector<2x32xf32>
    %c2_i32 = arith.constant 2 : i32
    %126 = vector.broadcast %c2_i32 : i32 to vector<2x1xi32>
    %127 = arith.cmpi sgt, %11, %126 : vector<2x1xi32>
    %128 = vector.shape_cast %127 : vector<2x1xi1> to vector<2x1xi1>
    %129 = vector.broadcast %128 : vector<2x1xi1> to vector<2x32xi1>
    %130 = arith.select %129, %125, %93 : vector<2x32xi1>, vector<2x32xf32>
    %131 = vector.shape_cast %127 : vector<2x1xi1> to vector<2x1xi1>
    %132 = vector.broadcast %131 : vector<2x1xi1> to vector<2x32xi1>
    %133 = arith.select %132, %123, %96 : vector<2x32xi1>, vector<2x32xf32>
    %c4_39 = arith.constant 4 : index
    %c0_40 = arith.constant 0 : index
    %134 = vector.load %arg14[%c4_39, %c0_40] : memref<16x32xf32, #tpu.memory_space<vmem>>, vector<2x32xf32>
    tpu.vector_store %arg14[%c4_39, %c0_40], %130 {strides = array<i32>} : memref<16x32xf32, #tpu.memory_space<vmem>>, vector<2x32xf32>,
    %c6 = arith.constant 6 : index
    %c0_41 = arith.constant 0 : index
    %135 = vector.load %arg13[%c6, %c0_41] : memref<16x128xf32, #tpu.memory_space<vmem>>, vector<2x128xf32>
    %cst_42 = arith.constant dense<0.000000e+00> : vector<2x128xf32>
    %136 = tpu.matmul %130, %19, %cst_42 {dimension_numbers = #tpu.dot_dimension_numbers<[1], [0], [0], [1], [0, 0, 1, 1], [], []>} : vector<2x32xf32>, vector<32x128xf32>, vector<2x128xf32> -> vector<2x128xf32>
    %137 = arith.addf %135, %136 : vector<2x128xf32>
    %138 = vector.extract_strided_slice %137 {offsets = [0, 0], sizes = [2, 32], strides = [1, 1]} : vector<2x128xf32> to vector<2x32xf32>
    %139 = arith.negf %138 : vector<2x32xf32>
    %140 = math.exp %139 : vector<2x32xf32>
    %cst_43 = arith.constant 1.000000e+00 : f32
    %141 = vector.broadcast %cst_43 : f32 to vector<2x32xf32>
    %142 = arith.addf %141, %140 : vector<2x32xf32>
    %143 = arith.divf %141, %142 : vector<2x32xf32>
    %144 = vector.extract_strided_slice %137 {offsets = [0, 32], sizes = [2, 32], strides = [1, 1]} : vector<2x128xf32> to vector<2x32xf32>
    %145 = arith.negf %144 : vector<2x32xf32>
    %146 = math.exp %145 : vector<2x32xf32>
    %cst_44 = arith.constant 1.000000e+00 : f32
    %147 = vector.broadcast %cst_44 : f32 to vector<2x32xf32>
    %148 = arith.addf %147, %146 : vector<2x32xf32>
    %149 = arith.divf %147, %148 : vector<2x32xf32>
    %150 = vector.extract_strided_slice %137 {offsets = [0, 64], sizes = [2, 32], strides = [1, 1]} : vector<2x128xf32> to vector<2x32xf32>
    %151 = math.tanh %150 : vector<2x32xf32>
    %152 = vector.extract_strided_slice %137 {offsets = [0, 96], sizes = [2, 32], strides = [1, 1]} : vector<2x128xf32> to vector<2x32xf32>
    %153 = arith.negf %152 : vector<2x32xf32>
    %154 = math.exp %153 : vector<2x32xf32>
    %cst_45 = arith.constant 1.000000e+00 : f32
    %155 = vector.broadcast %cst_45 : f32 to vector<2x32xf32>
    %156 = arith.addf %155, %154 : vector<2x32xf32>
    %157 = arith.divf %155, %156 : vector<2x32xf32>
    %158 = arith.mulf %149, %133 : vector<2x32xf32>
    %159 = arith.mulf %143, %151 : vector<2x32xf32>
    %160 = arith.addf %158, %159 : vector<2x32xf32>
    %161 = math.tanh %160 : vector<2x32xf32>
    %162 = arith.mulf %157, %161 : vector<2x32xf32>
    %c3_i32 = arith.constant 3 : i32
    %163 = vector.broadcast %c3_i32 : i32 to vector<2x1xi32>
    %164 = arith.cmpi sgt, %11, %163 : vector<2x1xi32>
    %165 = vector.shape_cast %164 : vector<2x1xi1> to vector<2x1xi1>
    %166 = vector.broadcast %165 : vector<2x1xi1> to vector<2x32xi1>
    %167 = arith.select %166, %162, %130 : vector<2x32xi1>, vector<2x32xf32>
    %168 = vector.shape_cast %164 : vector<2x1xi1> to vector<2x1xi1>
    %169 = vector.broadcast %168 : vector<2x1xi1> to vector<2x32xi1>
    %170 = arith.select %169, %160, %133 : vector<2x32xi1>, vector<2x32xf32>
    %c6_46 = arith.constant 6 : index
    %c0_47 = arith.constant 0 : index
    %171 = vector.load %arg14[%c6_46, %c0_47] : memref<16x32xf32, #tpu.memory_space<vmem>>, vector<2x32xf32>
    tpu.vector_store %arg14[%c6_46, %c0_47], %167 {strides = array<i32>} : memref<16x32xf32, #tpu.memory_space<vmem>>, vector<2x32xf32>,
    %c8 = arith.constant 8 : index
    %c0_48 = arith.constant 0 : index
    %172 = vector.load %arg13[%c8, %c0_48] : memref<16x128xf32, #tpu.memory_space<vmem>>, vector<2x128xf32>
    %cst_49 = arith.constant dense<0.000000e+00> : vector<2x128xf32>
    %173 = tpu.matmul %167, %19, %cst_49 {dimension_numbers = #tpu.dot_dimension_numbers<[1], [0], [0], [1], [0, 0, 1, 1], [], []>} : vector<2x32xf32>, vector<32x128xf32>, vector<2x128xf32> -> vector<2x128xf32>
    %174 = arith.addf %172, %173 : vector<2x128xf32>
    %175 = vector.extract_strided_slice %174 {offsets = [0, 0], sizes = [2, 32], strides = [1, 1]} : vector<2x128xf32> to vector<2x32xf32>
    %176 = arith.negf %175 : vector<2x32xf32>
    %177 = math.exp %176 : vector<2x32xf32>
    %cst_50 = arith.constant 1.000000e+00 : f32
    %178 = vector.broadcast %cst_50 : f32 to vector<2x32xf32>
    %179 = arith.addf %178, %177 : vector<2x32xf32>
    %180 = arith.divf %178, %179 : vector<2x32xf32>
    %181 = vector.extract_strided_slice %174 {offsets = [0, 32], sizes = [2, 32], strides = [1, 1]} : vector<2x128xf32> to vector<2x32xf32>
    %182 = arith.negf %181 : vector<2x32xf32>
    %183 = math.exp %182 : vector<2x32xf32>
    %cst_51 = arith.constant 1.000000e+00 : f32
    %184 = vector.broadcast %cst_51 : f32 to vector<2x32xf32>
    %185 = arith.addf %184, %183 : vector<2x32xf32>
    %186 = arith.divf %184, %185 : vector<2x32xf32>
    %187 = vector.extract_strided_slice %174 {offsets = [0, 64], sizes = [2, 32], strides = [1, 1]} : vector<2x128xf32> to vector<2x32xf32>
    %188 = math.tanh %187 : vector<2x32xf32>
    %189 = vector.extract_strided_slice %174 {offsets = [0, 96], sizes = [2, 32], strides = [1, 1]} : vector<2x128xf32> to vector<2x32xf32>
    %190 = arith.negf %189 : vector<2x32xf32>
    %191 = math.exp %190 : vector<2x32xf32>
    %cst_52 = arith.constant 1.000000e+00 : f32
    %192 = vector.broadcast %cst_52 : f32 to vector<2x32xf32>
    %193 = arith.addf %192, %191 : vector<2x32xf32>
    %194 = arith.divf %192, %193 : vector<2x32xf32>
    %195 = arith.mulf %186, %170 : vector<2x32xf32>
    %196 = arith.mulf %180, %188 : vector<2x32xf32>
    %197 = arith.addf %195, %196 : vector<2x32xf32>
    %198 = math.tanh %197 : vector<2x32xf32>
    %199 = arith.mulf %194, %198 : vector<2x32xf32>
    %c4_i32 = arith.constant 4 : i32
    %200 = vector.broadcast %c4_i32 : i32 to vector<2x1xi32>
    %201 = arith.cmpi sgt, %11, %200 : vector<2x1xi32>
    %202 = vector.shape_cast %201 : vector<2x1xi1> to vector<2x1xi1>
    %203 = vector.broadcast %202 : vector<2x1xi1> to vector<2x32xi1>
    %204 = arith.select %203, %199, %167 : vector<2x32xi1>, vector<2x32xf32>
    %205 = vector.shape_cast %201 : vector<2x1xi1> to vector<2x1xi1>
    %206 = vector.broadcast %205 : vector<2x1xi1> to vector<2x32xi1>
    %207 = arith.select %206, %197, %170 : vector<2x32xi1>, vector<2x32xf32>
    %c8_53 = arith.constant 8 : index
    %c0_54 = arith.constant 0 : index
    %208 = vector.load %arg14[%c8_53, %c0_54] : memref<16x32xf32, #tpu.memory_space<vmem>>, vector<2x32xf32>
    tpu.vector_store %arg14[%c8_53, %c0_54], %204 {strides = array<i32>} : memref<16x32xf32, #tpu.memory_space<vmem>>, vector<2x32xf32>,
    %c10 = arith.constant 10 : index
    %c0_55 = arith.constant 0 : index
    %209 = vector.load %arg13[%c10, %c0_55] : memref<16x128xf32, #tpu.memory_space<vmem>>, vector<2x128xf32>
    %cst_56 = arith.constant dense<0.000000e+00> : vector<2x128xf32>
    %210 = tpu.matmul %204, %19, %cst_56 {dimension_numbers = #tpu.dot_dimension_numbers<[1], [0], [0], [1], [0, 0, 1, 1], [], []>} : vector<2x32xf32>, vector<32x128xf32>, vector<2x128xf32> -> vector<2x128xf32>
    %211 = arith.addf %209, %210 : vector<2x128xf32>
    %212 = vector.extract_strided_slice %211 {offsets = [0, 0], sizes = [2, 32], strides = [1, 1]} : vector<2x128xf32> to vector<2x32xf32>
    %213 = arith.negf %212 : vector<2x32xf32>
    %214 = math.exp %213 : vector<2x32xf32>
    %cst_57 = arith.constant 1.000000e+00 : f32
    %215 = vector.broadcast %cst_57 : f32 to vector<2x32xf32>
    %216 = arith.addf %215, %214 : vector<2x32xf32>
    %217 = arith.divf %215, %216 : vector<2x32xf32>
    %218 = vector.extract_strided_slice %211 {offsets = [0, 32], sizes = [2, 32], strides = [1, 1]} : vector<2x128xf32> to vector<2x32xf32>
    %219 = arith.negf %218 : vector<2x32xf32>
    %220 = math.exp %219 : vector<2x32xf32>
    %cst_58 = arith.constant 1.000000e+00 : f32
    %221 = vector.broadcast %cst_58 : f32 to vector<2x32xf32>
    %222 = arith.addf %221, %220 : vector<2x32xf32>
    %223 = arith.divf %221, %222 : vector<2x32xf32>
    %224 = vector.extract_strided_slice %211 {offsets = [0, 64], sizes = [2, 32], strides = [1, 1]} : vector<2x128xf32> to vector<2x32xf32>
    %225 = math.tanh %224 : vector<2x32xf32>
    %226 = vector.extract_strided_slice %211 {offsets = [0, 96], sizes = [2, 32], strides = [1, 1]} : vector<2x128xf32> to vector<2x32xf32>
    %227 = arith.negf %226 : vector<2x32xf32>
    %228 = math.exp %227 : vector<2x32xf32>
    %cst_59 = arith.constant 1.000000e+00 : f32
    %229 = vector.broadcast %cst_59 : f32 to vector<2x32xf32>
    %230 = arith.addf %229, %228 : vector<2x32xf32>
    %231 = arith.divf %229, %230 : vector<2x32xf32>
    %232 = arith.mulf %223, %207 : vector<2x32xf32>
    %233 = arith.mulf %217, %225 : vector<2x32xf32>
    %234 = arith.addf %232, %233 : vector<2x32xf32>
    %235 = math.tanh %234 : vector<2x32xf32>
    %236 = arith.mulf %231, %235 : vector<2x32xf32>
    %c5_i32 = arith.constant 5 : i32
    %237 = vector.broadcast %c5_i32 : i32 to vector<2x1xi32>
    %238 = arith.cmpi sgt, %11, %237 : vector<2x1xi32>
    %239 = vector.shape_cast %238 : vector<2x1xi1> to vector<2x1xi1>
    %240 = vector.broadcast %239 : vector<2x1xi1> to vector<2x32xi1>
    %241 = arith.select %240, %236, %204 : vector<2x32xi1>, vector<2x32xf32>
    %242 = vector.shape_cast %238 : vector<2x1xi1> to vector<2x1xi1>
    %243 = vector.broadcast %242 : vector<2x1xi1> to vector<2x32xi1>
    %244 = arith.select %243, %234, %207 : vector<2x32xi1>, vector<2x32xf32>
    %c10_60 = arith.constant 10 : index
    %c0_61 = arith.constant 0 : index
    %245 = vector.load %arg14[%c10_60, %c0_61] : memref<16x32xf32, #tpu.memory_space<vmem>>, vector<2x32xf32>
    tpu.vector_store %arg14[%c10_60, %c0_61], %241 {strides = array<i32>} : memref<16x32xf32, #tpu.memory_space<vmem>>, vector<2x32xf32>,
    %c12 = arith.constant 12 : index
    %c0_62 = arith.constant 0 : index
    %246 = vector.load %arg13[%c12, %c0_62] : memref<16x128xf32, #tpu.memory_space<vmem>>, vector<2x128xf32>
    %cst_63 = arith.constant dense<0.000000e+00> : vector<2x128xf32>
    %247 = tpu.matmul %241, %19, %cst_63 {dimension_numbers = #tpu.dot_dimension_numbers<[1], [0], [0], [1], [0, 0, 1, 1], [], []>} : vector<2x32xf32>, vector<32x128xf32>, vector<2x128xf32> -> vector<2x128xf32>
    %248 = arith.addf %246, %247 : vector<2x128xf32>
    %249 = vector.extract_strided_slice %248 {offsets = [0, 0], sizes = [2, 32], strides = [1, 1]} : vector<2x128xf32> to vector<2x32xf32>
    %250 = arith.negf %249 : vector<2x32xf32>
    %251 = math.exp %250 : vector<2x32xf32>
    %cst_64 = arith.constant 1.000000e+00 : f32
    %252 = vector.broadcast %cst_64 : f32 to vector<2x32xf32>
    %253 = arith.addf %252, %251 : vector<2x32xf32>
    %254 = arith.divf %252, %253 : vector<2x32xf32>
    %255 = vector.extract_strided_slice %248 {offsets = [0, 32], sizes = [2, 32], strides = [1, 1]} : vector<2x128xf32> to vector<2x32xf32>
    %256 = arith.negf %255 : vector<2x32xf32>
    %257 = math.exp %256 : vector<2x32xf32>
    %cst_65 = arith.constant 1.000000e+00 : f32
    %258 = vector.broadcast %cst_65 : f32 to vector<2x32xf32>
    %259 = arith.addf %258, %257 : vector<2x32xf32>
    %260 = arith.divf %258, %259 : vector<2x32xf32>
    %261 = vector.extract_strided_slice %248 {offsets = [0, 64], sizes = [2, 32], strides = [1, 1]} : vector<2x128xf32> to vector<2x32xf32>
    %262 = math.tanh %261 : vector<2x32xf32>
    %263 = vector.extract_strided_slice %248 {offsets = [0, 96], sizes = [2, 32], strides = [1, 1]} : vector<2x128xf32> to vector<2x32xf32>
    %264 = arith.negf %263 : vector<2x32xf32>
    %265 = math.exp %264 : vector<2x32xf32>
    %cst_66 = arith.constant 1.000000e+00 : f32
    %266 = vector.broadcast %cst_66 : f32 to vector<2x32xf32>
    %267 = arith.addf %266, %265 : vector<2x32xf32>
    %268 = arith.divf %266, %267 : vector<2x32xf32>
    %269 = arith.mulf %260, %244 : vector<2x32xf32>
    %270 = arith.mulf %254, %262 : vector<2x32xf32>
    %271 = arith.addf %269, %270 : vector<2x32xf32>
    %272 = math.tanh %271 : vector<2x32xf32>
    %273 = arith.mulf %268, %272 : vector<2x32xf32>
    %c6_i32 = arith.constant 6 : i32
    %274 = vector.broadcast %c6_i32 : i32 to vector<2x1xi32>
    %275 = arith.cmpi sgt, %11, %274 : vector<2x1xi32>
    %276 = vector.shape_cast %275 : vector<2x1xi1> to vector<2x1xi1>
    %277 = vector.broadcast %276 : vector<2x1xi1> to vector<2x32xi1>
    %278 = arith.select %277, %273, %241 : vector<2x32xi1>, vector<2x32xf32>
    %279 = vector.shape_cast %275 : vector<2x1xi1> to vector<2x1xi1>
    %280 = vector.broadcast %279 : vector<2x1xi1> to vector<2x32xi1>
    %281 = arith.select %280, %271, %244 : vector<2x32xi1>, vector<2x32xf32>
    %c12_67 = arith.constant 12 : index
    %c0_68 = arith.constant 0 : index
    %282 = vector.load %arg14[%c12_67, %c0_68] : memref<16x32xf32, #tpu.memory_space<vmem>>, vector<2x32xf32>
    tpu.vector_store %arg14[%c12_67, %c0_68], %278 {strides = array<i32>} : memref<16x32xf32, #tpu.memory_space<vmem>>, vector<2x32xf32>,
    %c14 = arith.constant 14 : index
    %c0_69 = arith.constant 0 : index
    %283 = vector.load %arg13[%c14, %c0_69] : memref<16x128xf32, #tpu.memory_space<vmem>>, vector<2x128xf32>
    %cst_70 = arith.constant dense<0.000000e+00> : vector<2x128xf32>
    %284 = tpu.matmul %278, %19, %cst_70 {dimension_numbers = #tpu.dot_dimension_numbers<[1], [0], [0], [1], [0, 0, 1, 1], [], []>} : vector<2x32xf32>, vector<32x128xf32>, vector<2x128xf32> -> vector<2x128xf32>
    %285 = arith.addf %283, %284 : vector<2x128xf32>
    %286 = vector.extract_strided_slice %285 {offsets = [0, 0], sizes = [2, 32], strides = [1, 1]} : vector<2x128xf32> to vector<2x32xf32>
    %287 = arith.negf %286 : vector<2x32xf32>
    %288 = math.exp %287 : vector<2x32xf32>
    %cst_71 = arith.constant 1.000000e+00 : f32
    %289 = vector.broadcast %cst_71 : f32 to vector<2x32xf32>
    %290 = arith.addf %289, %288 : vector<2x32xf32>
    %291 = arith.divf %289, %290 : vector<2x32xf32>
    %292 = vector.extract_strided_slice %285 {offsets = [0, 32], sizes = [2, 32], strides = [1, 1]} : vector<2x128xf32> to vector<2x32xf32>
    %293 = arith.negf %292 : vector<2x32xf32>
    %294 = math.exp %293 : vector<2x32xf32>
    %cst_72 = arith.constant 1.000000e+00 : f32
    %295 = vector.broadcast %cst_72 : f32 to vector<2x32xf32>
    %296 = arith.addf %295, %294 : vector<2x32xf32>
    %297 = arith.divf %295, %296 : vector<2x32xf32>
    %298 = vector.extract_strided_slice %285 {offsets = [0, 64], sizes = [2, 32], strides = [1, 1]} : vector<2x128xf32> to vector<2x32xf32>
    %299 = math.tanh %298 : vector<2x32xf32>
    %300 = vector.extract_strided_slice %285 {offsets = [0, 96], sizes = [2, 32], strides = [1, 1]} : vector<2x128xf32> to vector<2x32xf32>
    %301 = arith.negf %300 : vector<2x32xf32>
    %302 = math.exp %301 : vector<2x32xf32>
    %cst_73 = arith.constant 1.000000e+00 : f32
    %303 = vector.broadcast %cst_73 : f32 to vector<2x32xf32>
    %304 = arith.addf %303, %302 : vector<2x32xf32>
    %305 = arith.divf %303, %304 : vector<2x32xf32>
    %306 = arith.mulf %297, %281 : vector<2x32xf32>
    %307 = arith.mulf %291, %299 : vector<2x32xf32>
    %308 = arith.addf %306, %307 : vector<2x32xf32>
    %309 = math.tanh %308 : vector<2x32xf32>
    %310 = arith.mulf %305, %309 : vector<2x32xf32>
    %c7_i32 = arith.constant 7 : i32
    %311 = vector.broadcast %c7_i32 : i32 to vector<2x1xi32>
    %312 = arith.cmpi sgt, %11, %311 : vector<2x1xi32>
    %313 = vector.shape_cast %312 : vector<2x1xi1> to vector<2x1xi1>
    %314 = vector.broadcast %313 : vector<2x1xi1> to vector<2x32xi1>
    %315 = arith.select %314, %310, %278 : vector<2x32xi1>, vector<2x32xf32>
    %c14_74 = arith.constant 14 : index
    %c0_75 = arith.constant 0 : index
    %316 = vector.load %arg14[%c14_74, %c0_75] : memref<16x32xf32, #tpu.memory_space<vmem>>, vector<2x32xf32>
    tpu.vector_store %arg14[%c14_74, %c0_75], %315 {strides = array<i32>} : memref<16x32xf32, #tpu.memory_space<vmem>>, vector<2x32xf32>,
    %c0_76 = arith.constant 0 : index
    %c0_77 = arith.constant 0 : index
    %317 = vector.load %arg14[%c0_76, %c0_77] : memref<16x32xf32, #tpu.memory_space<vmem>>, vector<16x32xf32>
    %c0_78 = arith.constant 0 : index
    %c0_79 = arith.constant 0 : index
    %318 = vector.load %arg5[%c0_78, %c0_79] : memref<32x128xf32, #tpu.memory_space<vmem>>, vector<32x128xf32>
    %cst_80 = arith.constant dense<0.000000e+00> : vector<16x128xf32>
    %319 = tpu.matmul %317, %318, %cst_80 {dimension_numbers = #tpu.dot_dimension_numbers<[1], [0], [0], [1], [0, 0, 1, 1], [], []>} : vector<16x32xf32>, vector<32x128xf32>, vector<16x128xf32> -> vector<16x128xf32>
    %c0_81 = arith.constant 0 : index
    %c0_82 = arith.constant 0 : index
    %320 = vector.load %arg7[%c0_81, %c0_82] : memref<1x128xf32, #tpu.memory_space<vmem>>, vector<1x128xf32>
    %321 = vector.broadcast %320 : vector<1x128xf32> to vector<16x128xf32>
    %322 = arith.addf %319, %321 : vector<16x128xf32>
    %c0_83 = arith.constant 0 : index
    %c0_84 = arith.constant 0 : index
    %323 = vector.load %arg13[%c0_83, %c0_84] : memref<16x128xf32, #tpu.memory_space<vmem>>, vector<16x128xf32>
    tpu.vector_store %arg13[%c0_83, %c0_84], %322 {strides = array<i32>} : memref<16x128xf32, #tpu.memory_space<vmem>>, vector<16x128xf32>,
    %c0_85 = arith.constant 0 : index
    %c0_86 = arith.constant 0 : index
    %324 = vector.load %arg6[%c0_85, %c0_86] : memref<32x128xf32, #tpu.memory_space<vmem>>, vector<32x128xf32>
    %c1_87 = arith.constant 1 : index
    %c0_88 = arith.constant 0 : index
    %c0_89 = arith.constant 0 : index
    %325 = vector.load %arg8[%c1_87, %c0_88, %c0_89] : memref<2x2x32xf32, #tpu.memory_space<vmem>>, vector<1x2x32xf32>
    %326 = vector.shape_cast %325 : vector<1x2x32xf32> to vector<2x32xf32>
    %c1_90 = arith.constant 1 : index
    %c0_91 = arith.constant 0 : index
    %c0_92 = arith.constant 0 : index
    %327 = vector.load %arg9[%c1_90, %c0_91, %c0_92] : memref<2x2x32xf32, #tpu.memory_space<vmem>>, vector<1x2x32xf32>
    %328 = vector.shape_cast %327 : vector<1x2x32xf32> to vector<2x32xf32>
    %c0_93 = arith.constant 0 : index
    %c0_94 = arith.constant 0 : index
    %329 = vector.load %arg13[%c0_93, %c0_94] : memref<16x128xf32, #tpu.memory_space<vmem>>, vector<2x128xf32>
    %cst_95 = arith.constant dense<0.000000e+00> : vector<2x128xf32>
    %330 = tpu.matmul %326, %324, %cst_95 {dimension_numbers = #tpu.dot_dimension_numbers<[1], [0], [0], [1], [0, 0, 1, 1], [], []>} : vector<2x32xf32>, vector<32x128xf32>, vector<2x128xf32> -> vector<2x128xf32>
    %331 = arith.addf %329, %330 : vector<2x128xf32>
    %332 = vector.extract_strided_slice %331 {offsets = [0, 0], sizes = [2, 32], strides = [1, 1]} : vector<2x128xf32> to vector<2x32xf32>
    %333 = arith.negf %332 : vector<2x32xf32>
    %334 = math.exp %333 : vector<2x32xf32>
    %cst_96 = arith.constant 1.000000e+00 : f32
    %335 = vector.broadcast %cst_96 : f32 to vector<2x32xf32>
    %336 = arith.addf %335, %334 : vector<2x32xf32>
    %337 = arith.divf %335, %336 : vector<2x32xf32>
    %338 = vector.extract_strided_slice %331 {offsets = [0, 32], sizes = [2, 32], strides = [1, 1]} : vector<2x128xf32> to vector<2x32xf32>
    %339 = arith.negf %338 : vector<2x32xf32>
    %340 = math.exp %339 : vector<2x32xf32>
    %cst_97 = arith.constant 1.000000e+00 : f32
    %341 = vector.broadcast %cst_97 : f32 to vector<2x32xf32>
    %342 = arith.addf %341, %340 : vector<2x32xf32>
    %343 = arith.divf %341, %342 : vector<2x32xf32>
    %344 = vector.extract_strided_slice %331 {offsets = [0, 64], sizes = [2, 32], strides = [1, 1]} : vector<2x128xf32> to vector<2x32xf32>
    %345 = math.tanh %344 : vector<2x32xf32>
    %346 = vector.extract_strided_slice %331 {offsets = [0, 96], sizes = [2, 32], strides = [1, 1]} : vector<2x128xf32> to vector<2x32xf32>
    %347 = arith.negf %346 : vector<2x32xf32>
    %348 = math.exp %347 : vector<2x32xf32>
    %cst_98 = arith.constant 1.000000e+00 : f32
    %349 = vector.broadcast %cst_98 : f32 to vector<2x32xf32>
    %350 = arith.addf %349, %348 : vector<2x32xf32>
    %351 = arith.divf %349, %350 : vector<2x32xf32>
    %352 = arith.mulf %343, %328 : vector<2x32xf32>
    %353 = arith.mulf %337, %345 : vector<2x32xf32>
    %354 = arith.addf %352, %353 : vector<2x32xf32>
    %355 = math.tanh %354 : vector<2x32xf32>
    %356 = arith.mulf %351, %355 : vector<2x32xf32>
    %c0_i32_99 = arith.constant 0 : i32
    %357 = vector.broadcast %c0_i32_99 : i32 to vector<2x1xi32>
    %358 = arith.cmpi sgt, %11, %357 : vector<2x1xi32>
    %359 = vector.shape_cast %358 : vector<2x1xi1> to vector<2x1xi1>
    %360 = vector.broadcast %359 : vector<2x1xi1> to vector<2x32xi1>
    %361 = arith.select %360, %356, %326 : vector<2x32xi1>, vector<2x32xf32>
    %362 = vector.shape_cast %358 : vector<2x1xi1> to vector<2x1xi1>
    %363 = vector.broadcast %362 : vector<2x1xi1> to vector<2x32xi1>
    %364 = arith.select %363, %354, %328 : vector<2x32xi1>, vector<2x32xf32>
    %cst_100 = arith.constant -1.000000e+00 : f32
    %365 = vector.shape_cast %358 : vector<2x1xi1> to vector<2x1xi1>
    %366 = vector.broadcast %365 : vector<2x1xi1> to vector<2x32xi1>
    %367 = vector.broadcast %cst_100 : f32 to vector<2x32xf32>
    %368 = arith.select %366, %361, %367 : vector<2x32xi1>, vector<2x32xf32>
    %c0_101 = arith.constant 0 : index
    %c0_102 = arith.constant 0 : index
    %369 = vector.load %arg14[%c0_101, %c0_102] : memref<16x32xf32, #tpu.memory_space<vmem>>, vector<2x32xf32>
    tpu.vector_store %arg14[%c0_101, %c0_102], %368 {strides = array<i32>} : memref<16x32xf32, #tpu.memory_space<vmem>>, vector<2x32xf32>,
    %c2_103 = arith.constant 2 : index
    %c0_104 = arith.constant 0 : index
    %370 = vector.load %arg13[%c2_103, %c0_104] : memref<16x128xf32, #tpu.memory_space<vmem>>, vector<2x128xf32>
    %cst_105 = arith.constant dense<0.000000e+00> : vector<2x128xf32>
    %371 = tpu.matmul %361, %324, %cst_105 {dimension_numbers = #tpu.dot_dimension_numbers<[1], [0], [0], [1], [0, 0, 1, 1], [], []>} : vector<2x32xf32>, vector<32x128xf32>, vector<2x128xf32> -> vector<2x128xf32>
    %372 = arith.addf %370, %371 : vector<2x128xf32>
    %373 = vector.extract_strided_slice %372 {offsets = [0, 0], sizes = [2, 32], strides = [1, 1]} : vector<2x128xf32> to vector<2x32xf32>
    %374 = arith.negf %373 : vector<2x32xf32>
    %375 = math.exp %374 : vector<2x32xf32>
    %cst_106 = arith.constant 1.000000e+00 : f32
    %376 = vector.broadcast %cst_106 : f32 to vector<2x32xf32>
    %377 = arith.addf %376, %375 : vector<2x32xf32>
    %378 = arith.divf %376, %377 : vector<2x32xf32>
    %379 = vector.extract_strided_slice %372 {offsets = [0, 32], sizes = [2, 32], strides = [1, 1]} : vector<2x128xf32> to vector<2x32xf32>
    %380 = arith.negf %379 : vector<2x32xf32>
    %381 = math.exp %380 : vector<2x32xf32>
    %cst_107 = arith.constant 1.000000e+00 : f32
    %382 = vector.broadcast %cst_107 : f32 to vector<2x32xf32>
    %383 = arith.addf %382, %381 : vector<2x32xf32>
    %384 = arith.divf %382, %383 : vector<2x32xf32>
    %385 = vector.extract_strided_slice %372 {offsets = [0, 64], sizes = [2, 32], strides = [1, 1]} : vector<2x128xf32> to vector<2x32xf32>
    %386 = math.tanh %385 : vector<2x32xf32>
    %387 = vector.extract_strided_slice %372 {offsets = [0, 96], sizes = [2, 32], strides = [1, 1]} : vector<2x128xf32> to vector<2x32xf32>
    %388 = arith.negf %387 : vector<2x32xf32>
    %389 = math.exp %388 : vector<2x32xf32>
    %cst_108 = arith.constant 1.000000e+00 : f32
    %390 = vector.broadcast %cst_108 : f32 to vector<2x32xf32>
    %391 = arith.addf %390, %389 : vector<2x32xf32>
    %392 = arith.divf %390, %391 : vector<2x32xf32>
    %393 = arith.mulf %384, %364 : vector<2x32xf32>
    %394 = arith.mulf %378, %386 : vector<2x32xf32>
    %395 = arith.addf %393, %394 : vector<2x32xf32>
    %396 = math.tanh %395 : vector<2x32xf32>
    %397 = arith.mulf %392, %396 : vector<2x32xf32>
    %c1_i32_109 = arith.constant 1 : i32
    %398 = vector.broadcast %c1_i32_109 : i32 to vector<2x1xi32>
    %399 = arith.cmpi sgt, %11, %398 : vector<2x1xi32>
    %400 = vector.shape_cast %399 : vector<2x1xi1> to vector<2x1xi1>
    %401 = vector.broadcast %400 : vector<2x1xi1> to vector<2x32xi1>
    %402 = arith.select %401, %397, %361 : vector<2x32xi1>, vector<2x32xf32>
    %403 = vector.shape_cast %399 : vector<2x1xi1> to vector<2x1xi1>
    %404 = vector.broadcast %403 : vector<2x1xi1> to vector<2x32xi1>
    %405 = arith.select %404, %395, %364 : vector<2x32xi1>, vector<2x32xf32>
    %cst_110 = arith.constant -1.000000e+00 : f32
    %406 = vector.shape_cast %399 : vector<2x1xi1> to vector<2x1xi1>
    %407 = vector.broadcast %406 : vector<2x1xi1> to vector<2x32xi1>
    %408 = vector.broadcast %cst_110 : f32 to vector<2x32xf32>
    %409 = arith.select %407, %402, %408 : vector<2x32xi1>, vector<2x32xf32>
    %c2_111 = arith.constant 2 : index
    %c0_112 = arith.constant 0 : index
    %410 = vector.load %arg14[%c2_111, %c0_112] : memref<16x32xf32, #tpu.memory_space<vmem>>, vector<2x32xf32>
    tpu.vector_store %arg14[%c2_111, %c0_112], %409 {strides = array<i32>} : memref<16x32xf32, #tpu.memory_space<vmem>>, vector<2x32xf32>,
    %c4_113 = arith.constant 4 : index
    %c0_114 = arith.constant 0 : index
    %411 = vector.load %arg13[%c4_113, %c0_114] : memref<16x128xf32, #tpu.memory_space<vmem>>, vector<2x128xf32>
    %cst_115 = arith.constant dense<0.000000e+00> : vector<2x128xf32>
    %412 = tpu.matmul %402, %324, %cst_115 {dimension_numbers = #tpu.dot_dimension_numbers<[1], [0], [0], [1], [0, 0, 1, 1], [], []>} : vector<2x32xf32>, vector<32x128xf32>, vector<2x128xf32> -> vector<2x128xf32>
    %413 = arith.addf %411, %412 : vector<2x128xf32>
    %414 = vector.extract_strided_slice %413 {offsets = [0, 0], sizes = [2, 32], strides = [1, 1]} : vector<2x128xf32> to vector<2x32xf32>
    %415 = arith.negf %414 : vector<2x32xf32>
    %416 = math.exp %415 : vector<2x32xf32>
    %cst_116 = arith.constant 1.000000e+00 : f32
    %417 = vector.broadcast %cst_116 : f32 to vector<2x32xf32>
    %418 = arith.addf %417, %416 : vector<2x32xf32>
    %419 = arith.divf %417, %418 : vector<2x32xf32>
    %420 = vector.extract_strided_slice %413 {offsets = [0, 32], sizes = [2, 32], strides = [1, 1]} : vector<2x128xf32> to vector<2x32xf32>
    %421 = arith.negf %420 : vector<2x32xf32>
    %422 = math.exp %421 : vector<2x32xf32>
    %cst_117 = arith.constant 1.000000e+00 : f32
    %423 = vector.broadcast %cst_117 : f32 to vector<2x32xf32>
    %424 = arith.addf %423, %422 : vector<2x32xf32>
    %425 = arith.divf %423, %424 : vector<2x32xf32>
    %426 = vector.extract_strided_slice %413 {offsets = [0, 64], sizes = [2, 32], strides = [1, 1]} : vector<2x128xf32> to vector<2x32xf32>
    %427 = math.tanh %426 : vector<2x32xf32>
    %428 = vector.extract_strided_slice %413 {offsets = [0, 96], sizes = [2, 32], strides = [1, 1]} : vector<2x128xf32> to vector<2x32xf32>
    %429 = arith.negf %428 : vector<2x32xf32>
    %430 = math.exp %429 : vector<2x32xf32>
    %cst_118 = arith.constant 1.000000e+00 : f32
    %431 = vector.broadcast %cst_118 : f32 to vector<2x32xf32>
    %432 = arith.addf %431, %430 : vector<2x32xf32>
    %433 = arith.divf %431, %432 : vector<2x32xf32>
    %434 = arith.mulf %425, %405 : vector<2x32xf32>
    %435 = arith.mulf %419, %427 : vector<2x32xf32>
    %436 = arith.addf %434, %435 : vector<2x32xf32>
    %437 = math.tanh %436 : vector<2x32xf32>
    %438 = arith.mulf %433, %437 : vector<2x32xf32>
    %c2_i32_119 = arith.constant 2 : i32
    %439 = vector.broadcast %c2_i32_119 : i32 to vector<2x1xi32>
    %440 = arith.cmpi sgt, %11, %439 : vector<2x1xi32>
    %441 = vector.shape_cast %440 : vector<2x1xi1> to vector<2x1xi1>
    %442 = vector.broadcast %441 : vector<2x1xi1> to vector<2x32xi1>
    %443 = arith.select %442, %438, %402 : vector<2x32xi1>, vector<2x32xf32>
    %444 = vector.shape_cast %440 : vector<2x1xi1> to vector<2x1xi1>
    %445 = vector.broadcast %444 : vector<2x1xi1> to vector<2x32xi1>
    %446 = arith.select %445, %436, %405 : vector<2x32xi1>, vector<2x32xf32>
    %cst_120 = arith.constant -1.000000e+00 : f32
    %447 = vector.shape_cast %440 : vector<2x1xi1> to vector<2x1xi1>
    %448 = vector.broadcast %447 : vector<2x1xi1> to vector<2x32xi1>
    %449 = vector.broadcast %cst_120 : f32 to vector<2x32xf32>
    %450 = arith.select %448, %443, %449 : vector<2x32xi1>, vector<2x32xf32>
    %c4_121 = arith.constant 4 : index
    %c0_122 = arith.constant 0 : index
    %451 = vector.load %arg14[%c4_121, %c0_122] : memref<16x32xf32, #tpu.memory_space<vmem>>, vector<2x32xf32>
    tpu.vector_store %arg14[%c4_121, %c0_122], %450 {strides = array<i32>} : memref<16x32xf32, #tpu.memory_space<vmem>>, vector<2x32xf32>,
    %c6_123 = arith.constant 6 : index
    %c0_124 = arith.constant 0 : index
    %452 = vector.load %arg13[%c6_123, %c0_124] : memref<16x128xf32, #tpu.memory_space<vmem>>, vector<2x128xf32>
    %cst_125 = arith.constant dense<0.000000e+00> : vector<2x128xf32>
    %453 = tpu.matmul %443, %324, %cst_125 {dimension_numbers = #tpu.dot_dimension_numbers<[1], [0], [0], [1], [0, 0, 1, 1], [], []>} : vector<2x32xf32>, vector<32x128xf32>, vector<2x128xf32> -> vector<2x128xf32>
    %454 = arith.addf %452, %453 : vector<2x128xf32>
    %455 = vector.extract_strided_slice %454 {offsets = [0, 0], sizes = [2, 32], strides = [1, 1]} : vector<2x128xf32> to vector<2x32xf32>
    %456 = arith.negf %455 : vector<2x32xf32>
    %457 = math.exp %456 : vector<2x32xf32>
    %cst_126 = arith.constant 1.000000e+00 : f32
    %458 = vector.broadcast %cst_126 : f32 to vector<2x32xf32>
    %459 = arith.addf %458, %457 : vector<2x32xf32>
    %460 = arith.divf %458, %459 : vector<2x32xf32>
    %461 = vector.extract_strided_slice %454 {offsets = [0, 32], sizes = [2, 32], strides = [1, 1]} : vector<2x128xf32> to vector<2x32xf32>
    %462 = arith.negf %461 : vector<2x32xf32>
    %463 = math.exp %462 : vector<2x32xf32>
    %cst_127 = arith.constant 1.000000e+00 : f32
    %464 = vector.broadcast %cst_127 : f32 to vector<2x32xf32>
    %465 = arith.addf %464, %463 : vector<2x32xf32>
    %466 = arith.divf %464, %465 : vector<2x32xf32>
    %467 = vector.extract_strided_slice %454 {offsets = [0, 64], sizes = [2, 32], strides = [1, 1]} : vector<2x128xf32> to vector<2x32xf32>
    %468 = math.tanh %467 : vector<2x32xf32>
    %469 = vector.extract_strided_slice %454 {offsets = [0, 96], sizes = [2, 32], strides = [1, 1]} : vector<2x128xf32> to vector<2x32xf32>
    %470 = arith.negf %469 : vector<2x32xf32>
    %471 = math.exp %470 : vector<2x32xf32>
    %cst_128 = arith.constant 1.000000e+00 : f32
    %472 = vector.broadcast %cst_128 : f32 to vector<2x32xf32>
    %473 = arith.addf %472, %471 : vector<2x32xf32>
    %474 = arith.divf %472, %473 : vector<2x32xf32>
    %475 = arith.mulf %466, %446 : vector<2x32xf32>
    %476 = arith.mulf %460, %468 : vector<2x32xf32>
    %477 = arith.addf %475, %476 : vector<2x32xf32>
    %478 = math.tanh %477 : vector<2x32xf32>
    %479 = arith.mulf %474, %478 : vector<2x32xf32>
    %c3_i32_129 = arith.constant 3 : i32
    %480 = vector.broadcast %c3_i32_129 : i32 to vector<2x1xi32>
    %481 = arith.cmpi sgt, %11, %480 : vector<2x1xi32>
    %482 = vector.shape_cast %481 : vector<2x1xi1> to vector<2x1xi1>
    %483 = vector.broadcast %482 : vector<2x1xi1> to vector<2x32xi1>
    %484 = arith.select %483, %479, %443 : vector<2x32xi1>, vector<2x32xf32>
    %485 = vector.shape_cast %481 : vector<2x1xi1> to vector<2x1xi1>
    %486 = vector.broadcast %485 : vector<2x1xi1> to vector<2x32xi1>
    %487 = arith.select %486, %477, %446 : vector<2x32xi1>, vector<2x32xf32>
    %cst_130 = arith.constant -1.000000e+00 : f32
    %488 = vector.shape_cast %481 : vector<2x1xi1> to vector<2x1xi1>
    %489 = vector.broadcast %488 : vector<2x1xi1> to vector<2x32xi1>
    %490 = vector.broadcast %cst_130 : f32 to vector<2x32xf32>
    %491 = arith.select %489, %484, %490 : vector<2x32xi1>, vector<2x32xf32>
    %c6_131 = arith.constant 6 : index
    %c0_132 = arith.constant 0 : index
    %492 = vector.load %arg14[%c6_131, %c0_132] : memref<16x32xf32, #tpu.memory_space<vmem>>, vector<2x32xf32>
    tpu.vector_store %arg14[%c6_131, %c0_132], %491 {strides = array<i32>} : memref<16x32xf32, #tpu.memory_space<vmem>>, vector<2x32xf32>,
    %c8_133 = arith.constant 8 : index
    %c0_134 = arith.constant 0 : index
    %493 = vector.load %arg13[%c8_133, %c0_134] : memref<16x128xf32, #tpu.memory_space<vmem>>, vector<2x128xf32>
    %cst_135 = arith.constant dense<0.000000e+00> : vector<2x128xf32>
    %494 = tpu.matmul %484, %324, %cst_135 {dimension_numbers = #tpu.dot_dimension_numbers<[1], [0], [0], [1], [0, 0, 1, 1], [], []>} : vector<2x32xf32>, vector<32x128xf32>, vector<2x128xf32> -> vector<2x128xf32>
    %495 = arith.addf %493, %494 : vector<2x128xf32>
    %496 = vector.extract_strided_slice %495 {offsets = [0, 0], sizes = [2, 32], strides = [1, 1]} : vector<2x128xf32> to vector<2x32xf32>
    %497 = arith.negf %496 : vector<2x32xf32>
    %498 = math.exp %497 : vector<2x32xf32>
    %cst_136 = arith.constant 1.000000e+00 : f32
    %499 = vector.broadcast %cst_136 : f32 to vector<2x32xf32>
    %500 = arith.addf %499, %498 : vector<2x32xf32>
    %501 = arith.divf %499, %500 : vector<2x32xf32>
    %502 = vector.extract_strided_slice %495 {offsets = [0, 32], sizes = [2, 32], strides = [1, 1]} : vector<2x128xf32> to vector<2x32xf32>
    %503 = arith.negf %502 : vector<2x32xf32>
    %504 = math.exp %503 : vector<2x32xf32>
    %cst_137 = arith.constant 1.000000e+00 : f32
    %505 = vector.broadcast %cst_137 : f32 to vector<2x32xf32>
    %506 = arith.addf %505, %504 : vector<2x32xf32>
    %507 = arith.divf %505, %506 : vector<2x32xf32>
    %508 = vector.extract_strided_slice %495 {offsets = [0, 64], sizes = [2, 32], strides = [1, 1]} : vector<2x128xf32> to vector<2x32xf32>
    %509 = math.tanh %508 : vector<2x32xf32>
    %510 = vector.extract_strided_slice %495 {offsets = [0, 96], sizes = [2, 32], strides = [1, 1]} : vector<2x128xf32> to vector<2x32xf32>
    %511 = arith.negf %510 : vector<2x32xf32>
    %512 = math.exp %511 : vector<2x32xf32>
    %cst_138 = arith.constant 1.000000e+00 : f32
    %513 = vector.broadcast %cst_138 : f32 to vector<2x32xf32>
    %514 = arith.addf %513, %512 : vector<2x32xf32>
    %515 = arith.divf %513, %514 : vector<2x32xf32>
    %516 = arith.mulf %507, %487 : vector<2x32xf32>
    %517 = arith.mulf %501, %509 : vector<2x32xf32>
    %518 = arith.addf %516, %517 : vector<2x32xf32>
    %519 = math.tanh %518 : vector<2x32xf32>
    %520 = arith.mulf %515, %519 : vector<2x32xf32>
    %c4_i32_139 = arith.constant 4 : i32
    %521 = vector.broadcast %c4_i32_139 : i32 to vector<2x1xi32>
    %522 = arith.cmpi sgt, %11, %521 : vector<2x1xi32>
    %523 = vector.shape_cast %522 : vector<2x1xi1> to vector<2x1xi1>
    %524 = vector.broadcast %523 : vector<2x1xi1> to vector<2x32xi1>
    %525 = arith.select %524, %520, %484 : vector<2x32xi1>, vector<2x32xf32>
    %526 = vector.shape_cast %522 : vector<2x1xi1> to vector<2x1xi1>
    %527 = vector.broadcast %526 : vector<2x1xi1> to vector<2x32xi1>
    %528 = arith.select %527, %518, %487 : vector<2x32xi1>, vector<2x32xf32>
    %cst_140 = arith.constant -1.000000e+00 : f32
    %529 = vector.shape_cast %522 : vector<2x1xi1> to vector<2x1xi1>
    %530 = vector.broadcast %529 : vector<2x1xi1> to vector<2x32xi1>
    %531 = vector.broadcast %cst_140 : f32 to vector<2x32xf32>
    %532 = arith.select %530, %525, %531 : vector<2x32xi1>, vector<2x32xf32>
    %c8_141 = arith.constant 8 : index
    %c0_142 = arith.constant 0 : index
    %533 = vector.load %arg14[%c8_141, %c0_142] : memref<16x32xf32, #tpu.memory_space<vmem>>, vector<2x32xf32>
    tpu.vector_store %arg14[%c8_141, %c0_142], %532 {strides = array<i32>} : memref<16x32xf32, #tpu.memory_space<vmem>>, vector<2x32xf32>,
    %c10_143 = arith.constant 10 : index
    %c0_144 = arith.constant 0 : index
    %534 = vector.load %arg13[%c10_143, %c0_144] : memref<16x128xf32, #tpu.memory_space<vmem>>, vector<2x128xf32>
    %cst_145 = arith.constant dense<0.000000e+00> : vector<2x128xf32>
    %535 = tpu.matmul %525, %324, %cst_145 {dimension_numbers = #tpu.dot_dimension_numbers<[1], [0], [0], [1], [0, 0, 1, 1], [], []>} : vector<2x32xf32>, vector<32x128xf32>, vector<2x128xf32> -> vector<2x128xf32>
    %536 = arith.addf %534, %535 : vector<2x128xf32>
    %537 = vector.extract_strided_slice %536 {offsets = [0, 0], sizes = [2, 32], strides = [1, 1]} : vector<2x128xf32> to vector<2x32xf32>
    %538 = arith.negf %537 : vector<2x32xf32>
    %539 = math.exp %538 : vector<2x32xf32>
    %cst_146 = arith.constant 1.000000e+00 : f32
    %540 = vector.broadcast %cst_146 : f32 to vector<2x32xf32>
    %541 = arith.addf %540, %539 : vector<2x32xf32>
    %542 = arith.divf %540, %541 : vector<2x32xf32>
    %543 = vector.extract_strided_slice %536 {offsets = [0, 32], sizes = [2, 32], strides = [1, 1]} : vector<2x128xf32> to vector<2x32xf32>
    %544 = arith.negf %543 : vector<2x32xf32>
    %545 = math.exp %544 : vector<2x32xf32>
    %cst_147 = arith.constant 1.000000e+00 : f32
    %546 = vector.broadcast %cst_147 : f32 to vector<2x32xf32>
    %547 = arith.addf %546, %545 : vector<2x32xf32>
    %548 = arith.divf %546, %547 : vector<2x32xf32>
    %549 = vector.extract_strided_slice %536 {offsets = [0, 64], sizes = [2, 32], strides = [1, 1]} : vector<2x128xf32> to vector<2x32xf32>
    %550 = math.tanh %549 : vector<2x32xf32>
    %551 = vector.extract_strided_slice %536 {offsets = [0, 96], sizes = [2, 32], strides = [1, 1]} : vector<2x128xf32> to vector<2x32xf32>
    %552 = arith.negf %551 : vector<2x32xf32>
    %553 = math.exp %552 : vector<2x32xf32>
    %cst_148 = arith.constant 1.000000e+00 : f32
    %554 = vector.broadcast %cst_148 : f32 to vector<2x32xf32>
    %555 = arith.addf %554, %553 : vector<2x32xf32>
    %556 = arith.divf %554, %555 : vector<2x32xf32>
    %557 = arith.mulf %548, %528 : vector<2x32xf32>
    %558 = arith.mulf %542, %550 : vector<2x32xf32>
    %559 = arith.addf %557, %558 : vector<2x32xf32>
    %560 = math.tanh %559 : vector<2x32xf32>
    %561 = arith.mulf %556, %560 : vector<2x32xf32>
    %c5_i32_149 = arith.constant 5 : i32
    %562 = vector.broadcast %c5_i32_149 : i32 to vector<2x1xi32>
    %563 = arith.cmpi sgt, %11, %562 : vector<2x1xi32>
    %564 = vector.shape_cast %563 : vector<2x1xi1> to vector<2x1xi1>
    %565 = vector.broadcast %564 : vector<2x1xi1> to vector<2x32xi1>
    %566 = arith.select %565, %561, %525 : vector<2x32xi1>, vector<2x32xf32>
    %567 = vector.shape_cast %563 : vector<2x1xi1> to vector<2x1xi1>
    %568 = vector.broadcast %567 : vector<2x1xi1> to vector<2x32xi1>
    %569 = arith.select %568, %559, %528 : vector<2x32xi1>, vector<2x32xf32>
    %cst_150 = arith.constant -1.000000e+00 : f32
    %570 = vector.shape_cast %563 : vector<2x1xi1> to vector<2x1xi1>
    %571 = vector.broadcast %570 : vector<2x1xi1> to vector<2x32xi1>
    %572 = vector.broadcast %cst_150 : f32 to vector<2x32xf32>
    %573 = arith.select %571, %566, %572 : vector<2x32xi1>, vector<2x32xf32>
    %c10_151 = arith.constant 10 : index
    %c0_152 = arith.constant 0 : index
    %574 = vector.load %arg14[%c10_151, %c0_152] : memref<16x32xf32, #tpu.memory_space<vmem>>, vector<2x32xf32>
    tpu.vector_store %arg14[%c10_151, %c0_152], %573 {strides = array<i32>} : memref<16x32xf32, #tpu.memory_space<vmem>>, vector<2x32xf32>,
    %c12_153 = arith.constant 12 : index
    %c0_154 = arith.constant 0 : index
    %575 = vector.load %arg13[%c12_153, %c0_154] : memref<16x128xf32, #tpu.memory_space<vmem>>, vector<2x128xf32>
    %cst_155 = arith.constant dense<0.000000e+00> : vector<2x128xf32>
    %576 = tpu.matmul %566, %324, %cst_155 {dimension_numbers = #tpu.dot_dimension_numbers<[1], [0], [0], [1], [0, 0, 1, 1], [], []>} : vector<2x32xf32>, vector<32x128xf32>, vector<2x128xf32> -> vector<2x128xf32>
    %577 = arith.addf %575, %576 : vector<2x128xf32>
    %578 = vector.extract_strided_slice %577 {offsets = [0, 0], sizes = [2, 32], strides = [1, 1]} : vector<2x128xf32> to vector<2x32xf32>
    %579 = arith.negf %578 : vector<2x32xf32>
    %580 = math.exp %579 : vector<2x32xf32>
    %cst_156 = arith.constant 1.000000e+00 : f32
    %581 = vector.broadcast %cst_156 : f32 to vector<2x32xf32>
    %582 = arith.addf %581, %580 : vector<2x32xf32>
    %583 = arith.divf %581, %582 : vector<2x32xf32>
    %584 = vector.extract_strided_slice %577 {offsets = [0, 32], sizes = [2, 32], strides = [1, 1]} : vector<2x128xf32> to vector<2x32xf32>
    %585 = arith.negf %584 : vector<2x32xf32>
    %586 = math.exp %585 : vector<2x32xf32>
    %cst_157 = arith.constant 1.000000e+00 : f32
    %587 = vector.broadcast %cst_157 : f32 to vector<2x32xf32>
    %588 = arith.addf %587, %586 : vector<2x32xf32>
    %589 = arith.divf %587, %588 : vector<2x32xf32>
    %590 = vector.extract_strided_slice %577 {offsets = [0, 64], sizes = [2, 32], strides = [1, 1]} : vector<2x128xf32> to vector<2x32xf32>
    %591 = math.tanh %590 : vector<2x32xf32>
    %592 = vector.extract_strided_slice %577 {offsets = [0, 96], sizes = [2, 32], strides = [1, 1]} : vector<2x128xf32> to vector<2x32xf32>
    %593 = arith.negf %592 : vector<2x32xf32>
    %594 = math.exp %593 : vector<2x32xf32>
    %cst_158 = arith.constant 1.000000e+00 : f32
    %595 = vector.broadcast %cst_158 : f32 to vector<2x32xf32>
    %596 = arith.addf %595, %594 : vector<2x32xf32>
    %597 = arith.divf %595, %596 : vector<2x32xf32>
    %598 = arith.mulf %589, %569 : vector<2x32xf32>
    %599 = arith.mulf %583, %591 : vector<2x32xf32>
    %600 = arith.addf %598, %599 : vector<2x32xf32>
    %601 = math.tanh %600 : vector<2x32xf32>
    %602 = arith.mulf %597, %601 : vector<2x32xf32>
    %c6_i32_159 = arith.constant 6 : i32
    %603 = vector.broadcast %c6_i32_159 : i32 to vector<2x1xi32>
    %604 = arith.cmpi sgt, %11, %603 : vector<2x1xi32>
    %605 = vector.shape_cast %604 : vector<2x1xi1> to vector<2x1xi1>
    %606 = vector.broadcast %605 : vector<2x1xi1> to vector<2x32xi1>
    %607 = arith.select %606, %602, %566 : vector<2x32xi1>, vector<2x32xf32>
    %608 = vector.shape_cast %604 : vector<2x1xi1> to vector<2x1xi1>
    %609 = vector.broadcast %608 : vector<2x1xi1> to vector<2x32xi1>
    %610 = arith.select %609, %600, %569 : vector<2x32xi1>, vector<2x32xf32>
    %cst_160 = arith.constant -1.000000e+00 : f32
    %611 = vector.shape_cast %604 : vector<2x1xi1> to vector<2x1xi1>
    %612 = vector.broadcast %611 : vector<2x1xi1> to vector<2x32xi1>
    %613 = vector.broadcast %cst_160 : f32 to vector<2x32xf32>
    %614 = arith.select %612, %607, %613 : vector<2x32xi1>, vector<2x32xf32>
    %c12_161 = arith.constant 12 : index
    %c0_162 = arith.constant 0 : index
    %615 = vector.load %arg14[%c12_161, %c0_162] : memref<16x32xf32, #tpu.memory_space<vmem>>, vector<2x32xf32>
    tpu.vector_store %arg14[%c12_161, %c0_162], %614 {strides = array<i32>} : memref<16x32xf32, #tpu.memory_space<vmem>>, vector<2x32xf32>,
    %c14_163 = arith.constant 14 : index
    %c0_164 = arith.constant 0 : index
    %616 = vector.load %arg13[%c14_163, %c0_164] : memref<16x128xf32, #tpu.memory_space<vmem>>, vector<2x128xf32>
    %cst_165 = arith.constant dense<0.000000e+00> : vector<2x128xf32>
    %617 = tpu.matmul %607, %324, %cst_165 {dimension_numbers = #tpu.dot_dimension_numbers<[1], [0], [0], [1], [0, 0, 1, 1], [], []>} : vector<2x32xf32>, vector<32x128xf32>, vector<2x128xf32> -> vector<2x128xf32>
    %618 = arith.addf %616, %617 : vector<2x128xf32>
    %619 = vector.extract_strided_slice %618 {offsets = [0, 0], sizes = [2, 32], strides = [1, 1]} : vector<2x128xf32> to vector<2x32xf32>
    %620 = arith.negf %619 : vector<2x32xf32>
    %621 = math.exp %620 : vector<2x32xf32>
    %cst_166 = arith.constant 1.000000e+00 : f32
    %622 = vector.broadcast %cst_166 : f32 to vector<2x32xf32>
    %623 = arith.addf %622, %621 : vector<2x32xf32>
    %624 = arith.divf %622, %623 : vector<2x32xf32>
    %625 = vector.extract_strided_slice %618 {offsets = [0, 32], sizes = [2, 32], strides = [1, 1]} : vector<2x128xf32> to vector<2x32xf32>
    %626 = arith.negf %625 : vector<2x32xf32>
    %627 = math.exp %626 : vector<2x32xf32>
    %cst_167 = arith.constant 1.000000e+00 : f32
    %628 = vector.broadcast %cst_167 : f32 to vector<2x32xf32>
    %629 = arith.addf %628, %627 : vector<2x32xf32>
    %630 = arith.divf %628, %629 : vector<2x32xf32>
    %631 = vector.extract_strided_slice %618 {offsets = [0, 64], sizes = [2, 32], strides = [1, 1]} : vector<2x128xf32> to vector<2x32xf32>
    %632 = math.tanh %631 : vector<2x32xf32>
    %633 = vector.extract_strided_slice %618 {offsets = [0, 96], sizes = [2, 32], strides = [1, 1]} : vector<2x128xf32> to vector<2x32xf32>
    %634 = arith.negf %633 : vector<2x32xf32>
    %635 = math.exp %634 : vector<2x32xf32>
    %cst_168 = arith.constant 1.000000e+00 : f32
    %636 = vector.broadcast %cst_168 : f32 to vector<2x32xf32>
    %637 = arith.addf %636, %635 : vector<2x32xf32>
    %638 = arith.divf %636, %637 : vector<2x32xf32>
    %639 = arith.mulf %630, %610 : vector<2x32xf32>
    %640 = arith.mulf %624, %632 : vector<2x32xf32>
    %641 = arith.addf %639, %640 : vector<2x32xf32>
    %642 = math.tanh %641 : vector<2x32xf32>
    %643 = arith.mulf %638, %642 : vector<2x32xf32>
    %c7_i32_169 = arith.constant 7 : i32
    %644 = vector.broadcast %c7_i32_169 : i32 to vector<2x1xi32>
    %645 = arith.cmpi sgt, %11, %644 : vector<2x1xi32>
    %646 = vector.shape_cast %645 : vector<2x1xi1> to vector<2x1xi1>
    %647 = vector.broadcast %646 : vector<2x1xi1> to vector<2x32xi1>
    %648 = arith.select %647, %643, %607 : vector<2x32xi1>, vector<2x32xf32>
    %cst_170 = arith.constant -1.000000e+00 : f32
    %649 = vector.shape_cast %645 : vector<2x1xi1> to vector<2x1xi1>
    %650 = vector.broadcast %649 : vector<2x1xi1> to vector<2x32xi1>
    %651 = vector.broadcast %cst_170 : f32 to vector<2x32xf32>
    %652 = arith.select %650, %648, %651 : vector<2x32xi1>, vector<2x32xf32>
    %c14_171 = arith.constant 14 : index
    %c0_172 = arith.constant 0 : index
    %653 = vector.load %arg14[%c14_171, %c0_172] : memref<16x32xf32, #tpu.memory_space<vmem>>, vector<2x32xf32>
    tpu.vector_store %arg14[%c14_171, %c0_172], %652 {strides = array<i32>} : memref<16x32xf32, #tpu.memory_space<vmem>>, vector<2x32xf32>,
    %c0_173 = arith.constant 0 : index
    %c0_174 = arith.constant 0 : index
    %654 = vector.load %arg14[%c0_173, %c0_174] : memref<16x32xf32, #tpu.memory_space<vmem>>, vector<16x32xf32>
    %c0_175 = arith.constant 0 : index
    %c0_176 = arith.constant 0 : index
    %655 = vector.load %arg10[%c0_175, %c0_176] : memref<32x10xf32, #tpu.memory_space<vmem>>, vector<32x10xf32>
    %cst_177 = arith.constant dense<0.000000e+00> : vector<16x10xf32>
    %656 = tpu.matmul %654, %655, %cst_177 {dimension_numbers = #tpu.dot_dimension_numbers<[1], [0], [0], [1], [0, 0, 1, 1], [], []>} : vector<16x32xf32>, vector<32x10xf32>, vector<16x10xf32> -> vector<16x10xf32>
    %c0_178 = arith.constant 0 : index
    %c0_179 = arith.constant 0 : index
    %657 = vector.load %arg11[%c0_178, %c0_179] : memref<1x10xf32, #tpu.memory_space<vmem>>, vector<1x10xf32>
    %658 = vector.broadcast %657 : vector<1x10xf32> to vector<16x10xf32>
    %659 = arith.addf %656, %658 : vector<16x10xf32>
    %660 = tpu.iota {dimensions = array<i32: 1>} : vector<16x10xi32>
    %c1_i32_180 = arith.constant 1 : i32
    %661 = vector.broadcast %c1_i32_180 : i32 to vector<16x10xi32>
    %662 = arith.andi %660, %661 : vector<16x10xi32>
    %c0_i32_181 = arith.constant 0 : i32
    %663 = vector.broadcast %c0_i32_181 : i32 to vector<16x10xi32>
    %664 = arith.cmpi eq, %662, %663 : vector<16x10xi32>
    %cst_182 = arith.constant -1.000000e+30 : f32
    %665 = vector.broadcast %cst_182 : f32 to vector<16x10xf32>
    %666 = arith.select %664, %659, %665 : vector<16x10xi1>, vector<16x10xf32>
    %cst_183 = arith.constant dense<0xFF800000> : vector<16xf32>
    %667 = vector.multi_reduction <maximumf>, %666, %cst_183 [1] : vector<16x10xf32> to vector<16xf32>
    %668 = vector.shape_cast %667 : vector<16xf32> to vector<16x1xf32>
    %cst_184 = arith.constant -1.000000e+30 : f32
    %669 = vector.broadcast %cst_184 : f32 to vector<16x10xf32>
    %670 = arith.select %664, %669, %659 : vector<16x10xi1>, vector<16x10xf32>
    %cst_185 = arith.constant dense<0xFF800000> : vector<16xf32>
    %671 = vector.multi_reduction <maximumf>, %670, %cst_185 [1] : vector<16x10xf32> to vector<16xf32>
    %672 = vector.shape_cast %671 : vector<16xf32> to vector<16x1xf32>
    %673 = vector.shape_cast %668 : vector<16x1xf32> to vector<16x1xf32>
    %674 = vector.broadcast %673 : vector<16x1xf32> to vector<16x10xf32>
    %675 = vector.shape_cast %672 : vector<16x1xf32> to vector<16x1xf32>
    %676 = vector.broadcast %675 : vector<16x1xf32> to vector<16x10xf32>
    %677 = arith.select %664, %674, %676 : vector<16x10xi1>, vector<16x10xf32>
    %678 = arith.subf %659, %677 : vector<16x10xf32>
    %679 = math.exp %678 : vector<16x10xf32>
    %cst_186 = arith.constant 0.000000e+00 : f32
    %680 = vector.broadcast %cst_186 : f32 to vector<16x10xf32>
    %681 = arith.select %664, %679, %680 : vector<16x10xi1>, vector<16x10xf32>
    %cst_187 = arith.constant dense<0.000000e+00> : vector<16xf32>
    %682 = vector.multi_reduction <add>, %681, %cst_187 [1] : vector<16x10xf32> to vector<16xf32>
    %683 = vector.shape_cast %682 : vector<16xf32> to vector<16x1xf32>
    %cst_188 = arith.constant 0.000000e+00 : f32
    %684 = vector.broadcast %cst_188 : f32 to vector<16x10xf32>
    %685 = arith.select %664, %684, %679 : vector<16x10xi1>, vector<16x10xf32>
    %cst_189 = arith.constant dense<0.000000e+00> : vector<16xf32>
    %686 = vector.multi_reduction <add>, %685, %cst_189 [1] : vector<16x10xf32> to vector<16xf32>
    %687 = vector.shape_cast %686 : vector<16xf32> to vector<16x1xf32>
    %688 = vector.shape_cast %683 : vector<16x1xf32> to vector<16x1xf32>
    %689 = vector.broadcast %688 : vector<16x1xf32> to vector<16x10xf32>
    %690 = vector.shape_cast %687 : vector<16x1xf32> to vector<16x1xf32>
    %691 = vector.broadcast %690 : vector<16x1xf32> to vector<16x10xf32>
    %692 = arith.select %664, %689, %691 : vector<16x10xi1>, vector<16x10xf32>
    %693 = arith.divf %679, %692 : vector<16x10xf32>
    %c0_190 = arith.constant 0 : index
    %c0_191 = arith.constant 0 : index
    %694 = vector.load %arg12[%c0_190, %c0_191] : memref<16x10xf32, #tpu.memory_space<vmem>>, vector<16x10xf32>
    tpu.vector_store %arg12[%c0_190, %c0_191], %693 {strides = array<i32>} : memref<16x10xf32, #tpu.memory_space<vmem>>, vector<16x10xf32>,
    return
  }
}

</mosaic_0001>

<llo_original>
// kernel: lstm_forward_pallas.1
$region0: #{lstm_forward_pallas.1}
  #allocation0 [shape = 'u32[]', space=smem, size = 0x4, offset = 0x4, fixed_abs, tag = 'smem constant byte address 0x4 - core index']
  #allocation1 [shape = 'u32[144,128]{1,0:T(1,128)}', space=vmem, size = 0x12000, scoped, tag = 'internal scratch']
  #allocation2 [shape = 'f32[16,128]{1,0:T(8,128)}', space=vmem, size = 0x2000, scoped, tag = 'scratch operand']
  #allocation3 [shape = 'f32[16,32]{1,0:T(8,128)}', space=vmem, size = 0x2000, scoped, tag = 'scratch operand']
  %s0 = inlined_call_operand.vmem [shape: s32[2], index: 0, kind: input, shape index: {}]
  %s1 = inlined_call_operand.vmem [shape: f32[16,32], index: 1, kind: input, shape index: {}]
  %s2 = inlined_call_operand.vmem [shape: f32[32,128], index: 2, kind: input, shape index: {}]
  %s3 = inlined_call_operand.vmem [shape: f32[32,128], index: 3, kind: input, shape index: {}]
  %s4 = inlined_call_operand.vmem [shape: f32[1,128], index: 4, kind: input, shape index: {}]
  %s5 = inlined_call_operand.vmem [shape: f32[32,128], index: 5, kind: input, shape index: {}]
  %s6 = inlined_call_operand.vmem [shape: f32[32,128], index: 6, kind: input, shape index: {}]
  %s7 = inlined_call_operand.vmem [shape: f32[1,128], index: 7, kind: input, shape index: {}]
  %s8 = inlined_call_operand.vmem [shape: f32[2,2,32], index: 8, kind: input, shape index: {}]
  %s9 = inlined_call_operand.vmem [shape: f32[2,2,32], index: 9, kind: input, shape index: {}]
  %s10 = inlined_call_operand.vmem [shape: f32[32,10], index: 10, kind: input, shape index: {}]
  %s11 = inlined_call_operand.vmem [shape: f32[1,10], index: 11, kind: input, shape index: {}]
  %s12 = inlined_call_operand.vmem [shape: f32[16,10], index: 12, kind: output, shape index: {}]
  %s13 = sld [smem:[#allocation0]]
  $region62: #{lstm_forward_pallas.1} parent=0
    _
  %s15 = ssub.s32 1, %s13
  %s16 = scalar_select 0, %s15, %s13
  $region1: #{lstm_forward_pallas.1} parent=0
    #allocation4 [shape = 'u8[512]{0}', space=smem, size = 0x200, scoped, tag = 'input window, operand 0, single buffered']
    #allocation5 [shape = 's32[1]{0}', space=sflag, size = 0x4, scoped, tag = 'scoped memory for lstm_forward_pallas.1']
    %17 = vsyncpa [#allocation5], 0
    // Predicated region
    $region2: #{lstm_forward_pallas.1} parent=1 // pred_check
      _
    $region3: #{lstm_forward_pallas.1} parent=1 // pred_check_branch
      %19 = sbr.rel (0) target = $region5
    $region4: #{lstm_forward_pallas.1} parent=1 // pred_region
      %s21 = ssub.s32 16, 16
      %22 = vsyncadd [#allocation5], %s21
      %s24 = sshll.u32 %s0, 4
      %s25 = int_to_ptr.vmem [resolvable:$true] %s24
      %27 = dma.vmem_to_smem %s25, 16, [#allocation4], [#allocation5]
    $region5: #{lstm_forward_pallas.1} parent=1 // pred_fallthru
      _
    // Predicated region
    $region6: #{lstm_forward_pallas.1} parent=1 // pred_check
      _
    $region7: #{lstm_forward_pallas.1} parent=1 // pred_check_branch
      %29 = sbr.rel (0) target = $region9
    $region8: #{lstm_forward_pallas.1} parent=1 // pred_region
      _
    $region9: #{lstm_forward_pallas.1} parent=1 // pred_fallthru
      _
    // Predicated region
    $region10: #{lstm_forward_pallas.1} parent=1 // pred_check
      _
    $region11: #{lstm_forward_pallas.1} parent=1 // pred_check_branch
      %31 = sbr.rel (0) target = $region13
    $region12: #{lstm_forward_pallas.1} parent=1 // pred_region
      _
    $region13: #{lstm_forward_pallas.1} parent=1 // pred_fallthru
      _
    // Predicated region
    $region14: #{lstm_forward_pallas.1} parent=1 // pred_check
      _
    $region15: #{lstm_forward_pallas.1} parent=1 // pred_check_branch
      %33 = sbr.rel (0) target = $region17
    $region16: #{lstm_forward_pallas.1} parent=1 // pred_region
      _
    $region17: #{lstm_forward_pallas.1} parent=1 // pred_fallthru
      _
    // Predicated region
    $region18: #{lstm_forward_pallas.1} parent=1 // pred_check
      _
    $region19: #{lstm_forward_pallas.1} parent=1 // pred_check_branch
      %35 = sbr.rel (0) target = $region21
    $region20: #{lstm_forward_pallas.1} parent=1 // pred_region
      _
    $region21: #{lstm_forward_pallas.1} parent=1 // pred_fallthru
      _
    // Predicated region
    $region22: #{lstm_forward_pallas.1} parent=1 // pred_check
      _
    $region23: #{lstm_forward_pallas.1} parent=1 // pred_check_branch
      %37 = sbr.rel (0) target = $region25
    $region24: #{lstm_forward_pallas.1} parent=1 // pred_region
      _
    $region25: #{lstm_forward_pallas.1} parent=1 // pred_fallthru
      _
    // Predicated region
    $region26: #{lstm_forward_pallas.1} parent=1 // pred_check
      _
    $region27: #{lstm_forward_pallas.1} parent=1 // pred_check_branch
      %39 = sbr.rel (0) target = $region29
    $region28: #{lstm_forward_pallas.1} parent=1 // pred_region
      _
    $region29: #{lstm_forward_pallas.1} parent=1 // pred_fallthru
      _
    // Predicated region
    $region30: #{lstm_forward_pallas.1} parent=1 // pred_check
      _
    $region31: #{lstm_forward_pallas.1} parent=1 // pred_check_branch
      %41 = sbr.rel (0) target = $region33
    $region32: #{lstm_forward_pallas.1} parent=1 // pred_region
      _
    $region33: #{lstm_forward_pallas.1} parent=1 // pred_fallthru
      _
    // Predicated region
    $region34: #{lstm_forward_pallas.1} parent=1 // pred_check
      _
    $region35: #{lstm_forward_pallas.1} parent=1 // pred_check_branch
      %43 = sbr.rel (0) target = $region37
    $region36: #{lstm_forward_pallas.1} parent=1 // pred_region
      _
    $region37: #{lstm_forward_pallas.1} parent=1 // pred_fallthru
      _
    // Predicated region
    $region38: #{lstm_forward_pallas.1} parent=1 // pred_check
      _
    $region39: #{lstm_forward_pallas.1} parent=1 // pred_check_branch
      %45 = sbr.rel (0) target = $region41
    $region40: #{lstm_forward_pallas.1} parent=1 // pred_region
      _
    $region41: #{lstm_forward_pallas.1} parent=1 // pred_fallthru
      _
    // Predicated region
    $region42: #{lstm_forward_pallas.1} parent=1 // pred_check
      _
    $region43: #{lstm_forward_pallas.1} parent=1 // pred_check_branch
      %47 = sbr.rel (0) target = $region45
    $region44: #{lstm_forward_pallas.1} parent=1 // pred_region
      _
    $region45: #{lstm_forward_pallas.1} parent=1 // pred_fallthru
      _
    // Predicated region
    $region46: #{lstm_forward_pallas.1} parent=1 // pred_check
      _
    $region47: #{lstm_forward_pallas.1} parent=1 // pred_check_branch
      %49 = sbr.rel (0) target = $region49
    $region48: #{lstm_forward_pallas.1} parent=1 // pred_region
      _
    $region49: #{lstm_forward_pallas.1} parent=1 // pred_fallthru
      _
    // Predicated region
    $region50: #{lstm_forward_pallas.1} parent=1 // pred_check
      _
    $region51: #{lstm_forward_pallas.1} parent=1 // pred_check_branch
      %51 = sbr.rel (0) target = $region53
    $region52: #{lstm_forward_pallas.1} parent=1 // pred_region
      %52 = dma.done [#allocation5], 16
    $region53: #{lstm_forward_pallas.1} parent=1 // pred_fallthru
      _
    %53 = sfence
    %v54 = vlaneseq
    %v55 = vshrl.u32 %v54, 7
    %vm56 = vcmp.eq.s32.totalorder %v55, 0
    %s57 = sld [smem:[#allocation4]]
    %v58 = vstv %s57
    %v59 = vsel %vm56, %v58, 0
    %vm60 = vcmp.eq.s32.totalorder %v55, 1
    %s61 = sld [smem:[#allocation4 + $0x1]]
    %v62 = vstv %s61
    %v63 = vsel %vm60, %v62, %v59
    %v64 = vld [vmem:[%s1] sm:$0xff]
    %v65 = vld [vmem:[%s1 + $0x8] sm:$0xff]
    %v66 = vld [vmem:[%s2] sm:$0xff]
    %v67 = vld [vmem:[%s2 + $0x8] sm:$0xff]
    %v68 = vld [vmem:[%s2 + $0x10] sm:$0xff]
    %v69 = vld [vmem:[%s2 + $0x18] sm:$0xff]
    %v70 = vld [vmem:[%s4] sm:$0x1]
    %v72 = vlaneseq
    %v73 = vshrl.u32 %v72, 7
    %v74 = vsub.s32 0, %v73
    %v75 = vrot.slane %v70, %v74
    %vm77 = vcmask 261120
    %v79 = vsel %vm77, %v64, 0
    %v82 = vsel %vm77, %v65, 0
    %84 = vmatprep.subr.mxu0 0.0
    %85 = vmatpush1.msra.mxu0 %v66
    %86 = vmatprep.subr.mxu0 0.0
    %87 = vmatpush1.msra.mxu0 %v67
    %88 = vmatprep.subr.mxu0 0.0
    %89 = vmatpush1.msra.mxu0 %v68
    %90 = vmatprep.subr.mxu0 0.0
    %91 = vmatpush1.msra.mxu0 %v69
    %92 = vmatprep.subr.mxu0 0.0
    %93 = vmatpush1.msra.mxu0 0.0
    %94 = vmatprep.subr.mxu0 0.0
    %95 = vmatpush1.msra.mxu0 0.0
    %96 = vmatprep.subr.mxu0 0.0
    %97 = vmatpush1.msra.mxu0 0.0
    %98 = vmatprep.subr.mxu0 0.0
    %99 = vmatpush1.msra.mxu0 0.0
    %100 = vmatprep.subr.mxu0 0.0
    %101 = vmatpush1.msra.mxu0 0.0
    %102 = vmatprep.subr.mxu0 0.0
    %103 = vmatpush1.msra.mxu0 0.0
    %104 = vmatprep.subr.mxu0 0.0
    %105 = vmatpush1.msra.mxu0 0.0
    %106 = vmatprep.subr.mxu0 0.0
    %107 = vmatpush1.msra.mxu0 0.0
    %108 = vmatprep.subr.mxu0 0.0
    %109 = vmatpush1.msra.mxu0 0.0
    %110 = vmatprep.subr.mxu0 0.0
    %111 = vmatpush1.msra.mxu0 0.0
    %112 = vmatprep.subr.mxu0 0.0
    %113 = vmatpush1.msra.mxu0 0.0
    %114 = vmatprep.subr.mxu0 0.0
    %115 = vmatpush1.msra.mxu0 0.0
    %116 = vmatprep.subr.mxu0 0.0
    %117 = vmatpush1.msra.mxu0 0.0
    %118 = vmatprep.subr.mxu0 0.0
    %119 = vmatpush1.msra.mxu0 0.0
    %120 = vmatprep.subr.mxu0 0.0
    %121 = vmatpush1.msra.mxu0 0.0
    %122 = vmatprep.subr.mxu0 0.0
    %123 = vmatpush1.msra.mxu0 0.0
    %124 = vmatprep.subr.mxu0 0.0
    %125 = vmatpush1.msra.mxu0 0.0
    %126 = vmatprep.subr.mxu0 0.0
    %127 = vmatpush1.msra.mxu0 0.0
    %128 = vmatprep.subr.mxu0 0.0
    %129 = vmatpush1.msra.mxu0 0.0
    %130 = vmatprep.subr.mxu0 0.0
    %131 = vmatpush1.msra.mxu0 0.0
    %132 = vmatprep.subr.mxu0 0.0
    %133 = vmatpush1.msra.mxu0 0.0
    %134 = vmatprep.subr.mxu0 0.0
    %135 = vmatpush1.msra.mxu0 0.0
    %136 = vmatprep.subr.mxu0 0.0
    %137 = vmatpush1.msra.mxu0 0.0
    %138 = vmatprep.subr.mxu0 0.0
    %139 = vmatpush1.msra.mxu0 0.0
    %140 = vmatprep.subr.mxu0 0.0
    %141 = vmatpush1.msra.mxu0 0.0
    %142 = vmatprep.subr.mxu0 0.0
    %143 = vmatpush1.msra.mxu0 0.0
    %144 = vmatprep.subr.mxu0 0.0
    %145 = vmatpush1.msra.mxu0 0.0
    %146 = vmatprep.subr.mxu0 0.0
    %147 = vmatpush1.msra.mxu0 0.0
    %148 = vmatprep.mubr.f32.mxu0 0.0
    %149 = vmatmul.mubr.f32.gmra.mrb[0].mxu0 %v79
    %v150 = vpop.f32.mrb[0].mxu0
    %v151 = vadd.f32 %v75, %v150
    %v152 = vpop.f32.mrb[0].mxu0
    %153 = vmatprep.mubr.f32.mxu0 0.0
    %154 = vmatmul.mubr.f32.gmra.mrb[0].mxu0 %v82
    %v155 = vpop.f32.mrb[0].mxu0
    %v156 = vadd.f32 %v75, %v155
    %v157 = vpop.f32.mrb[0].mxu0
    %158 = vdwg.mxu0
    %159 = vst [vmem:[#allocation2] sm:$0xff] %v151
    %160 = vst [vmem:[#allocation2 + $0x8] sm:$0xff] %v156
    %v161 = vld [vmem:[%s3] sm:$0xff]
    %v162 = vld [vmem:[%s3 + $0x8] sm:$0xff]
    %v163 = vld [vmem:[%s3 + $0x10] sm:$0xff]
    %v164 = vld [vmem:[%s3 + $0x18] sm:$0xff]
    %v165 = vld [vmem:[%s8] sm:$0x3]
    %v166 = vld [vmem:[%s9] sm:$0x3]
    %v167 = vld [vmem:[#allocation2] sm:$0x3]
    %v169 = vsel %vm77, %v165, 0
    %171 = vmatprep.subr.mxu0 0.0
    %172 = vmatpush1.msra.mxu0 %v161
    %173 = vmatprep.subr.mxu0 0.0
    %174 = vmatpush1.msra.mxu0 %v162
    %175 = vmatprep.subr.mxu0 0.0
    %176 = vmatpush1.msra.mxu0 %v163
    %177 = vmatprep.subr.mxu0 0.0
    %178 = vmatpush1.msra.mxu0 %v164
    %179 = vmatprep.subr.mxu0 0.0
    %180 = vmatpush1.msra.mxu0 0.0
    %181 = vmatprep.subr.mxu0 0.0
    %182 = vmatpush1.msra.mxu0 0.0
    %183 = vmatprep.subr.mxu0 0.0
    %184 = vmatpush1.msra.mxu0 0.0
    %185 = vmatprep.subr.mxu0 0.0
    %186 = vmatpush1.msra.mxu0 0.0
    %187 = vmatprep.subr.mxu0 0.0
    %188 = vmatpush1.msra.mxu0 0.0
    %189 = vmatprep.subr.mxu0 0.0
    %190 = vmatpush1.msra.mxu0 0.0
    %191 = vmatprep.subr.mxu0 0.0
    %192 = vmatpush1.msra.mxu0 0.0
    %193 = vmatprep.subr.mxu0 0.0
    %194 = vmatpush1.msra.mxu0 0.0
    %195 = vmatprep.subr.mxu0 0.0
    %196 = vmatpush1.msra.mxu0 0.0
    %197 = vmatprep.subr.mxu0 0.0
    %198 = vmatpush1.msra.mxu0 0.0
    %199 = vmatprep.subr.mxu0 0.0
    %200 = vmatpush1.msra.mxu0 0.0
    %201 = vmatprep.subr.mxu0 0.0
    %202 = vmatpush1.msra.mxu0 0.0
    %203 = vmatprep.subr.mxu0 0.0
    %204 = vmatpush1.msra.mxu0 0.0
    %205 = vmatprep.subr.mxu0 0.0
    %206 = vmatpush1.msra.mxu0 0.0
    %207 = vmatprep.subr.mxu0 0.0
    %208 = vmatpush1.msra.mxu0 0.0
    %209 = vmatprep.subr.mxu0 0.0
    %210 = vmatpush1.msra.mxu0 0.0
    %211 = vmatprep.subr.mxu0 0.0
    %212 = vmatpush1.msra.mxu0 0.0
    %213 = vmatprep.subr.mxu0 0.0
    %214 = vmatpush1.msra.mxu0 0.0
    %215 = vmatprep.subr.mxu0 0.0
    %216 = vmatpush1.msra.mxu0 0.0
    %217 = vmatprep.subr.mxu0 0.0
    %218 = vmatpush1.msra.mxu0 0.0
    %219 = vmatprep.subr.mxu0 0.0
    %220 = vmatpush1.msra.mxu0 0.0
    %221 = vmatprep.subr.mxu0 0.0
    %222 = vmatpush1.msra.mxu0 0.0
    %223 = vmatprep.subr.mxu0 0.0
    %224 = vmatpush1.msra.mxu0 0.0
    %225 = vmatprep.subr.mxu0 0.0
    %226 = vmatpush1.msra.mxu0 0.0
    %227 = vmatprep.subr.mxu0 0.0
    %228 = vmatpush1.msra.mxu0 0.0
    %229 = vmatprep.subr.mxu0 0.0
    %230 = vmatpush1.msra.mxu0 0.0
    %231 = vmatprep.subr.mxu0 0.0
    %232 = vmatpush1.msra.mxu0 0.0
    %233 = vmatprep.subr.mxu0 0.0
    %234 = vmatpush1.msra.mxu0 0.0
    %235 = vmatprep.mubr.f32.mxu0 0.0
    %236 = vmatmul.mubr.f32.gmra.mrb[0].mxu0 %v169
    %v237 = vpop.f32.mrb[0].mxu0
    %v238 = vadd.f32 0.0, %v237
    %v239 = vpop.f32.mrb[0].mxu0
    %240 = vdwg.mxu0
    %v241 = vadd.f32 %v167, %v238
    %v242 = vxor.u32 %v241, 2147483648
    %v243 = vmul.f32 %v242, 1.442695
    %v244 = vpow.pop %v243
    %v245 = vadd.f32 %v244, 1.0
    %v246 = vrcp.pop %v245
    %v247 = vmul.f32 1.0, %v246
    %v248 = vtanh.pop %v241
    %250 = vrot.lane.b32.xlu0 %v166, 32
    %v251 = vpop.permute.xlu0 %250
    %v253 = vmul.f32 %v247, %v251
    %255 = vrot.lane.b32.xlu0 %v248, 64
    %v256 = vpop.permute.xlu0 %255
    %v258 = vmul.f32 %v247, %v256
    %260 = vrot.lane.b32.xlu0 %v258, 32
    %v261 = vpop.permute.xlu0 %260
    %v263 = vadd.f32 %v253, %v261
    %v264 = vtanh.pop %v263
    %266 = vrot.lane.b32.xlu0 %v264, 64
    %v267 = vpop.permute.xlu0 %266
    %v269 = vmul.f32 %v247, %v267
    %vm270 = vcmp.gt.s32.totalorder %v63, 0
    %v271 = vsel %vm270, 1, 0
    %vm272 = vcmp.eq.s32.totalorder %v271, 1
    %273 = vrot.lane.b32.xlu0 %v165, 96
    %v274 = vpop.permute.xlu0 %273
    %v276 = vsel %vm272, %v269, %v274
    %v277 = vsel %vm272, %v263, %v251
    %279 = vrot.lane.b32.xlu0 %v276, 32
    %v280 = vpop.permute.xlu0 %279
    %vm282 = vcmask 254976
    %283 = vst.msk [vmem:[#allocation3] sm:$0x3] %vm282, %v280
    %v284 = vld [vmem:[#allocation2 + $0x2] sm:$0x3]
    %v285 = vsel %vm77, %v280, 0
    %287 = vmatprep.subr.mxu0 0.0
    %288 = vmatpush1.msra.mxu0 %v161
    %289 = vmatprep.subr.mxu0 0.0
    %290 = vmatpush1.msra.mxu0 %v162
    %291 = vmatprep.subr.mxu0 0.0
    %292 = vmatpush1.msra.mxu0 %v163
    %293 = vmatprep.subr.mxu0 0.0
    %294 = vmatpush1.msra.mxu0 %v164
    %295 = vmatprep.subr.mxu0 0.0
    %296 = vmatpush1.msra.mxu0 0.0
    %297 = vmatprep.subr.mxu0 0.0
    %298 = vmatpush1.msra.mxu0 0.0
    %299 = vmatprep.subr.mxu0 0.0
    %300 = vmatpush1.msra.mxu0 0.0
    %301 = vmatprep.subr.mxu0 0.0
    %302 = vmatpush1.msra.mxu0 0.0
    %303 = vmatprep.subr.mxu0 0.0
    %304 = vmatpush1.msra.mxu0 0.0
    %305 = vmatprep.subr.mxu0 0.0
    %306 = vmatpush1.msra.mxu0 0.0
    %307 = vmatprep.subr.mxu0 0.0
    %308 = vmatpush1.msra.mxu0 0.0
    %309 = vmatprep.subr.mxu0 0.0
    %310 = vmatpush1.msra.mxu0 0.0
    %311 = vmatprep.subr.mxu0 0.0
    %312 = vmatpush1.msra.mxu0 0.0
    %313 = vmatprep.subr.mxu0 0.0
    %314 = vmatpush1.msra.mxu0 0.0
    %315 = vmatprep.subr.mxu0 0.0
    %316 = vmatpush1.msra.mxu0 0.0
    %317 = vmatprep.subr.mxu0 0.0
    %318 = vmatpush1.msra.mxu0 0.0
    %319 = vmatprep.subr.mxu0 0.0
    %320 = vmatpush1.msra.mxu0 0.0
    %321 = vmatprep.subr.mxu0 0.0
    %322 = vmatpush1.msra.mxu0 0.0
    %323 = vmatprep.subr.mxu0 0.0
    %324 = vmatpush1.msra.mxu0 0.0
    %325 = vmatprep.subr.mxu0 0.0
    %326 = vmatpush1.msra.mxu0 0.0
    %327 = vmatprep.subr.mxu0 0.0
    %328 = vmatpush1.msra.mxu0 0.0
    %329 = vmatprep.subr.mxu0 0.0
    %330 = vmatpush1.msra.mxu0 0.0
    %331 = vmatprep.subr.mxu0 0.0
    %332 = vmatpush1.msra.mxu0 0.0
    %333 = vmatprep.subr.mxu0 0.0
    %334 = vmatpush1.msra.mxu0 0.0
    %335 = vmatprep.subr.mxu0 0.0
    %336 = vmatpush1.msra.mxu0 0.0
    %337 = vmatprep.subr.mxu0 0.0
    %338 = vmatpush1.msra.mxu0 0.0
    %339 = vmatprep.subr.mxu0 0.0
    %340 = vmatpush1.msra.mxu0 0.0
    %341 = vmatprep.subr.mxu0 0.0
    %342 = vmatpush1.msra.mxu0 0.0
    %343 = vmatprep.subr.mxu0 0.0
    %344 = vmatpush1.msra.mxu0 0.0
    %345 = vmatprep.subr.mxu0 0.0
    %346 = vmatpush1.msra.mxu0 0.0
    %347 = vmatprep.subr.mxu0 0.0
    %348 = vmatpush1.msra.mxu0 0.0
    %349 = vmatprep.subr.mxu0 0.0
    %350 = vmatpush1.msra.mxu0 0.0
    %351 = vmatprep.mubr.f32.mxu0 0.0
    %352 = vmatmul.mubr.f32.gmra.mrb[0].mxu0 %v285
    %v353 = vpop.f32.mrb[0].mxu0
    %v354 = vadd.f32 0.0, %v353
    %v355 = vpop.f32.mrb[0].mxu0
    %356 = vdwg.mxu0
    %v357 = vadd.f32 %v284, %v354
    %v358 = vxor.u32 %v357, 2147483648
    %v359 = vmul.f32 %v358, 1.442695
    %v360 = vpow.pop %v359
    %v361 = vadd.f32 %v360, 1.0
    %v362 = vrcp.pop %v361
    %v363 = vmul.f32 1.0, %v362
    %v364 = vtanh.pop %v357
    %v365 = vmul.f32 %v363, %v277
    %367 = vrot.lane.b32.xlu0 %v364, 64
    %v368 = vpop.permute.xlu0 %367
    %v370 = vmul.f32 %v363, %v368
    %372 = vrot.lane.b32.xlu0 %v370, 32
    %v373 = vpop.permute.xlu0 %372
    %v375 = vadd.f32 %v365, %v373
    %v376 = vtanh.pop %v375
    %378 = vrot.lane.b32.xlu0 %v376, 64
    %v379 = vpop.permute.xlu0 %378
    %v381 = vmul.f32 %v363, %v379
    %vm382 = vcmp.gt.s32.totalorder %v63, 1
    %v383 = vsel %vm382, 1, 0
    %vm384 = vcmp.eq.s32.totalorder %v383, 1
    %v385 = vsel %vm384, %v381, %v276
    %v386 = vsel %vm384, %v375, %v277
    %388 = vrot.lane.b32.xlu0 %v385, 32
    %v389 = vpop.permute.xlu0 %388
    %391 = vst.msk [vmem:[#allocation3 + $0x2] sm:$0x3] %vm282, %v389
    %v392 = vld [vmem:[#allocation2 + $0x4] sm:$0x3]
    %v393 = vsel %vm77, %v389, 0
    %395 = vmatprep.subr.mxu0 0.0
    %396 = vmatpush1.msra.mxu0 %v161
    %397 = vmatprep.subr.mxu0 0.0
    %398 = vmatpush1.msra.mxu0 %v162
    %399 = vmatprep.subr.mxu0 0.0
    %400 = vmatpush1.msra.mxu0 %v163
    %401 = vmatprep.subr.mxu0 0.0
    %402 = vmatpush1.msra.mxu0 %v164
    %403 = vmatprep.subr.mxu0 0.0
    %404 = vmatpush1.msra.mxu0 0.0
    %405 = vmatprep.subr.mxu0 0.0
    %406 = vmatpush1.msra.mxu0 0.0
    %407 = vmatprep.subr.mxu0 0.0
    %408 = vmatpush1.msra.mxu0 0.0
    %409 = vmatprep.subr.mxu0 0.0
    %410 = vmatpush1.msra.mxu0 0.0
    %411 = vmatprep.subr.mxu0 0.0
    %412 = vmatpush1.msra.mxu0 0.0
    %413 = vmatprep.subr.mxu0 0.0
    %414 = vmatpush1.msra.mxu0 0.0
    %415 = vmatprep.subr.mxu0 0.0
    %416 = vmatpush1.msra.mxu0 0.0
    %417 = vmatprep.subr.mxu0 0.0
    %418 = vmatpush1.msra.mxu0 0.0
    %419 = vmatprep.subr.mxu0 0.0
    %420 = vmatpush1.msra.mxu0 0.0
    %421 = vmatprep.subr.mxu0 0.0
    %422 = vmatpush1.msra.mxu0 0.0
    %423 = vmatprep.subr.mxu0 0.0
    %424 = vmatpush1.msra.mxu0 0.0
    %425 = vmatprep.subr.mxu0 0.0
    %426 = vmatpush1.msra.mxu0 0.0
    %427 = vmatprep.subr.mxu0 0.0
    %428 = vmatpush1.msra.mxu0 0.0
    %429 = vmatprep.subr.mxu0 0.0
    %430 = vmatpush1.msra.mxu0 0.0
    %431 = vmatprep.subr.mxu0 0.0
    %432 = vmatpush1.msra.mxu0 0.0
    %433 = vmatprep.subr.mxu0 0.0
    %434 = vmatpush1.msra.mxu0 0.0
    %435 = vmatprep.subr.mxu0 0.0
    %436 = vmatpush1.msra.mxu0 0.0
    %437 = vmatprep.subr.mxu0 0.0
    %438 = vmatpush1.msra.mxu0 0.0
    %439 = vmatprep.subr.mxu0 0.0
    %440 = vmatpush1.msra.mxu0 0.0
    %441 = vmatprep.subr.mxu0 0.0
    %442 = vmatpush1.msra.mxu0 0.0
    %443 = vmatprep.subr.mxu0 0.0
    %444 = vmatpush1.msra.mxu0 0.0
    %445 = vmatprep.subr.mxu0 0.0
    %446 = vmatpush1.msra.mxu0 0.0
    %447 = vmatprep.subr.mxu0 0.0
    %448 = vmatpush1.msra.mxu0 0.0
    %449 = vmatprep.subr.mxu0 0.0
    %450 = vmatpush1.msra.mxu0 0.0
    %451 = vmatprep.subr.mxu0 0.0
    %452 = vmatpush1.msra.mxu0 0.0
    %453 = vmatprep.subr.mxu0 0.0
    %454 = vmatpush1.msra.mxu0 0.0
    %455 = vmatprep.subr.mxu0 0.0
    %456 = vmatpush1.msra.mxu0 0.0
    %457 = vmatprep.subr.mxu0 0.0
    %458 = vmatpush1.msra.mxu0 0.0
    %459 = vmatprep.mubr.f32.mxu0 0.0
    %460 = vmatmul.mubr.f32.gmra.mrb[0].mxu0 %v393
    %v461 = vpop.f32.mrb[0].mxu0
    %v462 = vadd.f32 0.0, %v461
    %v463 = vpop.f32.mrb[0].mxu0
    %464 = vdwg.mxu0
    %v465 = vadd.f32 %v392, %v462
    %v466 = vxor.u32 %v465, 2147483648
    %v467 = vmul.f32 %v466, 1.442695
    %v468 = vpow.pop %v467
    %v469 = vadd.f32 %v468, 1.0
    %v470 = vrcp.pop %v469
    %v471 = vmul.f32 1.0, %v470
    %v472 = vtanh.pop %v465
    %v473 = vmul.f32 %v471, %v386
    %475 = vrot.lane.b32.xlu0 %v472, 64
    %v476 = vpop.permute.xlu0 %475
    %v478 = vmul.f32 %v471, %v476
    %480 = vrot.lane.b32.xlu0 %v478, 32
    %v481 = vpop.permute.xlu0 %480
    %v483 = vadd.f32 %v473, %v481
    %v484 = vtanh.pop %v483
    %486 = vrot.lane.b32.xlu0 %v484, 64
    %v487 = vpop.permute.xlu0 %486
    %v489 = vmul.f32 %v471, %v487
    %vm490 = vcmp.gt.s32.totalorder %v63, 2
    %v491 = vsel %vm490, 1, 0
    %vm492 = vcmp.eq.s32.totalorder %v491, 1
    %v493 = vsel %vm492, %v489, %v385
    %v494 = vsel %vm492, %v483, %v386
    %496 = vrot.lane.b32.xlu0 %v493, 32
    %v497 = vpop.permute.xlu0 %496
    %499 = vst.msk [vmem:[#allocation3 + $0x4] sm:$0x3] %vm282, %v497
    %v500 = vld [vmem:[#allocation2 + $0x6] sm:$0x3]
    %v501 = vsel %vm77, %v497, 0
    %503 = vmatprep.subr.mxu0 0.0
    %504 = vmatpush1.msra.mxu0 %v161
    %505 = vmatprep.subr.mxu0 0.0
    %506 = vmatpush1.msra.mxu0 %v162
    %507 = vmatprep.subr.mxu0 0.0
    %508 = vmatpush1.msra.mxu0 %v163
    %509 = vmatprep.subr.mxu0 0.0
    %510 = vmatpush1.msra.mxu0 %v164
    %511 = vmatprep.subr.mxu0 0.0
    %512 = vmatpush1.msra.mxu0 0.0
    %513 = vmatprep.subr.mxu0 0.0
    %514 = vmatpush1.msra.mxu0 0.0
    %515 = vmatprep.subr.mxu0 0.0
    %516 = vmatpush1.msra.mxu0 0.0
    %517 = vmatprep.subr.mxu0 0.0
    %518 = vmatpush1.msra.mxu0 0.0
    %519 = vmatprep.subr.mxu0 0.0
    %520 = vmatpush1.msra.mxu0 0.0
    %521 = vmatprep.subr.mxu0 0.0
    %522 = vmatpush1.msra.mxu0 0.0
    %523 = vmatprep.subr.mxu0 0.0
    %524 = vmatpush1.msra.mxu0 0.0
    %525 = vmatprep.subr.mxu0 0.0
    %526 = vmatpush1.msra.mxu0 0.0
    %527 = vmatprep.subr.mxu0 0.0
    %528 = vmatpush1.msra.mxu0 0.0
    %529 = vmatprep.subr.mxu0 0.0
    %530 = vmatpush1.msra.mxu0 0.0
    %531 = vmatprep.subr.mxu0 0.0
    %532 = vmatpush1.msra.mxu0 0.0
    %533 = vmatprep.subr.mxu0 0.0
    %534 = vmatpush1.msra.mxu0 0.0
    %535 = vmatprep.subr.mxu0 0.0
    %536 = vmatpush1.msra.mxu0 0.0
    %537 = vmatprep.subr.mxu0 0.0
    %538 = vmatpush1.msra.mxu0 0.0
    %539 = vmatprep.subr.mxu0 0.0
    %540 = vmatpush1.msra.mxu0 0.0
    %541 = vmatprep.subr.mxu0 0.0
    %542 = vmatpush1.msra.mxu0 0.0
    %543 = vmatprep.subr.mxu0 0.0
    %544 = vmatpush1.msra.mxu0 0.0
    %545 = vmatprep.subr.mxu0 0.0
    %546 = vmatpush1.msra.mxu0 0.0
    %547 = vmatprep.subr.mxu0 0.0
    %548 = vmatpush1.msra.mxu0 0.0
    %549 = vmatprep.subr.mxu0 0.0
    %550 = vmatpush1.msra.mxu0 0.0
    %551 = vmatprep.subr.mxu0 0.0
    %552 = vmatpush1.msra.mxu0 0.0
    %553 = vmatprep.subr.mxu0 0.0
    %554 = vmatpush1.msra.mxu0 0.0
    %555 = vmatprep.subr.mxu0 0.0
    %556 = vmatpush1.msra.mxu0 0.0
    %557 = vmatprep.subr.mxu0 0.0
    %558 = vmatpush1.msra.mxu0 0.0
    %559 = vmatprep.subr.mxu0 0.0
    %560 = vmatpush1.msra.mxu0 0.0
    %561 = vmatprep.subr.mxu0 0.0
    %562 = vmatpush1.msra.mxu0 0.0
    %563 = vmatprep.subr.mxu0 0.0
    %564 = vmatpush1.msra.mxu0 0.0
    %565 = vmatprep.subr.mxu0 0.0
    %566 = vmatpush1.msra.mxu0 0.0
    %567 = vmatprep.mubr.f32.mxu0 0.0
    %568 = vmatmul.mubr.f32.gmra.mrb[0].mxu0 %v501
    %v569 = vpop.f32.mrb[0].mxu0
    %v570 = vadd.f32 0.0, %v569
    %v571 = vpop.f32.mrb[0].mxu0
    %572 = vdwg.mxu0
    %v573 = vadd.f32 %v500, %v570
    %v574 = vxor.u32 %v573, 2147483648
    %v575 = vmul.f32 %v574, 1.442695
    %v576 = vpow.pop %v575
    %v577 = vadd.f32 %v576, 1.0
    %v578 = vrcp.pop %v577
    %v579 = vmul.f32 1.0, %v578
    %v580 = vtanh.pop %v573
    %v581 = vmul.f32 %v579, %v494
    %583 = vrot.lane.b32.xlu0 %v580, 64
    %v584 = vpop.permute.xlu0 %583
    %v586 = vmul.f32 %v579, %v584
    %588 = vrot.lane.b32.xlu0 %v586, 32
    %v589 = vpop.permute.xlu0 %588
    %v591 = vadd.f32 %v581, %v589
    %v592 = vtanh.pop %v591
    %594 = vrot.lane.b32.xlu0 %v592, 64
    %v595 = vpop.permute.xlu0 %594
    %v597 = vmul.f32 %v579, %v595
    %vm598 = vcmp.gt.s32.totalorder %v63, 3
    %v599 = vsel %vm598, 1, 0
    %vm600 = vcmp.eq.s32.totalorder %v599, 1
    %v601 = vsel %vm600, %v597, %v493
    %v602 = vsel %vm600, %v591, %v494
    %604 = vrot.lane.b32.xlu0 %v601, 32
    %v605 = vpop.permute.xlu0 %604
    %607 = vst.msk [vmem:[#allocation3 + $0x6] sm:$0x3] %vm282, %v605
    %v608 = vld [vmem:[#allocation2 + $0x8] sm:$0x3]
    %v609 = vsel %vm77, %v605, 0
    %611 = vmatprep.subr.mxu0 0.0
    %612 = vmatpush1.msra.mxu0 %v161
    %613 = vmatprep.subr.mxu0 0.0
    %614 = vmatpush1.msra.mxu0 %v162
    %615 = vmatprep.subr.mxu0 0.0
    %616 = vmatpush1.msra.mxu0 %v163
    %617 = vmatprep.subr.mxu0 0.0
    %618 = vmatpush1.msra.mxu0 %v164
    %619 = vmatprep.subr.mxu0 0.0
    %620 = vmatpush1.msra.mxu0 0.0
    %621 = vmatprep.subr.mxu0 0.0
    %622 = vmatpush1.msra.mxu0 0.0
    %623 = vmatprep.subr.mxu0 0.0
    %624 = vmatpush1.msra.mxu0 0.0
    %625 = vmatprep.subr.mxu0 0.0
    %626 = vmatpush1.msra.mxu0 0.0
    %627 = vmatprep.subr.mxu0 0.0
    %628 = vmatpush1.msra.mxu0 0.0
    %629 = vmatprep.subr.mxu0 0.0
    %630 = vmatpush1.msra.mxu0 0.0
    %631 = vmatprep.subr.mxu0 0.0
    %632 = vmatpush1.msra.mxu0 0.0
    %633 = vmatprep.subr.mxu0 0.0
    %634 = vmatpush1.msra.mxu0 0.0
    %635 = vmatprep.subr.mxu0 0.0
    %636 = vmatpush1.msra.mxu0 0.0
    %637 = vmatprep.subr.mxu0 0.0
    %638 = vmatpush1.msra.mxu0 0.0
    %639 = vmatprep.subr.mxu0 0.0
    %640 = vmatpush1.msra.mxu0 0.0
    %641 = vmatprep.subr.mxu0 0.0
    %642 = vmatpush1.msra.mxu0 0.0
    %643 = vmatprep.subr.mxu0 0.0
    %644 = vmatpush1.msra.mxu0 0.0
    %645 = vmatprep.subr.mxu0 0.0
    %646 = vmatpush1.msra.mxu0 0.0
    %647 = vmatprep.subr.mxu0 0.0
    %648 = vmatpush1.msra.mxu0 0.0
    %649 = vmatprep.subr.mxu0 0.0
    %650 = vmatpush1.msra.mxu0 0.0
    %651 = vmatprep.subr.mxu0 0.0
    %652 = vmatpush1.msra.mxu0 0.0
    %653 = vmatprep.subr.mxu0 0.0
    %654 = vmatpush1.msra.mxu0 0.0
    %655 = vmatprep.subr.mxu0 0.0
    %656 = vmatpush1.msra.mxu0 0.0
    %657 = vmatprep.subr.mxu0 0.0
    %658 = vmatpush1.msra.mxu0 0.0
    %659 = vmatprep.subr.mxu0 0.0
    %660 = vmatpush1.msra.mxu0 0.0
    %661 = vmatprep.subr.mxu0 0.0
    %662 = vmatpush1.msra.mxu0 0.0
    %663 = vmatprep.subr.mxu0 0.0
    %664 = vmatpush1.msra.mxu0 0.0
    %665 = vmatprep.subr.mxu0 0.0
    %666 = vmatpush1.msra.mxu0 0.0
    %667 = vmatprep.subr.mxu0 0.0
    %668 = vmatpush1.msra.mxu0 0.0
    %669 = vmatprep.subr.mxu0 0.0
    %670 = vmatpush1.msra.mxu0 0.0
    %671 = vmatprep.subr.mxu0 0.0
    %672 = vmatpush1.msra.mxu0 0.0
    %673 = vmatprep.subr.mxu0 0.0
    %674 = vmatpush1.msra.mxu0 0.0
    %675 = vmatprep.mubr.f32.mxu0 0.0
    %676 = vmatmul.mubr.f32.gmra.mrb[0].mxu0 %v609
    %v677 = vpop.f32.mrb[0].mxu0
    %v678 = vadd.f32 0.0, %v677
    %v679 = vpop.f32.mrb[0].mxu0
    %680 = vdwg.mxu0
    %v681 = vadd.f32 %v608, %v678
    %v682 = vxor.u32 %v681, 2147483648
    %v683 = vmul.f32 %v682, 1.442695
    %v684 = vpow.pop %v683
    %v685 = vadd.f32 %v684, 1.0
    %v686 = vrcp.pop %v685
    %v687 = vmul.f32 1.0, %v686
    %v688 = vtanh.pop %v681
    %v689 = vmul.f32 %v687, %v602
    %691 = vrot.lane.b32.xlu0 %v688, 64
    %v692 = vpop.permute.xlu0 %691
    %v694 = vmul.f32 %v687, %v692
    %696 = vrot.lane.b32.xlu0 %v694, 32
    %v697 = vpop.permute.xlu0 %696
    %v699 = vadd.f32 %v689, %v697
    %v700 = vtanh.pop %v699
    %702 = vrot.lane.b32.xlu0 %v700, 64
    %v703 = vpop.permute.xlu0 %702
    %v705 = vmul.f32 %v687, %v703
    %vm706 = vcmp.gt.s32.totalorder %v63, 4
    %v707 = vsel %vm706, 1, 0
    %vm708 = vcmp.eq.s32.totalorder %v707, 1
    %v709 = vsel %vm708, %v705, %v601
    %v710 = vsel %vm708, %v699, %v602
    %712 = vrot.lane.b32.xlu0 %v709, 32
    %v713 = vpop.permute.xlu0 %712
    %715 = vst.msk [vmem:[#allocation3 + $0x8] sm:$0x3] %vm282, %v713
    %v716 = vld [vmem:[#allocation2 + $0xa] sm:$0x3]
    %v717 = vsel %vm77, %v713, 0
    %719 = vmatprep.subr.mxu0 0.0
    %720 = vmatpush1.msra.mxu0 %v161
    %721 = vmatprep.subr.mxu0 0.0
    %722 = vmatpush1.msra.mxu0 %v162
    %723 = vmatprep.subr.mxu0 0.0
    %724 = vmatpush1.msra.mxu0 %v163
    %725 = vmatprep.subr.mxu0 0.0
    %726 = vmatpush1.msra.mxu0 %v164
    %727 = vmatprep.subr.mxu0 0.0
    %728 = vmatpush1.msra.mxu0 0.0
    %729 = vmatprep.subr.mxu0 0.0
    %730 = vmatpush1.msra.mxu0 0.0
    %731 = vmatprep.subr.mxu0 0.0
    %732 = vmatpush1.msra.mxu0 0.0
    %733 = vmatprep.subr.mxu0 0.0
    %734 = vmatpush1.msra.mxu0 0.0
    %735 = vmatprep.subr.mxu0 0.0
    %736 = vmatpush1.msra.mxu0 0.0
    %737 = vmatprep.subr.mxu0 0.0
    %738 = vmatpush1.msra.mxu0 0.0
    %739 = vmatprep.subr.mxu0 0.0
    %740 = vmatpush1.msra.mxu0 0.0
    %741 = vmatprep.subr.mxu0 0.0
    %742 = vmatpush1.msra.mxu0 0.0
    %743 = vmatprep.subr.mxu0 0.0
    %744 = vmatpush1.msra.mxu0 0.0
    %745 = vmatprep.subr.mxu0 0.0
    %746 = vmatpush1.msra.mxu0 0.0
    %747 = vmatprep.subr.mxu0 0.0
    %748 = vmatpush1.msra.mxu0 0.0
    %749 = vmatprep.subr.mxu0 0.0
    %750 = vmatpush1.msra.mxu0 0.0
    %751 = vmatprep.subr.mxu0 0.0
    %752 = vmatpush1.msra.mxu0 0.0
    %753 = vmatprep.subr.mxu0 0.0
    %754 = vmatpush1.msra.mxu0 0.0
    %755 = vmatprep.subr.mxu0 0.0
    %756 = vmatpush1.msra.mxu0 0.0
    %757 = vmatprep.subr.mxu0 0.0
    %758 = vmatpush1.msra.mxu0 0.0
    %759 = vmatprep.subr.mxu0 0.0
    %760 = vmatpush1.msra.mxu0 0.0
    %761 = vmatprep.subr.mxu0 0.0
    %762 = vmatpush1.msra.mxu0 0.0
    %763 = vmatprep.subr.mxu0 0.0
    %764 = vmatpush1.msra.mxu0 0.0
    %765 = vmatprep.subr.mxu0 0.0
    %766 = vmatpush1.msra.mxu0 0.0
    %767 = vmatprep.subr.mxu0 0.0
    %768 = vmatpush1.msra.mxu0 0.0
    %769 = vmatprep.subr.mxu0 0.0
    %770 = vmatpush1.msra.mxu0 0.0
    %771 = vmatprep.subr.mxu0 0.0
    %772 = vmatpush1.msra.mxu0 0.0
    %773 = vmatprep.subr.mxu0 0.0
    %774 = vmatpush1.msra.mxu0 0.0
    %775 = vmatprep.subr.mxu0 0.0
    %776 = vmatpush1.msra.mxu0 0.0
    %777 = vmatprep.subr.mxu0 0.0
    %778 = vmatpush1.msra.mxu0 0.0
    %779 = vmatprep.subr.mxu0 0.0
    %780 = vmatpush1.msra.mxu0 0.0
    %781 = vmatprep.subr.mxu0 0.0
    %782 = vmatpush1.msra.mxu0 0.0
    %783 = vmatprep.mubr.f32.mxu0 0.0
    %784 = vmatmul.mubr.f32.gmra.mrb[0].mxu0 %v717
    %v785 = vpop.f32.mrb[0].mxu0
    %v786 = vadd.f32 0.0, %v785
    %v787 = vpop.f32.mrb[0].mxu0
    %788 = vdwg.mxu0
    %v789 = vadd.f32 %v716, %v786
    %v790 = vxor.u32 %v789, 2147483648
    %v791 = vmul.f32 %v790, 1.442695
    %v792 = vpow.pop %v791
    %v793 = vadd.f32 %v792, 1.0
    %v794 = vrcp.pop %v793
    %v795 = vmul.f32 1.0, %v794
    %v796 = vtanh.pop %v789
    %v797 = vmul.f32 %v795, %v710
    %799 = vrot.lane.b32.xlu0 %v796, 64
    %v800 = vpop.permute.xlu0 %799
    %v802 = vmul.f32 %v795, %v800
    %804 = vrot.lane.b32.xlu0 %v802, 32
    %v805 = vpop.permute.xlu0 %804
    %v807 = vadd.f32 %v797, %v805
    %v808 = vtanh.pop %v807
    %810 = vrot.lane.b32.xlu0 %v808, 64
    %v811 = vpop.permute.xlu0 %810
    %v813 = vmul.f32 %v795, %v811
    %vm814 = vcmp.gt.s32.totalorder %v63, 5
    %v815 = vsel %vm814, 1, 0
    %vm816 = vcmp.eq.s32.totalorder %v815, 1
    %v817 = vsel %vm816, %v813, %v709
    %v818 = vsel %vm816, %v807, %v710
    %820 = vrot.lane.b32.xlu0 %v817, 32
    %v821 = vpop.permute.xlu0 %820
    %823 = vst.msk [vmem:[#allocation3 + $0xa] sm:$0x3] %vm282, %v821
    %v824 = vld [vmem:[#allocation2 + $0xc] sm:$0x3]
    %v825 = vsel %vm77, %v821, 0
    %827 = vmatprep.subr.mxu0 0.0
    %828 = vmatpush1.msra.mxu0 %v161
    %829 = vmatprep.subr.mxu0 0.0
    %830 = vmatpush1.msra.mxu0 %v162
    %831 = vmatprep.subr.mxu0 0.0
    %832 = vmatpush1.msra.mxu0 %v163
    %833 = vmatprep.subr.mxu0 0.0
    %834 = vmatpush1.msra.mxu0 %v164
    %835 = vmatprep.subr.mxu0 0.0
    %836 = vmatpush1.msra.mxu0 0.0
    %837 = vmatprep.subr.mxu0 0.0
    %838 = vmatpush1.msra.mxu0 0.0
    %839 = vmatprep.subr.mxu0 0.0
    %840 = vmatpush1.msra.mxu0 0.0
    %841 = vmatprep.subr.mxu0 0.0
    %842 = vmatpush1.msra.mxu0 0.0
    %843 = vmatprep.subr.mxu0 0.0
    %844 = vmatpush1.msra.mxu0 0.0
    %845 = vmatprep.subr.mxu0 0.0
    %846 = vmatpush1.msra.mxu0 0.0
    %847 = vmatprep.subr.mxu0 0.0
    %848 = vmatpush1.msra.mxu0 0.0
    %849 = vmatprep.subr.mxu0 0.0
    %850 = vmatpush1.msra.mxu0 0.0
    %851 = vmatprep.subr.mxu0 0.0
    %852 = vmatpush1.msra.mxu0 0.0
    %853 = vmatprep.subr.mxu0 0.0
    %854 = vmatpush1.msra.mxu0 0.0
    %855 = vmatprep.subr.mxu0 0.0
    %856 = vmatpush1.msra.mxu0 0.0
    %857 = vmatprep.subr.mxu0 0.0
    %858 = vmatpush1.msra.mxu0 0.0
    %859 = vmatprep.subr.mxu0 0.0
    %860 = vmatpush1.msra.mxu0 0.0
    %861 = vmatprep.subr.mxu0 0.0
    %862 = vmatpush1.msra.mxu0 0.0
    %863 = vmatprep.subr.mxu0 0.0
    %864 = vmatpush1.msra.mxu0 0.0
    %865 = vmatprep.subr.mxu0 0.0
    %866 = vmatpush1.msra.mxu0 0.0
    %867 = vmatprep.subr.mxu0 0.0
    %868 = vmatpush1.msra.mxu0 0.0
    %869 = vmatprep.subr.mxu0 0.0
    %870 = vmatpush1.msra.mxu0 0.0
    %871 = vmatprep.subr.mxu0 0.0
    %872 = vmatpush1.msra.mxu0 0.0
    %873 = vmatprep.subr.mxu0 0.0
    %874 = vmatpush1.msra.mxu0 0.0
    %875 = vmatprep.subr.mxu0 0.0
    %876 = vmatpush1.msra.mxu0 0.0
    %877 = vmatprep.subr.mxu0 0.0
    %878 = vmatpush1.msra.mxu0 0.0
    %879 = vmatprep.subr.mxu0 0.0
    %880 = vmatpush1.msra.mxu0 0.0
    %881 = vmatprep.subr.mxu0 0.0
    %882 = vmatpush1.msra.mxu0 0.0
    %883 = vmatprep.subr.mxu0 0.0
    %884 = vmatpush1.msra.mxu0 0.0
    %885 = vmatprep.subr.mxu0 0.0
    %886 = vmatpush1.msra.mxu0 0.0
    %887 = vmatprep.subr.mxu0 0.0
    %888 = vmatpush1.msra.mxu0 0.0
    %889 = vmatprep.subr.mxu0 0.0
    %890 = vmatpush1.msra.mxu0 0.0
    %891 = vmatprep.mubr.f32.mxu0 0.0
    %892 = vmatmul.mubr.f32.gmra.mrb[0].mxu0 %v825
    %v893 = vpop.f32.mrb[0].mxu0
    %v894 = vadd.f32 0.0, %v893
    %v895 = vpop.f32.mrb[0].mxu0
    %896 = vdwg.mxu0
    %v897 = vadd.f32 %v824, %v894
    %v898 = vxor.u32 %v897, 2147483648
    %v899 = vmul.f32 %v898, 1.442695
    %v900 = vpow.pop %v899
    %v901 = vadd.f32 %v900, 1.0
    %v902 = vrcp.pop %v901
    %v903 = vmul.f32 1.0, %v902
    %v904 = vtanh.pop %v897
    %v905 = vmul.f32 %v903, %v818
    %907 = vrot.lane.b32.xlu0 %v904, 64
    %v908 = vpop.permute.xlu0 %907
    %v910 = vmul.f32 %v903, %v908
    %912 = vrot.lane.b32.xlu0 %v910, 32
    %v913 = vpop.permute.xlu0 %912
    %v915 = vadd.f32 %v905, %v913
    %v916 = vtanh.pop %v915
    %918 = vrot.lane.b32.xlu0 %v916, 64
    %v919 = vpop.permute.xlu0 %918
    %v921 = vmul.f32 %v903, %v919
    %vm922 = vcmp.gt.s32.totalorder %v63, 6
    %v923 = vsel %vm922, 1, 0
    %vm924 = vcmp.eq.s32.totalorder %v923, 1
    %v925 = vsel %vm924, %v921, %v817
    %v926 = vsel %vm924, %v915, %v818
    %928 = vrot.lane.b32.xlu0 %v925, 32
    %v929 = vpop.permute.xlu0 %928
    %931 = vst.msk [vmem:[#allocation3 + $0xc] sm:$0x3] %vm282, %v929
    %v932 = vld [vmem:[#allocation2 + $0xe] sm:$0x3]
    %v933 = vsel %vm77, %v929, 0
    %935 = vmatprep.subr.mxu0 0.0
    %936 = vmatpush1.msra.mxu0 %v161
    %937 = vmatprep.subr.mxu0 0.0
    %938 = vmatpush1.msra.mxu0 %v162
    %939 = vmatprep.subr.mxu0 0.0
    %940 = vmatpush1.msra.mxu0 %v163
    %941 = vmatprep.subr.mxu0 0.0
    %942 = vmatpush1.msra.mxu0 %v164
    %943 = vmatprep.subr.mxu0 0.0
    %944 = vmatpush1.msra.mxu0 0.0
    %945 = vmatprep.subr.mxu0 0.0
    %946 = vmatpush1.msra.mxu0 0.0
    %947 = vmatprep.subr.mxu0 0.0
    %948 = vmatpush1.msra.mxu0 0.0
    %949 = vmatprep.subr.mxu0 0.0
    %950 = vmatpush1.msra.mxu0 0.0
    %951 = vmatprep.subr.mxu0 0.0
    %952 = vmatpush1.msra.mxu0 0.0
    %953 = vmatprep.subr.mxu0 0.0
    %954 = vmatpush1.msra.mxu0 0.0
    %955 = vmatprep.subr.mxu0 0.0
    %956 = vmatpush1.msra.mxu0 0.0
    %957 = vmatprep.subr.mxu0 0.0
    %958 = vmatpush1.msra.mxu0 0.0
    %959 = vmatprep.subr.mxu0 0.0
    %960 = vmatpush1.msra.mxu0 0.0
    %961 = vmatprep.subr.mxu0 0.0
    %962 = vmatpush1.msra.mxu0 0.0
    %963 = vmatprep.subr.mxu0 0.0
    %964 = vmatpush1.msra.mxu0 0.0
    %965 = vmatprep.subr.mxu0 0.0
    %966 = vmatpush1.msra.mxu0 0.0
    %967 = vmatprep.subr.mxu0 0.0
    %968 = vmatpush1.msra.mxu0 0.0
    %969 = vmatprep.subr.mxu0 0.0
    %970 = vmatpush1.msra.mxu0 0.0
    %971 = vmatprep.subr.mxu0 0.0
    %972 = vmatpush1.msra.mxu0 0.0
    %973 = vmatprep.subr.mxu0 0.0
    %974 = vmatpush1.msra.mxu0 0.0
    %975 = vmatprep.subr.mxu0 0.0
    %976 = vmatpush1.msra.mxu0 0.0
    %977 = vmatprep.subr.mxu0 0.0
    %978 = vmatpush1.msra.mxu0 0.0
    %979 = vmatprep.subr.mxu0 0.0
    %980 = vmatpush1.msra.mxu0 0.0
    %981 = vmatprep.subr.mxu0 0.0
    %982 = vmatpush1.msra.mxu0 0.0
    %983 = vmatprep.subr.mxu0 0.0
    %984 = vmatpush1.msra.mxu0 0.0
    %985 = vmatprep.subr.mxu0 0.0
    %986 = vmatpush1.msra.mxu0 0.0
    %987 = vmatprep.subr.mxu0 0.0
    %988 = vmatpush1.msra.mxu0 0.0
    %989 = vmatprep.subr.mxu0 0.0
    %990 = vmatpush1.msra.mxu0 0.0
    %991 = vmatprep.subr.mxu0 0.0
    %992 = vmatpush1.msra.mxu0 0.0
    %993 = vmatprep.subr.mxu0 0.0
    %994 = vmatpush1.msra.mxu0 0.0
    %995 = vmatprep.subr.mxu0 0.0
    %996 = vmatpush1.msra.mxu0 0.0
    %997 = vmatprep.subr.mxu0 0.0
    %998 = vmatpush1.msra.mxu0 0.0
    %999 = vmatprep.mubr.f32.mxu0 0.0
    %1000 = vmatmul.mubr.f32.gmra.mrb[0].mxu0 %v933
    %v1001 = vpop.f32.mrb[0].mxu0
    %v1002 = vadd.f32 0.0, %v1001
    %v1003 = vpop.f32.mrb[0].mxu0
    %1004 = vdwg.mxu0
    %v1005 = vadd.f32 %v932, %v1002
    %v1006 = vxor.u32 %v1005, 2147483648
    %v1007 = vmul.f32 %v1006, 1.442695
    %v1008 = vpow.pop %v1007
    %v1009 = vadd.f32 %v1008, 1.0
    %v1010 = vrcp.pop %v1009
    %v1011 = vmul.f32 1.0, %v1010
    %v1012 = vtanh.pop %v1005
    %v1013 = vmul.f32 %v1011, %v926
    %1015 = vrot.lane.b32.xlu0 %v1012, 64
    %v1016 = vpop.permute.xlu0 %1015
    %v1018 = vmul.f32 %v1011, %v1016
    %1020 = vrot.lane.b32.xlu0 %v1018, 32
    %v1021 = vpop.permute.xlu0 %1020
    %v1023 = vadd.f32 %v1013, %v1021
    %v1024 = vtanh.pop %v1023
    %1026 = vrot.lane.b32.xlu0 %v1024, 64
    %v1027 = vpop.permute.xlu0 %1026
    %v1029 = vmul.f32 %v1011, %v1027
    %vm1030 = vcmp.gt.s32.totalorder %v63, 7
    %v1031 = vsel %vm1030, 1, 0
    %vm1032 = vcmp.eq.s32.totalorder %v1031, 1
    %v1033 = vsel %vm1032, %v1029, %v925
    %1035 = vrot.lane.b32.xlu0 %v1033, 32
    %v1036 = vpop.permute.xlu0 %1035
    %1038 = vst.msk [vmem:[#allocation3 + $0xe] sm:$0x3] %vm282, %v1036
    %v1039 = vld [vmem:[#allocation3] sm:$0xff]
    %v1040 = vld [vmem:[#allocation3 + $0x8] sm:$0xff]
    %v1041 = vld [vmem:[%s5] sm:$0xff]
    %v1042 = vld [vmem:[%s5 + $0x8] sm:$0xff]
    %v1043 = vld [vmem:[%s5 + $0x10] sm:$0xff]
    %v1044 = vld [vmem:[%s5 + $0x18] sm:$0xff]
    %v1045 = vld [vmem:[%s7] sm:$0x1]
    %v1047 = vlaneseq
    %v1048 = vshrl.u32 %v1047, 7
    %v1049 = vsub.s32 0, %v1048
    %v1050 = vrot.slane %v1045, %v1049
    %v1053 = vsel %vm77, %v1039, 0
    %v1056 = vsel %vm77, %v1040, 0
    %1058 = vmatprep.subr.mxu0 0.0
    %1059 = vmatpush1.msra.mxu0 %v1041
    %1060 = vmatprep.subr.mxu0 0.0
    %1061 = vmatpush1.msra.mxu0 %v1042
    %1062 = vmatprep.subr.mxu0 0.0
    %1063 = vmatpush1.msra.mxu0 %v1043
    %1064 = vmatprep.subr.mxu0 0.0
    %1065 = vmatpush1.msra.mxu0 %v1044
    %1066 = vmatprep.subr.mxu0 0.0
    %1067 = vmatpush1.msra.mxu0 0.0
    %1068 = vmatprep.subr.mxu0 0.0
    %1069 = vmatpush1.msra.mxu0 0.0
    %1070 = vmatprep.subr.mxu0 0.0
    %1071 = vmatpush1.msra.mxu0 0.0
    %1072 = vmatprep.subr.mxu0 0.0
    %1073 = vmatpush1.msra.mxu0 0.0
    %1074 = vmatprep.subr.mxu0 0.0
    %1075 = vmatpush1.msra.mxu0 0.0
    %1076 = vmatprep.subr.mxu0 0.0
    %1077 = vmatpush1.msra.mxu0 0.0
    %1078 = vmatprep.subr.mxu0 0.0
    %1079 = vmatpush1.msra.mxu0 0.0
    %1080 = vmatprep.subr.mxu0 0.0
    %1081 = vmatpush1.msra.mxu0 0.0
    %1082 = vmatprep.subr.mxu0 0.0
    %1083 = vmatpush1.msra.mxu0 0.0
    %1084 = vmatprep.subr.mxu0 0.0
    %1085 = vmatpush1.msra.mxu0 0.0
    %1086 = vmatprep.subr.mxu0 0.0
    %1087 = vmatpush1.msra.mxu0 0.0
    %1088 = vmatprep.subr.mxu0 0.0
    %1089 = vmatpush1.msra.mxu0 0.0
    %1090 = vmatprep.subr.mxu0 0.0
    %1091 = vmatpush1.msra.mxu0 0.0
    %1092 = vmatprep.subr.mxu0 0.0
    %1093 = vmatpush1.msra.mxu0 0.0
    %1094 = vmatprep.subr.mxu0 0.0
    %1095 = vmatpush1.msra.mxu0 0.0
    %1096 = vmatprep.subr.mxu0 0.0
    %1097 = vmatpush1.msra.mxu0 0.0
    %1098 = vmatprep.subr.mxu0 0.0
    %1099 = vmatpush1.msra.mxu0 0.0
    %1100 = vmatprep.subr.mxu0 0.0
    %1101 = vmatpush1.msra.mxu0 0.0
    %1102 = vmatprep.subr.mxu0 0.0
    %1103 = vmatpush1.msra.mxu0 0.0
    %1104 = vmatprep.subr.mxu0 0.0
    %1105 = vmatpush1.msra.mxu0 0.0
    %1106 = vmatprep.subr.mxu0 0.0
    %1107 = vmatpush1.msra.mxu0 0.0
    %1108 = vmatprep.subr.mxu0 0.0
    %1109 = vmatpush1.msra.mxu0 0.0
    %1110 = vmatprep.subr.mxu0 0.0
    %1111 = vmatpush1.msra.mxu0 0.0
    %1112 = vmatprep.subr.mxu0 0.0
    %1113 = vmatpush1.msra.mxu0 0.0
    %1114 = vmatprep.subr.mxu0 0.0
    %1115 = vmatpush1.msra.mxu0 0.0
    %1116 = vmatprep.subr.mxu0 0.0
    %1117 = vmatpush1.msra.mxu0 0.0
    %1118 = vmatprep.subr.mxu0 0.0
    %1119 = vmatpush1.msra.mxu0 0.0
    %1120 = vmatprep.subr.mxu0 0.0
    %1121 = vmatpush1.msra.mxu0 0.0
    %1122 = vmatprep.mubr.f32.mxu0 0.0
    %1123 = vmatmul.mubr.f32.gmra.mrb[0].mxu0 %v1053
    %v1124 = vpop.f32.mrb[0].mxu0
    %v1125 = vadd.f32 %v1050, %v1124
    %v1126 = vpop.f32.mrb[0].mxu0
    %1127 = vmatprep.mubr.f32.mxu0 0.0
    %1128 = vmatmul.mubr.f32.gmra.mrb[0].mxu0 %v1056
    %v1129 = vpop.f32.mrb[0].mxu0
    %v1130 = vadd.f32 %v1050, %v1129
    %v1131 = vpop.f32.mrb[0].mxu0
    %1132 = vdwg.mxu0
    %1133 = vst [vmem:[#allocation2] sm:$0xff] %v1125
    %1134 = vst [vmem:[#allocation2 + $0x8] sm:$0xff] %v1130
    %v1135 = vld [vmem:[%s6] sm:$0xff]
    %v1136 = vld [vmem:[%s6 + $0x8] sm:$0xff]
    %v1137 = vld [vmem:[%s6 + $0x10] sm:$0xff]
    %v1138 = vld [vmem:[%s6 + $0x18] sm:$0xff]
    %s1139 = scalar_lea.vmem %s8, 2
    %v1140 = vld [vmem:[%s1139] sm:$0x3]
    %s1141 = scalar_lea.vmem %s9, 2
    %v1142 = vld [vmem:[%s1141] sm:$0x3]
    %v1143 = vld [vmem:[#allocation2] sm:$0x3]
    %v1145 = vsel %vm77, %v1140, 0
    %1147 = vmatprep.subr.mxu0 0.0
    %1148 = vmatpush1.msra.mxu0 %v1135
    %1149 = vmatprep.subr.mxu0 0.0
    %1150 = vmatpush1.msra.mxu0 %v1136
    %1151 = vmatprep.subr.mxu0 0.0
    %1152 = vmatpush1.msra.mxu0 %v1137
    %1153 = vmatprep.subr.mxu0 0.0
    %1154 = vmatpush1.msra.mxu0 %v1138
    %1155 = vmatprep.subr.mxu0 0.0
    %1156 = vmatpush1.msra.mxu0 0.0
    %1157 = vmatprep.subr.mxu0 0.0
    %1158 = vmatpush1.msra.mxu0 0.0
    %1159 = vmatprep.subr.mxu0 0.0
    %1160 = vmatpush1.msra.mxu0 0.0
    %1161 = vmatprep.subr.mxu0 0.0
    %1162 = vmatpush1.msra.mxu0 0.0
    %1163 = vmatprep.subr.mxu0 0.0
    %1164 = vmatpush1.msra.mxu0 0.0
    %1165 = vmatprep.subr.mxu0 0.0
    %1166 = vmatpush1.msra.mxu0 0.0
    %1167 = vmatprep.subr.mxu0 0.0
    %1168 = vmatpush1.msra.mxu0 0.0
    %1169 = vmatprep.subr.mxu0 0.0
    %1170 = vmatpush1.msra.mxu0 0.0
    %1171 = vmatprep.subr.mxu0 0.0
    %1172 = vmatpush1.msra.mxu0 0.0
    %1173 = vmatprep.subr.mxu0 0.0
    %1174 = vmatpush1.msra.mxu0 0.0
    %1175 = vmatprep.subr.mxu0 0.0
    %1176 = vmatpush1.msra.mxu0 0.0
    %1177 = vmatprep.subr.mxu0 0.0
    %1178 = vmatpush1.msra.mxu0 0.0
    %1179 = vmatprep.subr.mxu0 0.0
    %1180 = vmatpush1.msra.mxu0 0.0
    %1181 = vmatprep.subr.mxu0 0.0
    %1182 = vmatpush1.msra.mxu0 0.0
    %1183 = vmatprep.subr.mxu0 0.0
    %1184 = vmatpush1.msra.mxu0 0.0
    %1185 = vmatprep.subr.mxu0 0.0
    %1186 = vmatpush1.msra.mxu0 0.0
    %1187 = vmatprep.subr.mxu0 0.0
    %1188 = vmatpush1.msra.mxu0 0.0
    %1189 = vmatprep.subr.mxu0 0.0
    %1190 = vmatpush1.msra.mxu0 0.0
    %1191 = vmatprep.subr.mxu0 0.0
    %1192 = vmatpush1.msra.mxu0 0.0
    %1193 = vmatprep.subr.mxu0 0.0
    %1194 = vmatpush1.msra.mxu0 0.0
    %1195 = vmatprep.subr.mxu0 0.0
    %1196 = vmatpush1.msra.mxu0 0.0
    %1197 = vmatprep.subr.mxu0 0.0
    %1198 = vmatpush1.msra.mxu0 0.0
    %1199 = vmatprep.subr.mxu0 0.0
    %1200 = vmatpush1.msra.mxu0 0.0
    %1201 = vmatprep.subr.mxu0 0.0
    %1202 = vmatpush1.msra.mxu0 0.0
    %1203 = vmatprep.subr.mxu0 0.0
    %1204 = vmatpush1.msra.mxu0 0.0
    %1205 = vmatprep.subr.mxu0 0.0
    %1206 = vmatpush1.msra.mxu0 0.0
    %1207 = vmatprep.subr.mxu0 0.0
    %1208 = vmatpush1.msra.mxu0 0.0
    %1209 = vmatprep.subr.mxu0 0.0
    %1210 = vmatpush1.msra.mxu0 0.0
    %1211 = vmatprep.mubr.f32.mxu0 0.0
    %1212 = vmatmul.mubr.f32.gmra.mrb[0].mxu0 %v1145
    %v1213 = vpop.f32.mrb[0].mxu0
    %v1214 = vadd.f32 0.0, %v1213
    %v1215 = vpop.f32.mrb[0].mxu0
    %1216 = vdwg.mxu0
    %v1217 = vadd.f32 %v1143, %v1214
    %v1218 = vxor.u32 %v1217, 2147483648
    %v1219 = vmul.f32 %v1218, 1.442695
    %v1220 = vpow.pop %v1219
    %v1221 = vadd.f32 %v1220, 1.0
    %v1222 = vrcp.pop %v1221
    %v1223 = vmul.f32 1.0, %v1222
    %v1224 = vtanh.pop %v1217
    %1226 = vrot.lane.b32.xlu0 %v1142, 32
    %v1227 = vpop.permute.xlu0 %1226
    %v1229 = vmul.f32 %v1223, %v1227
    %1231 = vrot.lane.b32.xlu0 %v1224, 64
    %v1232 = vpop.permute.xlu0 %1231
    %v1234 = vmul.f32 %v1223, %v1232
    %1236 = vrot.lane.b32.xlu0 %v1234, 32
    %v1237 = vpop.permute.xlu0 %1236
    %v1239 = vadd.f32 %v1229, %v1237
    %v1240 = vtanh.pop %v1239
    %1242 = vrot.lane.b32.xlu0 %v1240, 64
    %v1243 = vpop.permute.xlu0 %1242
    %v1245 = vmul.f32 %v1223, %v1243
    %1246 = vrot.lane.b32.xlu0 %v1140, 96
    %v1247 = vpop.permute.xlu0 %1246
    %v1249 = vsel %vm272, %v1245, %v1247
    %v1250 = vsel %vm272, %v1239, %v1227
    %v1251 = vsel %vm272, %v1245, -1.0
    %1253 = vrot.lane.b32.xlu0 %v1251, 32
    %v1254 = vpop.permute.xlu0 %1253
    %1256 = vst.msk [vmem:[#allocation3] sm:$0x3] %vm282, %v1254
    %v1257 = vld [vmem:[#allocation2 + $0x2] sm:$0x3]
    %1259 = vrot.lane.b32.xlu0 %v1249, 32
    %v1260 = vpop.permute.xlu0 %1259
    %v1261 = vsel %vm77, %v1260, 0
    %1263 = vmatprep.subr.mxu0 0.0
    %1264 = vmatpush1.msra.mxu0 %v1135
    %1265 = vmatprep.subr.mxu0 0.0
    %1266 = vmatpush1.msra.mxu0 %v1136
    %1267 = vmatprep.subr.mxu0 0.0
    %1268 = vmatpush1.msra.mxu0 %v1137
    %1269 = vmatprep.subr.mxu0 0.0
    %1270 = vmatpush1.msra.mxu0 %v1138
    %1271 = vmatprep.subr.mxu0 0.0
    %1272 = vmatpush1.msra.mxu0 0.0
    %1273 = vmatprep.subr.mxu0 0.0
    %1274 = vmatpush1.msra.mxu0 0.0
    %1275 = vmatprep.subr.mxu0 0.0
    %1276 = vmatpush1.msra.mxu0 0.0
    %1277 = vmatprep.subr.mxu0 0.0
    %1278 = vmatpush1.msra.mxu0 0.0
    %1279 = vmatprep.subr.mxu0 0.0
    %1280 = vmatpush1.msra.mxu0 0.0
    %1281 = vmatprep.subr.mxu0 0.0
    %1282 = vmatpush1.msra.mxu0 0.0
    %1283 = vmatprep.subr.mxu0 0.0
    %1284 = vmatpush1.msra.mxu0 0.0
    %1285 = vmatprep.subr.mxu0 0.0
    %1286 = vmatpush1.msra.mxu0 0.0
    %1287 = vmatprep.subr.mxu0 0.0
    %1288 = vmatpush1.msra.mxu0 0.0
    %1289 = vmatprep.subr.mxu0 0.0
    %1290 = vmatpush1.msra.mxu0 0.0
    %1291 = vmatprep.subr.mxu0 0.0
    %1292 = vmatpush1.msra.mxu0 0.0
    %1293 = vmatprep.subr.mxu0 0.0
    %1294 = vmatpush1.msra.mxu0 0.0
    %1295 = vmatprep.subr.mxu0 0.0
    %1296 = vmatpush1.msra.mxu0 0.0
    %1297 = vmatprep.subr.mxu0 0.0
    %1298 = vmatpush1.msra.mxu0 0.0
    %1299 = vmatprep.subr.mxu0 0.0
    %1300 = vmatpush1.msra.mxu0 0.0
    %1301 = vmatprep.subr.mxu0 0.0
    %1302 = vmatpush1.msra.mxu0 0.0
    %1303 = vmatprep.subr.mxu0 0.0
    %1304 = vmatpush1.msra.mxu0 0.0
    %1305 = vmatprep.subr.mxu0 0.0
    %1306 = vmatpush1.msra.mxu0 0.0
    %1307 = vmatprep.subr.mxu0 0.0
    %1308 = vmatpush1.msra.mxu0 0.0
    %1309 = vmatprep.subr.mxu0 0.0
    %1310 = vmatpush1.msra.mxu0 0.0
    %1311 = vmatprep.subr.mxu0 0.0
    %1312 = vmatpush1.msra.mxu0 0.0
    %1313 = vmatprep.subr.mxu0 0.0
    %1314 = vmatpush1.msra.mxu0 0.0
    %1315 = vmatprep.subr.mxu0 0.0
    %1316 = vmatpush1.msra.mxu0 0.0
    %1317 = vmatprep.subr.mxu0 0.0
    %1318 = vmatpush1.msra.mxu0 0.0
    %1319 = vmatprep.subr.mxu0 0.0
    %1320 = vmatpush1.msra.mxu0 0.0
    %1321 = vmatprep.subr.mxu0 0.0
    %1322 = vmatpush1.msra.mxu0 0.0
    %1323 = vmatprep.subr.mxu0 0.0
    %1324 = vmatpush1.msra.mxu0 0.0
    %1325 = vmatprep.subr.mxu0 0.0
    %1326 = vmatpush1.msra.mxu0 0.0
    %1327 = vmatprep.mubr.f32.mxu0 0.0
    %1328 = vmatmul.mubr.f32.gmra.mrb[0].mxu0 %v1261
    %v1329 = vpop.f32.mrb[0].mxu0
    %v1330 = vadd.f32 0.0, %v1329
    %v1331 = vpop.f32.mrb[0].mxu0
    %1332 = vdwg.mxu0
    %v1333 = vadd.f32 %v1257, %v1330
    %v1334 = vxor.u32 %v1333, 2147483648
    %v1335 = vmul.f32 %v1334, 1.442695
    %v1336 = vpow.pop %v1335
    %v1337 = vadd.f32 %v1336, 1.0
    %v1338 = vrcp.pop %v1337
    %v1339 = vmul.f32 1.0, %v1338
    %v1340 = vtanh.pop %v1333
    %v1341 = vmul.f32 %v1339, %v1250
    %1343 = vrot.lane.b32.xlu0 %v1340, 64
    %v1344 = vpop.permute.xlu0 %1343
    %v1346 = vmul.f32 %v1339, %v1344
    %1348 = vrot.lane.b32.xlu0 %v1346, 32
    %v1349 = vpop.permute.xlu0 %1348
    %v1351 = vadd.f32 %v1341, %v1349
    %v1352 = vtanh.pop %v1351
    %1354 = vrot.lane.b32.xlu0 %v1352, 64
    %v1355 = vpop.permute.xlu0 %1354
    %v1357 = vmul.f32 %v1339, %v1355
    %v1358 = vsel %vm384, %v1357, %v1249
    %v1359 = vsel %vm384, %v1351, %v1250
    %v1360 = vsel %vm384, %v1357, -1.0
    %1362 = vrot.lane.b32.xlu0 %v1360, 32
    %v1363 = vpop.permute.xlu0 %1362
    %1365 = vst.msk [vmem:[#allocation3 + $0x2] sm:$0x3] %vm282, %v1363
    %v1366 = vld [vmem:[#allocation2 + $0x4] sm:$0x3]
    %1368 = vrot.lane.b32.xlu0 %v1358, 32
    %v1369 = vpop.permute.xlu0 %1368
    %v1370 = vsel %vm77, %v1369, 0
    %1372 = vmatprep.subr.mxu0 0.0
    %1373 = vmatpush1.msra.mxu0 %v1135
    %1374 = vmatprep.subr.mxu0 0.0
    %1375 = vmatpush1.msra.mxu0 %v1136
    %1376 = vmatprep.subr.mxu0 0.0
    %1377 = vmatpush1.msra.mxu0 %v1137
    %1378 = vmatprep.subr.mxu0 0.0
    %1379 = vmatpush1.msra.mxu0 %v1138
    %1380 = vmatprep.subr.mxu0 0.0
    %1381 = vmatpush1.msra.mxu0 0.0
    %1382 = vmatprep.subr.mxu0 0.0
    %1383 = vmatpush1.msra.mxu0 0.0
    %1384 = vmatprep.subr.mxu0 0.0
    %1385 = vmatpush1.msra.mxu0 0.0
    %1386 = vmatprep.subr.mxu0 0.0
    %1387 = vmatpush1.msra.mxu0 0.0
    %1388 = vmatprep.subr.mxu0 0.0
    %1389 = vmatpush1.msra.mxu0 0.0
    %1390 = vmatprep.subr.mxu0 0.0
    %1391 = vmatpush1.msra.mxu0 0.0
    %1392 = vmatprep.subr.mxu0 0.0
    %1393 = vmatpush1.msra.mxu0 0.0
    %1394 = vmatprep.subr.mxu0 0.0
    %1395 = vmatpush1.msra.mxu0 0.0
    %1396 = vmatprep.subr.mxu0 0.0
    %1397 = vmatpush1.msra.mxu0 0.0
    %1398 = vmatprep.subr.mxu0 0.0
    %1399 = vmatpush1.msra.mxu0 0.0
    %1400 = vmatprep.subr.mxu0 0.0
    %1401 = vmatpush1.msra.mxu0 0.0
    %1402 = vmatprep.subr.mxu0 0.0
    %1403 = vmatpush1.msra.mxu0 0.0
    %1404 = vmatprep.subr.mxu0 0.0
    %1405 = vmatpush1.msra.mxu0 0.0
    %1406 = vmatprep.subr.mxu0 0.0
    %1407 = vmatpush1.msra.mxu0 0.0
    %1408 = vmatprep.subr.mxu0 0.0
    %1409 = vmatpush1.msra.mxu0 0.0
    %1410 = vmatprep.subr.mxu0 0.0
    %1411 = vmatpush1.msra.mxu0 0.0
    %1412 = vmatprep.subr.mxu0 0.0
    %1413 = vmatpush1.msra.mxu0 0.0
    %1414 = vmatprep.subr.mxu0 0.0
    %1415 = vmatpush1.msra.mxu0 0.0
    %1416 = vmatprep.subr.mxu0 0.0
    %1417 = vmatpush1.msra.mxu0 0.0
    %1418 = vmatprep.subr.mxu0 0.0
    %1419 = vmatpush1.msra.mxu0 0.0
    %1420 = vmatprep.subr.mxu0 0.0
    %1421 = vmatpush1.msra.mxu0 0.0
    %1422 = vmatprep.subr.mxu0 0.0
    %1423 = vmatpush1.msra.mxu0 0.0
    %1424 = vmatprep.subr.mxu0 0.0
    %1425 = vmatpush1.msra.mxu0 0.0
    %1426 = vmatprep.subr.mxu0 0.0
    %1427 = vmatpush1.msra.mxu0 0.0
    %1428 = vmatprep.subr.mxu0 0.0
    %1429 = vmatpush1.msra.mxu0 0.0
    %1430 = vmatprep.subr.mxu0 0.0
    %1431 = vmatpush1.msra.mxu0 0.0
    %1432 = vmatprep.subr.mxu0 0.0
    %1433 = vmatpush1.msra.mxu0 0.0
    %1434 = vmatprep.subr.mxu0 0.0
    %1435 = vmatpush1.msra.mxu0 0.0
    %1436 = vmatprep.mubr.f32.mxu0 0.0
    %1437 = vmatmul.mubr.f32.gmra.mrb[0].mxu0 %v1370
    %v1438 = vpop.f32.mrb[0].mxu0
    %v1439 = vadd.f32 0.0, %v1438
    %v1440 = vpop.f32.mrb[0].mxu0
    %1441 = vdwg.mxu0
    %v1442 = vadd.f32 %v1366, %v1439
    %v1443 = vxor.u32 %v1442, 2147483648
    %v1444 = vmul.f32 %v1443, 1.442695
    %v1445 = vpow.pop %v1444
    %v1446 = vadd.f32 %v1445, 1.0
    %v1447 = vrcp.pop %v1446
    %v1448 = vmul.f32 1.0, %v1447
    %v1449 = vtanh.pop %v1442
    %v1450 = vmul.f32 %v1448, %v1359
    %1452 = vrot.lane.b32.xlu0 %v1449, 64
    %v1453 = vpop.permute.xlu0 %1452
    %v1455 = vmul.f32 %v1448, %v1453
    %1457 = vrot.lane.b32.xlu0 %v1455, 32
    %v1458 = vpop.permute.xlu0 %1457
    %v1460 = vadd.f32 %v1450, %v1458
    %v1461 = vtanh.pop %v1460
    %1463 = vrot.lane.b32.xlu0 %v1461, 64
    %v1464 = vpop.permute.xlu0 %1463
    %v1466 = vmul.f32 %v1448, %v1464
    %v1467 = vsel %vm492, %v1466, %v1358
    %v1468 = vsel %vm492, %v1460, %v1359
    %v1469 = vsel %vm492, %v1466, -1.0
    %1471 = vrot.lane.b32.xlu0 %v1469, 32
    %v1472 = vpop.permute.xlu0 %1471
    %1474 = vst.msk [vmem:[#allocation3 + $0x4] sm:$0x3] %vm282, %v1472
    %v1475 = vld [vmem:[#allocation2 + $0x6] sm:$0x3]
    %1477 = vrot.lane.b32.xlu0 %v1467, 32
    %v1478 = vpop.permute.xlu0 %1477
    %v1479 = vsel %vm77, %v1478, 0
    %1481 = vmatprep.subr.mxu0 0.0
    %1482 = vmatpush1.msra.mxu0 %v1135
    %1483 = vmatprep.subr.mxu0 0.0
    %1484 = vmatpush1.msra.mxu0 %v1136
    %1485 = vmatprep.subr.mxu0 0.0
    %1486 = vmatpush1.msra.mxu0 %v1137
    %1487 = vmatprep.subr.mxu0 0.0
    %1488 = vmatpush1.msra.mxu0 %v1138
    %1489 = vmatprep.subr.mxu0 0.0
    %1490 = vmatpush1.msra.mxu0 0.0
    %1491 = vmatprep.subr.mxu0 0.0
    %1492 = vmatpush1.msra.mxu0 0.0
    %1493 = vmatprep.subr.mxu0 0.0
    %1494 = vmatpush1.msra.mxu0 0.0
    %1495 = vmatprep.subr.mxu0 0.0
    %1496 = vmatpush1.msra.mxu0 0.0
    %1497 = vmatprep.subr.mxu0 0.0
    %1498 = vmatpush1.msra.mxu0 0.0
    %1499 = vmatprep.subr.mxu0 0.0
    %1500 = vmatpush1.msra.mxu0 0.0
    %1501 = vmatprep.subr.mxu0 0.0
    %1502 = vmatpush1.msra.mxu0 0.0
    %1503 = vmatprep.subr.mxu0 0.0
    %1504 = vmatpush1.msra.mxu0 0.0
    %1505 = vmatprep.subr.mxu0 0.0
    %1506 = vmatpush1.msra.mxu0 0.0
    %1507 = vmatprep.subr.mxu0 0.0
    %1508 = vmatpush1.msra.mxu0 0.0
    %1509 = vmatprep.subr.mxu0 0.0
    %1510 = vmatpush1.msra.mxu0 0.0
    %1511 = vmatprep.subr.mxu0 0.0
    %1512 = vmatpush1.msra.mxu0 0.0
    %1513 = vmatprep.subr.mxu0 0.0
    %1514 = vmatpush1.msra.mxu0 0.0
    %1515 = vmatprep.subr.mxu0 0.0
    %1516 = vmatpush1.msra.mxu0 0.0
    %1517 = vmatprep.subr.mxu0 0.0
    %1518 = vmatpush1.msra.mxu0 0.0
    %1519 = vmatprep.subr.mxu0 0.0
    %1520 = vmatpush1.msra.mxu0 0.0
    %1521 = vmatprep.subr.mxu0 0.0
    %1522 = vmatpush1.msra.mxu0 0.0
    %1523 = vmatprep.subr.mxu0 0.0
    %1524 = vmatpush1.msra.mxu0 0.0
    %1525 = vmatprep.subr.mxu0 0.0
    %1526 = vmatpush1.msra.mxu0 0.0
    %1527 = vmatprep.subr.mxu0 0.0
    %1528 = vmatpush1.msra.mxu0 0.0
    %1529 = vmatprep.subr.mxu0 0.0
    %1530 = vmatpush1.msra.mxu0 0.0
    %1531 = vmatprep.subr.mxu0 0.0
    %1532 = vmatpush1.msra.mxu0 0.0
    %1533 = vmatprep.subr.mxu0 0.0
    %1534 = vmatpush1.msra.mxu0 0.0
    %1535 = vmatprep.subr.mxu0 0.0
    %1536 = vmatpush1.msra.mxu0 0.0
    %1537 = vmatprep.subr.mxu0 0.0
    %1538 = vmatpush1.msra.mxu0 0.0
    %1539 = vmatprep.subr.mxu0 0.0
    %1540 = vmatpush1.msra.mxu0 0.0
    %1541 = vmatprep.subr.mxu0 0.0
    %1542 = vmatpush1.msra.mxu0 0.0
    %1543 = vmatprep.subr.mxu0 0.0
    %1544 = vmatpush1.msra.mxu0 0.0
    %1545 = vmatprep.mubr.f32.mxu0 0.0
    %1546 = vmatmul.mubr.f32.gmra.mrb[0].mxu0 %v1479
    %v1547 = vpop.f32.mrb[0].mxu0
    %v1548 = vadd.f32 0.0, %v1547
    %v1549 = vpop.f32.mrb[0].mxu0
    %1550 = vdwg.mxu0
    %v1551 = vadd.f32 %v1475, %v1548
    %v1552 = vxor.u32 %v1551, 2147483648
    %v1553 = vmul.f32 %v1552, 1.442695
    %v1554 = vpow.pop %v1553
    %v1555 = vadd.f32 %v1554, 1.0
    %v1556 = vrcp.pop %v1555
    %v1557 = vmul.f32 1.0, %v1556
    %v1558 = vtanh.pop %v1551
    %v1559 = vmul.f32 %v1557, %v1468
    %1561 = vrot.lane.b32.xlu0 %v1558, 64
    %v1562 = vpop.permute.xlu0 %1561
    %v1564 = vmul.f32 %v1557, %v1562
    %1566 = vrot.lane.b32.xlu0 %v1564, 32
    %v1567 = vpop.permute.xlu0 %1566
    %v1569 = vadd.f32 %v1559, %v1567
    %v1570 = vtanh.pop %v1569
    %1572 = vrot.lane.b32.xlu0 %v1570, 64
    %v1573 = vpop.permute.xlu0 %1572
    %v1575 = vmul.f32 %v1557, %v1573
    %v1576 = vsel %vm600, %v1575, %v1467
    %v1577 = vsel %vm600, %v1569, %v1468
    %v1578 = vsel %vm600, %v1575, -1.0
    %1580 = vrot.lane.b32.xlu0 %v1578, 32
    %v1581 = vpop.permute.xlu0 %1580
    %1583 = vst.msk [vmem:[#allocation3 + $0x6] sm:$0x3] %vm282, %v1581
    %v1584 = vld [vmem:[#allocation2 + $0x8] sm:$0x3]
    %1586 = vrot.lane.b32.xlu0 %v1576, 32
    %v1587 = vpop.permute.xlu0 %1586
    %v1588 = vsel %vm77, %v1587, 0
    %1590 = vmatprep.subr.mxu0 0.0
    %1591 = vmatpush1.msra.mxu0 %v1135
    %1592 = vmatprep.subr.mxu0 0.0
    %1593 = vmatpush1.msra.mxu0 %v1136
    %1594 = vmatprep.subr.mxu0 0.0
    %1595 = vmatpush1.msra.mxu0 %v1137
    %1596 = vmatprep.subr.mxu0 0.0
    %1597 = vmatpush1.msra.mxu0 %v1138
    %1598 = vmatprep.subr.mxu0 0.0
    %1599 = vmatpush1.msra.mxu0 0.0
    %1600 = vmatprep.subr.mxu0 0.0
    %1601 = vmatpush1.msra.mxu0 0.0
    %1602 = vmatprep.subr.mxu0 0.0
    %1603 = vmatpush1.msra.mxu0 0.0
    %1604 = vmatprep.subr.mxu0 0.0
    %1605 = vmatpush1.msra.mxu0 0.0
    %1606 = vmatprep.subr.mxu0 0.0
    %1607 = vmatpush1.msra.mxu0 0.0
    %1608 = vmatprep.subr.mxu0 0.0
    %1609 = vmatpush1.msra.mxu0 0.0
    %1610 = vmatprep.subr.mxu0 0.0
    %1611 = vmatpush1.msra.mxu0 0.0
    %1612 = vmatprep.subr.mxu0 0.0
    %1613 = vmatpush1.msra.mxu0 0.0
    %1614 = vmatprep.subr.mxu0 0.0
    %1615 = vmatpush1.msra.mxu0 0.0
    %1616 = vmatprep.subr.mxu0 0.0
    %1617 = vmatpush1.msra.mxu0 0.0
    %1618 = vmatprep.subr.mxu0 0.0
    %1619 = vmatpush1.msra.mxu0 0.0
    %1620 = vmatprep.subr.mxu0 0.0
    %1621 = vmatpush1.msra.mxu0 0.0
    %1622 = vmatprep.subr.mxu0 0.0
    %1623 = vmatpush1.msra.mxu0 0.0
    %1624 = vmatprep.subr.mxu0 0.0
    %1625 = vmatpush1.msra.mxu0 0.0
    %1626 = vmatprep.subr.mxu0 0.0
    %1627 = vmatpush1.msra.mxu0 0.0
    %1628 = vmatprep.subr.mxu0 0.0
    %1629 = vmatpush1.msra.mxu0 0.0
    %1630 = vmatprep.subr.mxu0 0.0
    %1631 = vmatpush1.msra.mxu0 0.0
    %1632 = vmatprep.subr.mxu0 0.0
    %1633 = vmatpush1.msra.mxu0 0.0
    %1634 = vmatprep.subr.mxu0 0.0
    %1635 = vmatpush1.msra.mxu0 0.0
    %1636 = vmatprep.subr.mxu0 0.0
    %1637 = vmatpush1.msra.mxu0 0.0
    %1638 = vmatprep.subr.mxu0 0.0
    %1639 = vmatpush1.msra.mxu0 0.0
    %1640 = vmatprep.subr.mxu0 0.0
    %1641 = vmatpush1.msra.mxu0 0.0
    %1642 = vmatprep.subr.mxu0 0.0
    %1643 = vmatpush1.msra.mxu0 0.0
    %1644 = vmatprep.subr.mxu0 0.0
    %1645 = vmatpush1.msra.mxu0 0.0
    %1646 = vmatprep.subr.mxu0 0.0
    %1647 = vmatpush1.msra.mxu0 0.0
    %1648 = vmatprep.subr.mxu0 0.0
    %1649 = vmatpush1.msra.mxu0 0.0
    %1650 = vmatprep.subr.mxu0 0.0
    %1651 = vmatpush1.msra.mxu0 0.0
    %1652 = vmatprep.subr.mxu0 0.0
    %1653 = vmatpush1.msra.mxu0 0.0
    %1654 = vmatprep.mubr.f32.mxu0 0.0
    %1655 = vmatmul.mubr.f32.gmra.mrb[0].mxu0 %v1588
    %v1656 = vpop.f32.mrb[0].mxu0
    %v1657 = vadd.f32 0.0, %v1656
    %v1658 = vpop.f32.mrb[0].mxu0
    %1659 = vdwg.mxu0
    %v1660 = vadd.f32 %v1584, %v1657
    %v1661 = vxor.u32 %v1660, 2147483648
    %v1662 = vmul.f32 %v1661, 1.442695
    %v1663 = vpow.pop %v1662
    %v1664 = vadd.f32 %v1663, 1.0
    %v1665 = vrcp.pop %v1664
    %v1666 = vmul.f32 1.0, %v1665
    %v1667 = vtanh.pop %v1660
    %v1668 = vmul.f32 %v1666, %v1577
    %1670 = vrot.lane.b32.xlu0 %v1667, 64
    %v1671 = vpop.permute.xlu0 %1670
    %v1673 = vmul.f32 %v1666, %v1671
    %1675 = vrot.lane.b32.xlu0 %v1673, 32
    %v1676 = vpop.permute.xlu0 %1675
    %v1678 = vadd.f32 %v1668, %v1676
    %v1679 = vtanh.pop %v1678
    %1681 = vrot.lane.b32.xlu0 %v1679, 64
    %v1682 = vpop.permute.xlu0 %1681
    %v1684 = vmul.f32 %v1666, %v1682
    %v1685 = vsel %vm708, %v1684, %v1576
    %v1686 = vsel %vm708, %v1678, %v1577
    %v1687 = vsel %vm708, %v1684, -1.0
    %1689 = vrot.lane.b32.xlu0 %v1687, 32
    %v1690 = vpop.permute.xlu0 %1689
    %1692 = vst.msk [vmem:[#allocation3 + $0x8] sm:$0x3] %vm282, %v1690
    %v1693 = vld [vmem:[#allocation2 + $0xa] sm:$0x3]
    %1695 = vrot.lane.b32.xlu0 %v1685, 32
    %v1696 = vpop.permute.xlu0 %1695
    %v1697 = vsel %vm77, %v1696, 0
    %1699 = vmatprep.subr.mxu0 0.0
    %1700 = vmatpush1.msra.mxu0 %v1135
    %1701 = vmatprep.subr.mxu0 0.0
    %1702 = vmatpush1.msra.mxu0 %v1136
    %1703 = vmatprep.subr.mxu0 0.0
    %1704 = vmatpush1.msra.mxu0 %v1137
    %1705 = vmatprep.subr.mxu0 0.0
    %1706 = vmatpush1.msra.mxu0 %v1138
    %1707 = vmatprep.subr.mxu0 0.0
    %1708 = vmatpush1.msra.mxu0 0.0
    %1709 = vmatprep.subr.mxu0 0.0
    %1710 = vmatpush1.msra.mxu0 0.0
    %1711 = vmatprep.subr.mxu0 0.0
    %1712 = vmatpush1.msra.mxu0 0.0
    %1713 = vmatprep.subr.mxu0 0.0
    %1714 = vmatpush1.msra.mxu0 0.0
    %1715 = vmatprep.subr.mxu0 0.0
    %1716 = vmatpush1.msra.mxu0 0.0
    %1717 = vmatprep.subr.mxu0 0.0
    %1718 = vmatpush1.msra.mxu0 0.0
    %1719 = vmatprep.subr.mxu0 0.0
    %1720 = vmatpush1.msra.mxu0 0.0
    %1721 = vmatprep.subr.mxu0 0.0
    %1722 = vmatpush1.msra.mxu0 0.0
    %1723 = vmatprep.subr.mxu0 0.0
    %1724 = vmatpush1.msra.mxu0 0.0
    %1725 = vmatprep.subr.mxu0 0.0
    %1726 = vmatpush1.msra.mxu0 0.0
    %1727 = vmatprep.subr.mxu0 0.0
    %1728 = vmatpush1.msra.mxu0 0.0
    %1729 = vmatprep.subr.mxu0 0.0
    %1730 = vmatpush1.msra.mxu0 0.0
    %1731 = vmatprep.subr.mxu0 0.0
    %1732 = vmatpush1.msra.mxu0 0.0
    %1733 = vmatprep.subr.mxu0 0.0
    %1734 = vmatpush1.msra.mxu0 0.0
    %1735 = vmatprep.subr.mxu0 0.0
    %1736 = vmatpush1.msra.mxu0 0.0
    %1737 = vmatprep.subr.mxu0 0.0
    %1738 = vmatpush1.msra.mxu0 0.0
    %1739 = vmatprep.subr.mxu0 0.0
    %1740 = vmatpush1.msra.mxu0 0.0
    %1741 = vmatprep.subr.mxu0 0.0
    %1742 = vmatpush1.msra.mxu0 0.0
    %1743 = vmatprep.subr.mxu0 0.0
    %1744 = vmatpush1.msra.mxu0 0.0
    %1745 = vmatprep.subr.mxu0 0.0
    %1746 = vmatpush1.msra.mxu0 0.0
    %1747 = vmatprep.subr.mxu0 0.0
    %1748 = vmatpush1.msra.mxu0 0.0
    %1749 = vmatprep.subr.mxu0 0.0
    %1750 = vmatpush1.msra.mxu0 0.0
    %1751 = vmatprep.subr.mxu0 0.0
    %1752 = vmatpush1.msra.mxu0 0.0
    %1753 = vmatprep.subr.mxu0 0.0
    %1754 = vmatpush1.msra.mxu0 0.0
    %1755 = vmatprep.subr.mxu0 0.0
    %1756 = vmatpush1.msra.mxu0 0.0
    %1757 = vmatprep.subr.mxu0 0.0
    %1758 = vmatpush1.msra.mxu0 0.0
    %1759 = vmatprep.subr.mxu0 0.0
    %1760 = vmatpush1.msra.mxu0 0.0
    %1761 = vmatprep.subr.mxu0 0.0
    %1762 = vmatpush1.msra.mxu0 0.0
    %1763 = vmatprep.mubr.f32.mxu0 0.0
    %1764 = vmatmul.mubr.f32.gmra.mrb[0].mxu0 %v1697
    %v1765 = vpop.f32.mrb[0].mxu0
    %v1766 = vadd.f32 0.0, %v1765
    %v1767 = vpop.f32.mrb[0].mxu0
    %1768 = vdwg.mxu0
    %v1769 = vadd.f32 %v1693, %v1766
    %v1770 = vxor.u32 %v1769, 2147483648
    %v1771 = vmul.f32 %v1770, 1.442695
    %v1772 = vpow.pop %v1771
    %v1773 = vadd.f32 %v1772, 1.0
    %v1774 = vrcp.pop %v1773
    %v1775 = vmul.f32 1.0, %v1774
    %v1776 = vtanh.pop %v1769
    %v1777 = vmul.f32 %v1775, %v1686
    %1779 = vrot.lane.b32.xlu0 %v1776, 64
    %v1780 = vpop.permute.xlu0 %1779
    %v1782 = vmul.f32 %v1775, %v1780
    %1784 = vrot.lane.b32.xlu0 %v1782, 32
    %v1785 = vpop.permute.xlu0 %1784
    %v1787 = vadd.f32 %v1777, %v1785
    %v1788 = vtanh.pop %v1787
    %1790 = vrot.lane.b32.xlu0 %v1788, 64
    %v1791 = vpop.permute.xlu0 %1790
    %v1793 = vmul.f32 %v1775, %v1791
    %v1794 = vsel %vm816, %v1793, %v1685
    %v1795 = vsel %vm816, %v1787, %v1686
    %v1796 = vsel %vm816, %v1793, -1.0
    %1798 = vrot.lane.b32.xlu0 %v1796, 32
    %v1799 = vpop.permute.xlu0 %1798
    %1801 = vst.msk [vmem:[#allocation3 + $0xa] sm:$0x3] %vm282, %v1799
    %v1802 = vld [vmem:[#allocation2 + $0xc] sm:$0x3]
    %1804 = vrot.lane.b32.xlu0 %v1794, 32
    %v1805 = vpop.permute.xlu0 %1804
    %v1806 = vsel %vm77, %v1805, 0
    %1808 = vmatprep.subr.mxu0 0.0
    %1809 = vmatpush1.msra.mxu0 %v1135
    %1810 = vmatprep.subr.mxu0 0.0
    %1811 = vmatpush1.msra.mxu0 %v1136
    %1812 = vmatprep.subr.mxu0 0.0
    %1813 = vmatpush1.msra.mxu0 %v1137
    %1814 = vmatprep.subr.mxu0 0.0
    %1815 = vmatpush1.msra.mxu0 %v1138
    %1816 = vmatprep.subr.mxu0 0.0
    %1817 = vmatpush1.msra.mxu0 0.0
    %1818 = vmatprep.subr.mxu0 0.0
    %1819 = vmatpush1.msra.mxu0 0.0
    %1820 = vmatprep.subr.mxu0 0.0
    %1821 = vmatpush1.msra.mxu0 0.0
    %1822 = vmatprep.subr.mxu0 0.0
    %1823 = vmatpush1.msra.mxu0 0.0
    %1824 = vmatprep.subr.mxu0 0.0
    %1825 = vmatpush1.msra.mxu0 0.0
    %1826 = vmatprep.subr.mxu0 0.0
    %1827 = vmatpush1.msra.mxu0 0.0
    %1828 = vmatprep.subr.mxu0 0.0
    %1829 = vmatpush1.msra.mxu0 0.0
    %1830 = vmatprep.subr.mxu0 0.0
    %1831 = vmatpush1.msra.mxu0 0.0
    %1832 = vmatprep.subr.mxu0 0.0
    %1833 = vmatpush1.msra.mxu0 0.0
    %1834 = vmatprep.subr.mxu0 0.0
    %1835 = vmatpush1.msra.mxu0 0.0
    %1836 = vmatprep.subr.mxu0 0.0
    %1837 = vmatpush1.msra.mxu0 0.0
    %1838 = vmatprep.subr.mxu0 0.0
    %1839 = vmatpush1.msra.mxu0 0.0
    %1840 = vmatprep.subr.mxu0 0.0
    %1841 = vmatpush1.msra.mxu0 0.0
    %1842 = vmatprep.subr.mxu0 0.0
    %1843 = vmatpush1.msra.mxu0 0.0
    %1844 = vmatprep.subr.mxu0 0.0
    %1845 = vmatpush1.msra.mxu0 0.0
    %1846 = vmatprep.subr.mxu0 0.0
    %1847 = vmatpush1.msra.mxu0 0.0
    %1848 = vmatprep.subr.mxu0 0.0
    %1849 = vmatpush1.msra.mxu0 0.0
    %1850 = vmatprep.subr.mxu0 0.0
    %1851 = vmatpush1.msra.mxu0 0.0
    %1852 = vmatprep.subr.mxu0 0.0
    %1853 = vmatpush1.msra.mxu0 0.0
    %1854 = vmatprep.subr.mxu0 0.0
    %1855 = vmatpush1.msra.mxu0 0.0
    %1856 = vmatprep.subr.mxu0 0.0
    %1857 = vmatpush1.msra.mxu0 0.0
    %1858 = vmatprep.subr.mxu0 0.0
    %1859 = vmatpush1.msra.mxu0 0.0
    %1860 = vmatprep.subr.mxu0 0.0
    %1861 = vmatpush1.msra.mxu0 0.0
    %1862 = vmatprep.subr.mxu0 0.0
    %1863 = vmatpush1.msra.mxu0 0.0
    %1864 = vmatprep.subr.mxu0 0.0
    %1865 = vmatpush1.msra.mxu0 0.0
    %1866 = vmatprep.subr.mxu0 0.0
    %1867 = vmatpush1.msra.mxu0 0.0
    %1868 = vmatprep.subr.mxu0 0.0
    %1869 = vmatpush1.msra.mxu0 0.0
    %1870 = vmatprep.subr.mxu0 0.0
    %1871 = vmatpush1.msra.mxu0 0.0
    %1872 = vmatprep.mubr.f32.mxu0 0.0
    %1873 = vmatmul.mubr.f32.gmra.mrb[0].mxu0 %v1806
    %v1874 = vpop.f32.mrb[0].mxu0
    %v1875 = vadd.f32 0.0, %v1874
    %v1876 = vpop.f32.mrb[0].mxu0
    %1877 = vdwg.mxu0
    %v1878 = vadd.f32 %v1802, %v1875
    %v1879 = vxor.u32 %v1878, 2147483648
    %v1880 = vmul.f32 %v1879, 1.442695
    %v1881 = vpow.pop %v1880
    %v1882 = vadd.f32 %v1881, 1.0
    %v1883 = vrcp.pop %v1882
    %v1884 = vmul.f32 1.0, %v1883
    %v1885 = vtanh.pop %v1878
    %v1886 = vmul.f32 %v1884, %v1795
    %1888 = vrot.lane.b32.xlu0 %v1885, 64
    %v1889 = vpop.permute.xlu0 %1888
    %v1891 = vmul.f32 %v1884, %v1889
    %1893 = vrot.lane.b32.xlu0 %v1891, 32
    %v1894 = vpop.permute.xlu0 %1893
    %v1896 = vadd.f32 %v1886, %v1894
    %v1897 = vtanh.pop %v1896
    %1899 = vrot.lane.b32.xlu0 %v1897, 64
    %v1900 = vpop.permute.xlu0 %1899
    %v1902 = vmul.f32 %v1884, %v1900
    %v1903 = vsel %vm924, %v1902, %v1794
    %v1904 = vsel %vm924, %v1896, %v1795
    %v1905 = vsel %vm924, %v1902, -1.0
    %1907 = vrot.lane.b32.xlu0 %v1905, 32
    %v1908 = vpop.permute.xlu0 %1907
    %1910 = vst.msk [vmem:[#allocation3 + $0xc] sm:$0x3] %vm282, %v1908
    %v1911 = vld [vmem:[#allocation2 + $0xe] sm:$0x3]
    %1913 = vrot.lane.b32.xlu0 %v1903, 32
    %v1914 = vpop.permute.xlu0 %1913
    %v1915 = vsel %vm77, %v1914, 0
    %1917 = vmatprep.subr.mxu0 0.0
    %1918 = vmatpush1.msra.mxu0 %v1135
    %1919 = vmatprep.subr.mxu0 0.0
    %1920 = vmatpush1.msra.mxu0 %v1136
    %1921 = vmatprep.subr.mxu0 0.0
    %1922 = vmatpush1.msra.mxu0 %v1137
    %1923 = vmatprep.subr.mxu0 0.0
    %1924 = vmatpush1.msra.mxu0 %v1138
    %1925 = vmatprep.subr.mxu0 0.0
    %1926 = vmatpush1.msra.mxu0 0.0
    %1927 = vmatprep.subr.mxu0 0.0
    %1928 = vmatpush1.msra.mxu0 0.0
    %1929 = vmatprep.subr.mxu0 0.0
    %1930 = vmatpush1.msra.mxu0 0.0
    %1931 = vmatprep.subr.mxu0 0.0
    %1932 = vmatpush1.msra.mxu0 0.0
    %1933 = vmatprep.subr.mxu0 0.0
    %1934 = vmatpush1.msra.mxu0 0.0
    %1935 = vmatprep.subr.mxu0 0.0
    %1936 = vmatpush1.msra.mxu0 0.0
    %1937 = vmatprep.subr.mxu0 0.0
    %1938 = vmatpush1.msra.mxu0 0.0
    %1939 = vmatprep.subr.mxu0 0.0
    %1940 = vmatpush1.msra.mxu0 0.0
    %1941 = vmatprep.subr.mxu0 0.0
    %1942 = vmatpush1.msra.mxu0 0.0
    %1943 = vmatprep.subr.mxu0 0.0
    %1944 = vmatpush1.msra.mxu0 0.0
    %1945 = vmatprep.subr.mxu0 0.0
    %1946 = vmatpush1.msra.mxu0 0.0
    %1947 = vmatprep.subr.mxu0 0.0
    %1948 = vmatpush1.msra.mxu0 0.0
    %1949 = vmatprep.subr.mxu0 0.0
    %1950 = vmatpush1.msra.mxu0 0.0
    %1951 = vmatprep.subr.mxu0 0.0
    %1952 = vmatpush1.msra.mxu0 0.0
    %1953 = vmatprep.subr.mxu0 0.0
    %1954 = vmatpush1.msra.mxu0 0.0
    %1955 = vmatprep.subr.mxu0 0.0
    %1956 = vmatpush1.msra.mxu0 0.0
    %1957 = vmatprep.subr.mxu0 0.0
    %1958 = vmatpush1.msra.mxu0 0.0
    %1959 = vmatprep.subr.mxu0 0.0
    %1960 = vmatpush1.msra.mxu0 0.0
    %1961 = vmatprep.subr.mxu0 0.0
    %1962 = vmatpush1.msra.mxu0 0.0
    %1963 = vmatprep.subr.mxu0 0.0
    %1964 = vmatpush1.msra.mxu0 0.0
    %1965 = vmatprep.subr.mxu0 0.0
    %1966 = vmatpush1.msra.mxu0 0.0
    %1967 = vmatprep.subr.mxu0 0.0
    %1968 = vmatpush1.msra.mxu0 0.0
    %1969 = vmatprep.subr.mxu0 0.0
    %1970 = vmatpush1.msra.mxu0 0.0
    %1971 = vmatprep.subr.mxu0 0.0
    %1972 = vmatpush1.msra.mxu0 0.0
    %1973 = vmatprep.subr.mxu0 0.0
    %1974 = vmatpush1.msra.mxu0 0.0
    %1975 = vmatprep.subr.mxu0 0.0
    %1976 = vmatpush1.msra.mxu0 0.0
    %1977 = vmatprep.subr.mxu0 0.0
    %1978 = vmatpush1.msra.mxu0 0.0
    %1979 = vmatprep.subr.mxu0 0.0
    %1980 = vmatpush1.msra.mxu0 0.0
    %1981 = vmatprep.mubr.f32.mxu0 0.0
    %1982 = vmatmul.mubr.f32.gmra.mrb[0].mxu0 %v1915
    %v1983 = vpop.f32.mrb[0].mxu0
    %v1984 = vadd.f32 0.0, %v1983
    %v1985 = vpop.f32.mrb[0].mxu0
    %1986 = vdwg.mxu0
    %v1987 = vadd.f32 %v1911, %v1984
    %v1988 = vxor.u32 %v1987, 2147483648
    %v1989 = vmul.f32 %v1988, 1.442695
    %v1990 = vpow.pop %v1989
    %v1991 = vadd.f32 %v1990, 1.0
    %v1992 = vrcp.pop %v1991
    %v1993 = vmul.f32 1.0, %v1992
    %v1994 = vtanh.pop %v1987
    %v1995 = vmul.f32 %v1993, %v1904
    %1997 = vrot.lane.b32.xlu0 %v1994, 64
    %v1998 = vpop.permute.xlu0 %1997
    %v2000 = vmul.f32 %v1993, %v1998
    %2002 = vrot.lane.b32.xlu0 %v2000, 32
    %v2003 = vpop.permute.xlu0 %2002
    %v2005 = vadd.f32 %v1995, %v2003
    %v2006 = vtanh.pop %v2005
    %2008 = vrot.lane.b32.xlu0 %v2006, 64
    %v2009 = vpop.permute.xlu0 %2008
    %v2011 = vmul.f32 %v1993, %v2009
    %v2012 = vsel %vm1032, %v2011, -1.0
    %2014 = vrot.lane.b32.xlu0 %v2012, 32
    %v2015 = vpop.permute.xlu0 %2014
    %2017 = vst.msk [vmem:[#allocation3 + $0xe] sm:$0x3] %vm282, %v2015
    %v2018 = vld [vmem:[#allocation3] sm:$0xff]
    %v2019 = vld [vmem:[#allocation3 + $0x8] sm:$0xff]
    %v2020 = vld [vmem:[%s10] sm:$0xff]
    %v2021 = vld [vmem:[%s10 + $0x8] sm:$0xff]
    %v2022 = vld [vmem:[%s10 + $0x10] sm:$0xff]
    %v2023 = vld [vmem:[%s10 + $0x18] sm:$0xff]
    %v2024 = vld [vmem:[%s11] sm:$0x1]
    %v2026 = vlaneseq
    %v2027 = vshrl.u32 %v2026, 7
    %v2028 = vsub.s32 0, %v2027
    %v2029 = vrot.slane %v2024, %v2028
    %v2032 = vsel %vm77, %v2018, 0
    %v2035 = vsel %vm77, %v2019, 0
    %2037 = vmatprep.subr.mxu0 0.0
    %2038 = vmatpush1.msra.mxu0 %v2020
    %2039 = vmatprep.subr.mxu0 0.0
    %2040 = vmatpush1.msra.mxu0 %v2021
    %2041 = vmatprep.subr.mxu0 0.0
    %2042 = vmatpush1.msra.mxu0 %v2022
    %2043 = vmatprep.subr.mxu0 0.0
    %2044 = vmatpush1.msra.mxu0 %v2023
    %2045 = vmatprep.subr.mxu0 0.0
    %2046 = vmatpush1.msra.mxu0 0.0
    %2047 = vmatprep.subr.mxu0 0.0
    %2048 = vmatpush1.msra.mxu0 0.0
    %2049 = vmatprep.subr.mxu0 0.0
    %2050 = vmatpush1.msra.mxu0 0.0
    %2051 = vmatprep.subr.mxu0 0.0
    %2052 = vmatpush1.msra.mxu0 0.0
    %2053 = vmatprep.subr.mxu0 0.0
    %2054 = vmatpush1.msra.mxu0 0.0
    %2055 = vmatprep.subr.mxu0 0.0
    %2056 = vmatpush1.msra.mxu0 0.0
    %2057 = vmatprep.subr.mxu0 0.0
    %2058 = vmatpush1.msra.mxu0 0.0
    %2059 = vmatprep.subr.mxu0 0.0
    %2060 = vmatpush1.msra.mxu0 0.0
    %2061 = vmatprep.subr.mxu0 0.0
    %2062 = vmatpush1.msra.mxu0 0.0
    %2063 = vmatprep.subr.mxu0 0.0
    %2064 = vmatpush1.msra.mxu0 0.0
    %2065 = vmatprep.subr.mxu0 0.0
    %2066 = vmatpush1.msra.mxu0 0.0
    %2067 = vmatprep.subr.mxu0 0.0
    %2068 = vmatpush1.msra.mxu0 0.0
    %2069 = vmatprep.subr.mxu0 0.0
    %2070 = vmatpush1.msra.mxu0 0.0
    %2071 = vmatprep.subr.mxu0 0.0
    %2072 = vmatpush1.msra.mxu0 0.0
    %2073 = vmatprep.subr.mxu0 0.0
    %2074 = vmatpush1.msra.mxu0 0.0
    %2075 = vmatprep.subr.mxu0 0.0
    %2076 = vmatpush1.msra.mxu0 0.0
    %2077 = vmatprep.subr.mxu0 0.0
    %2078 = vmatpush1.msra.mxu0 0.0
    %2079 = vmatprep.subr.mxu0 0.0
    %2080 = vmatpush1.msra.mxu0 0.0
    %2081 = vmatprep.subr.mxu0 0.0
    %2082 = vmatpush1.msra.mxu0 0.0
    %2083 = vmatprep.subr.mxu0 0.0
    %2084 = vmatpush1.msra.mxu0 0.0
    %2085 = vmatprep.subr.mxu0 0.0
    %2086 = vmatpush1.msra.mxu0 0.0
    %2087 = vmatprep.subr.mxu0 0.0
    %2088 = vmatpush1.msra.mxu0 0.0
    %2089 = vmatprep.subr.mxu0 0.0
    %2090 = vmatpush1.msra.mxu0 0.0
    %2091 = vmatprep.subr.mxu0 0.0
    %2092 = vmatpush1.msra.mxu0 0.0
    %2093 = vmatprep.subr.mxu0 0.0
    %2094 = vmatpush1.msra.mxu0 0.0
    %2095 = vmatprep.subr.mxu0 0.0
    %2096 = vmatpush1.msra.mxu0 0.0
    %2097 = vmatprep.subr.mxu0 0.0
    %2098 = vmatpush1.msra.mxu0 0.0
    %2099 = vmatprep.subr.mxu0 0.0
    %2100 = vmatpush1.msra.mxu0 0.0
    %2101 = vmatprep.mubr.f32.mxu0 0.0
    %2102 = vmatmul.mubr.f32.gmra.mrb[0].mxu0 %v2032
    %v2103 = vpop.f32.mrb[0].mxu0
    %v2104 = vadd.f32 %v2029, %v2103
    %v2105 = vpop.f32.mrb[0].mxu0
    %2106 = vmatprep.mubr.f32.mxu0 0.0
    %2107 = vmatmul.mubr.f32.gmra.mrb[0].mxu0 %v2035
    %v2108 = vpop.f32.mrb[0].mxu0
    %v2109 = vadd.f32 %v2029, %v2108
    %v2110 = vpop.f32.mrb[0].mxu0
    %2111 = vdwg.mxu0
    %v2112 = vlaneseq
    %v2113 = vand.u32 %v2112, 127
    %v2114 = vand.u32 %v2113, 1
    %vm2115 = vcmp.eq.s32.totalorder %v2114, 0
    %v2116 = vsel %vm2115, %v2104, -1e+30
    %v2117 = vsel %vm2115, %v2109, -1e+30
    %vm2118 = vcmask 80896
    %v2119 = vsel %vm2118, %v2116, -inf
    %2120 = vmax.xlane.f32.xlu0 %v2119
    %v2121 = vpop.xlane.xlu0 %2120
    %v2122 = vsel %vm2118, %v2117, -inf
    %2123 = vmax.xlane.f32.xlu0 %v2122
    %v2124 = vpop.xlane.xlu0 %2123
    %v2125 = vsel %vm2115, -1e+30, %v2104
    %v2126 = vsel %vm2115, -1e+30, %v2109
    %v2127 = vsel %vm2118, %v2125, -inf
    %2128 = vmax.xlane.f32.xlu0 %v2127
    %v2129 = vpop.xlane.xlu0 %2128
    %v2130 = vsel %vm2118, %v2126, -inf
    %2131 = vmax.xlane.f32.xlu0 %v2130
    %v2132 = vpop.xlane.xlu0 %2131
    %v2133 = vsel %vm2115, %v2121, %v2129
    %v2134 = vsel %vm2115, %v2124, %v2132
    %v2135 = vsub.f32 %v2104, %v2133
    %v2136 = vsub.f32 %v2109, %v2134
    %v2137 = vmul.f32 %v2135, 1.442695
    %v2138 = vpow.pop %v2137
    %v2139 = vmul.f32 %v2136, 1.442695
    %v2140 = vpow.pop %v2139
    %v2141 = vsel %vm2115, %v2138, 0.0
    %v2142 = vsel %vm2115, %v2140, 0.0
    %v2143 = vsel %vm2118, %v2141, 0.0
    %2144 = vadd.xlane.f32.xlu0 %v2143
    %v2145 = vpop.xlane.xlu0 %2144
    %v2146 = vsel %vm2118, %v2142, 0.0
    %2147 = vadd.xlane.f32.xlu0 %v2146
    %v2148 = vpop.xlane.xlu0 %2147
    %v2149 = vsel %vm2115, 0.0, %v2138
    %v2150 = vsel %vm2115, 0.0, %v2140
    %v2151 = vsel %vm2118, %v2149, 0.0
    %2152 = vadd.xlane.f32.xlu0 %v2151
    %v2153 = vpop.xlane.xlu0 %2152
    %v2154 = vsel %vm2118, %v2150, 0.0
    %2155 = vadd.xlane.f32.xlu0 %v2154
    %v2156 = vpop.xlane.xlu0 %2155
    %v2157 = vsel %vm2115, %v2145, %v2153
    %v2158 = vsel %vm2115, %v2148, %v2156
    %v2159 = vrcp.pop %v2157
    %v2160 = vmul.f32 %v2138, %v2159
    %v2161 = vrcp.pop %v2158
    %v2162 = vmul.f32 %v2140, %v2161
    %2163 = vst.msk [vmem:[%s12] sm:$0xff] %vm2118, %v2160
    %2164 = vst.msk [vmem:[%s12 + $0x8] sm:$0xff] %vm2118, %v2162
    // Predicated region
    $region54: #{lstm_forward_pallas.1} parent=1 // pred_check
      _
    $region55: #{lstm_forward_pallas.1} parent=1 // pred_check_branch
      %2166 = sbr.rel (0) target = $region57
    $region56: #{lstm_forward_pallas.1} parent=1 // pred_region
      _
    $region57: #{lstm_forward_pallas.1} parent=1 // pred_fallthru
      _
    // Predicated region
    $region58: #{lstm_forward_pallas.1} parent=1 // pred_check
      _
    $region59: #{lstm_forward_pallas.1} parent=1 // pred_check_branch
      %2168 = sbr.rel (0) target = $region61
    $region60: #{lstm_forward_pallas.1} parent=1 // pred_region
      _
    $region61: #{lstm_forward_pallas.1} parent=1 // pred_fallthru
      _
    %2169 = vsyncpa [#allocation5], 1

</llo_original>
